<compile_context>
chip_gen: v6e
topology: v6e:2x2x1
jax: 0.10.0
libtpu: 0.0.40
codegen_flags: <defaults>
</compile_context>

<pallas_src>
import functools

import jax
import jax.numpy as jnp
from jax.experimental import pallas as pl
from jax.experimental.pallas import tpu as pltpu

KSIZE = 4
PAD = 2


# ----------------------------------------------------------------------------- kernel


def _critic_kernel(*refs, cfg, batch, eps, slope):
    n_layers = len(cfg)
    n_norm = sum(1 for c in cfg if c["norm"])
    B = batch

    i = 0
    x_ref = refs[i]; i += 1                              # (B*Hp0, Wi0*Cin0) f32
    w_refs = refs[i:i + n_layers]; i += n_layers         # (KH*Wi*Cin, Wo*Cout) bf16
    norm_refs = refs[i:i + 4 * n_norm]; i += 4 * n_norm  # gamma, beta, fold, fold.T
    o_ref = refs[i]; i += 1                              # (B*Ho_last, Wo_last*Cout) f32
    scr_refs = refs[i:]                                  # row-padded f32 activations

    # Zero ONLY the PAD-row top/bottom borders of each scratch activation (interiors are
    # fully overwritten every step and there is no lane padding).
    for l, c in enumerate(cfg[:-1]):
        s = scr_refs[l]
        hp = c["Ho"] + 2 * PAD
        width = c["Wo"] * c["Cout"]
        zrow = jnp.zeros((PAD, width), s.dtype)
        for b in range(B):
            s[pl.ds(b * hp, PAD), :] = zrow
            s[pl.ds(b * hp + PAD + c["Ho"], PAD), :] = zrow

    src = x_ref
    gb = 0
    for l, c in enumerate(cfg):
        Ho, Wo, Co, stride = c["Ho"], c["Wo"], c["Cout"], c["stride"]
        Hp = c["Hi"] + 2 * PAD

        # ---- LHS (B*Ho, KSIZE*Wi*Cin): kh folded into the contraction dimension,
        #      stride-2 row gather done with strided sublane Ref reads.
        samples = []
        for b in range(B):
            base = b * Hp
            wins = []
            for kh in range(KSIZE):
                if stride == 1:
                    wins.append(src[pl.ds(base + kh, Ho), :])
                else:
                    wins.append(src[pl.ds(base + kh, Ho, stride), :])
            samples.append(jnp.concatenate(wins, axis=1))
        lhs = samples[0] if B == 1 else jnp.concatenate(samples, axis=0)

        # ---- ONE MXU matmul per layer (bf16 operands, f32 accumulation).
        y = jnp.dot(lhs.astype(jnp.bfloat16), w_refs[l][...],
                    preferred_element_type=jnp.float32)          # (B*Ho, Wo*Co) f32

        if l == n_layers - 1:
            if c["act"]:
                y = jnp.where(y > 0, y, slope * y)
            o_ref[...] = y.astype(o_ref.dtype)                   # single full-block store
            break

        nxt = scr_refs[l]
        hp_n = Ho + 2 * PAD

        if c["norm"]:
            gamma = norm_refs[4 * gb][...]                       # (1, Co)
            beta = norm_refs[4 * gb + 1][...]                    # (1, Co)
            fold = norm_refs[4 * gb + 2][...]                    # (Wo*Co, Co)  0/1
            fold_t = norm_refs[4 * gb + 3][...]                  # (Co, Wo*Co)  0/1
            gb += 1
            ysq = y * y
            inv_n = 1.0 / float(Ho * Wo)
            for b in range(B):                                   # per-sample statistics
                ys = y[b * Ho:(b + 1) * Ho, :]
                sums = jnp.concatenate(
                    [jnp.sum(ys, axis=0, keepdims=True),
                     jnp.sum(ysq[b * Ho:(b + 1) * Ho, :], axis=0, keepdims=True)],
                    axis=0)                                      # (2, Wo*Co)
                mom = jnp.dot(sums, fold,
                              preferred_element_type=jnp.float32) * inv_n   # (2, Co)
                mean = mom[0:1, :]
                var = jnp.maximum(mom[1:2, :] - mean * mean, 0.0)   # biased variance
                scale = gamma * jax.lax.rsqrt(var + eps)
                shift = beta - mean * scale
                aff = jnp.dot(jnp.concatenate([scale, shift], axis=0), fold_t,
                              preferred_element_type=jnp.float32)   # (2, Wo*Co)
                yb = ys * aff[0:1, :] + aff[1:2, :]
                if c["act"]:
                    yb = jnp.where(yb > 0, yb, slope * yb)
                nxt[pl.ds(b * hp_n + PAD, Ho), :] = yb.astype(nxt.dtype)
        else:
            if c["act"]:
                y = jnp.where(y > 0, y, slope * y)
            for b in range(B):
                nxt[pl.ds(b * hp_n + PAD, Ho), :] = \
                    y[b * Ho:(b + 1) * Ho, :].astype(nxt.dtype)

        src = nxt


# --------------------------------------------------------------------------- wrappers


def _lower_conv_weight(w4, wi, wo, stride):
    """Fold kernel-width, W-padding and the column stride into the weight.

    Returns (KH*wi*Cin, wo*Cout) with
      out[(kh*wi + j)*Cin + ci, v*Cout + co] = w4[kh, j - stride*v + PAD, ci, co]
    (zero when the kw index is out of range, which also implements the W zero-padding).
    """
    kh_, kw_, cin, cout = w4.shape
    j = jnp.arange(wi)[:, None]
    v = jnp.arange(wo)[None, :]
    kw = j - stride * v + PAD                              # (wi, wo)
    valid = (kw >= 0) & (kw < kw_)
    kwc = jnp.clip(kw, 0, kw_ - 1)
    wm = w4[:, kwc]                                        # (KH, wi, wo, Cin, Cout)
    wm = jnp.where(valid[None, :, :, None, None], wm, 0.0)
    wm = jnp.transpose(wm, (0, 1, 3, 2, 4))                # (KH, wi, Cin, wo, Cout)
    return wm.reshape(kh_ * wi * cin, wo * cout)


def build_layer_cfg(params, height, width):
    cfg = []
    h, w = height, width
    for p in params:
        s = p["stride"]
        ho = (h + 2 * PAD - KSIZE) // s + 1
        wo = (w + 2 * PAD - KSIZE) // s + 1
        # Strided row reads must stay inside the row-padded slab.
        assert s * (ho - 1) + KSIZE <= h + 2 * PAD
        cfg.append(dict(Hi=h, Wi=w, Ho=ho, Wo=wo, Cin=p["cin"], Cout=p["cout"],
                        stride=s, norm=p["norm"], act=p["act"]))
        h, w = ho, wo
    return cfg


def prepare_operands(params, cfg):
    ws, norm_ops = [], []
    for p, c in zip(params, cfg):
        wl = _lower_conv_weight(p["w4"], c["Wi"], c["Wo"], c["stride"])
        ws.append(wl.astype(jnp.bfloat16))
        if c["norm"]:
            wo, co = c["Wo"], c["Cout"]
            fold = jnp.tile(jnp.eye(co, dtype=jnp.float32), (wo, 1))   # (Wo*Co, Co)
            norm_ops += [p["gamma"].astype(jnp.float32),
                         p["beta"].astype(jnp.float32),
                         fold, fold.T]
    return ws, norm_ops


def _critic_pallas(x3, ws, norm_ops, cfg, batch, eps=1e-5, slope=0.2):
    g, bh, wc = x3.shape
    last = cfg[-1]
    out_rows = batch * last["Ho"]
    out_cols = last["Wo"] * last["Cout"]

    kernel = functools.partial(_critic_kernel, cfg=cfg, batch=batch,
                               eps=eps, slope=slope)

    in_specs = [pl.BlockSpec((None, bh, wc), lambda i: (i, 0, 0))]
    in_specs += [pl.BlockSpec(w.shape, lambda i: (0, 0)) for w in ws]
    in_specs += [pl.BlockSpec(a.shape, lambda i: (0, 0)) for a in norm_ops]
    out_spec = pl.BlockSpec((None, out_rows, out_cols), lambda i: (i, 0, 0))

    scratch = [pltpu.VMEM((batch * (c["Ho"] + 2 * PAD), c["Wo"] * c["Cout"]),
                          jnp.float32) for c in cfg[:-1]]

    return pl.pallas_call(
        kernel,
        out_shape=jax.ShapeDtypeStruct((g, out_rows, out_cols), jnp.float32),
        grid_spec=pltpu.PrefetchScalarGridSpec(
            num_scalar_prefetch=0,
            grid=(g,),
            in_specs=in_specs,
            out_specs=out_spec,
            scratch_shapes=scratch),
        compiler_params=pltpu.CompilerParams(
            dimension_semantics=("parallel",)),
    )(x3, *ws, *norm_ops)


def discriminator_critic(img_nchw, params, block_n=None):
    """Forward pass equivalent to Discriminator_Critic.forward (NCHW in / NCHW out)."""
    n, c_in, h, w = img_nchw.shape
    cfg = build_layer_cfg(params, h, w)
    ws, norm_ops = prepare_operands(params, cfg)     # parameter preprocessing (once)

    # Per-step batch B: divisor of n, capped at 8; keep grid >= 2 when n >= 2 so the
    # ("parallel",) grid can use both v7x TensorCores.
    if block_n is None:
        block_n = 1
        for b in range(min(n, 8), 0, -1):
            if n % b == 0 and (n < 2 or n // b >= 2):
                block_n = b
                break
    assert n % block_n == 0
    grid_n = n // block_n

    hp0 = h + 2 * PAD
    x = jnp.transpose(img_nchw, (0, 2, 3, 1)).astype(jnp.float32)      # NCHW -> NHWC
    xp = jnp.pad(x, ((0, 0), (PAD, PAD), (0, 0), (0, 0)))              # pad rows only
    x3 = xp.reshape(n, hp0, w * c_in).reshape(grid_n, block_n * hp0, w * c_in)

    out3 = _critic_pallas(x3, ws, norm_ops, cfg, block_n)
    last = cfg[-1]
    out = out3.reshape(grid_n, block_n, last["Ho"], last["Wo"], last["Cout"])
    out = out.reshape(n, last["Ho"], last["Wo"], last["Cout"])
    return jnp.transpose(out, (0, 3, 1, 2)).astype(jnp.float32)        # NHWC -> NCHW


# ----------------------------------------------------------------------- params / ref


def make_params(key, channels_in=3, base_mult=8, n_layers=3):
    """Deterministic synthetic parameters mirroring Discriminator_Critic.__init__."""
    specs = [dict(cin=channels_in, cout=base_mult, stride=2, norm=False, act=True)]
    stride = 2
    n_ch = base_mult
    for idx in range(n_layers):
        if idx == n_layers - 1:
            stride = 1
        n_ch = base_mult * 2 ** idx
        specs.append(dict(cin=n_ch, cout=n_ch * 2, stride=stride, norm=True, act=True))
    specs.append(dict(cin=n_ch * 2, cout=1, stride=1, norm=False, act=False))

    params = []
    for s in specs:
        key, kw_, kg, kb = jax.random.split(key, 4)
        # (KH, KW, Cin, Cout) == PyTorch (Cout, Cin, KH, KW) permuted; bias=False.
        w4 = 0.05 * jax.random.normal(kw_, (KSIZE, KSIZE, s["cin"], s["cout"]),
                                      jnp.float32)
        gamma = jnp.ones((1, s["cout"]), jnp.float32) \
            + 0.1 * jax.random.normal(kg, (1, s["cout"]), jnp.float32)
        beta = 0.1 * jax.random.normal(kb, (1, s["cout"]), jnp.float32)
        params.append(dict(w4=w4, gamma=gamma, beta=beta, **s))
    return params


def _reference_forward(img_nchw, params):
    """Pure-JAX (f32) reference for correctness checking."""
    x = jnp.transpose(img_nchw, (0, 2, 3, 1)).astype(jnp.float32)
    for p in params:
        s = p["stride"]
        x = jax.lax.conv_general_dilated(
            x, p["w4"], window_strides=(s, s),
            padding=[(PAD, PAD), (PAD, PAD)],
            dimension_numbers=("NHWC", "HWIO", "NHWC"))
        if p["norm"]:
            mean = jnp.mean(x, axis=(1, 2), keepdims=True)
            var = jnp.mean((x - mean) ** 2, axis=(1, 2), keepdims=True)
            x = (x - mean) * jax.lax.rsqrt(var + 1e-5)
            x = x * p["gamma"].reshape(1, 1, 1, -1) + p["beta"].reshape(1, 1, 1, -1)
        if p["act"]:
            x = jnp.where(x > 0, x, 0.2 * x)
    return jnp.transpose(x, (0, 3, 1, 2))


if __name__ == "__main__":
    key = jax.random.PRNGKey(0)
    k_img, k_par = jax.random.split(key)

    # Small shapes: batch=4 (=> B=2 samples per grid step, grid=2), channels_in=3,
    # 16x16 spatial, base_mult=8, n_layers=3.
    img = jax.random.normal(k_img, (4, 3, 16, 16), jnp.float32)
    params = make_params(k_par, channels_in=3, base_mult=8, n_layers=3)

    out = discriminator_critic(img, params)
    out = jax.block_until_ready(out)
    assert out.shape == (4, 1, 5, 5), out.shape

    # Loose-tolerance check against an f32 reference (kernel uses bf16 MXU operands).
    ref = _reference_forward(img, params)
    err = float(jnp.max(jnp.abs(out - ref)))
    assert err < 2e-1, f"max abs err vs reference: {err}"

    print("KERNEL_OK")
</pallas_src>

<mosaic_0001>
module attributes {stable_mosaic.version = 11 : i64} {
  func.func @_critic_kernel(%arg0: i32, %arg1: memref<1x40x48xf32, #tpu.memory_space<vmem>>, %arg2: memref<192x72xbf16, #tpu.memory_space<vmem>>, %arg3: memref<288x80xbf16, #tpu.memory_space<vmem>>, %arg4: memref<320x96xbf16, #tpu.memory_space<vmem>>, %arg5: memref<384x256xbf16, #tpu.memory_space<vmem>>, %arg6: memref<1024x5xbf16, #tpu.memory_space<vmem>>, %arg7: memref<1x16xf32, #tpu.memory_space<vmem>>, %arg8: memref<1x16xf32, #tpu.memory_space<vmem>>, %arg9: memref<80x16xf32, #tpu.memory_space<vmem>>, %arg10: memref<16x80xf32, #tpu.memory_space<vmem>>, %arg11: memref<1x32xf32, #tpu.memory_space<vmem>>, %arg12: memref<1x32xf32, #tpu.memory_space<vmem>>, %arg13: memref<96x32xf32, #tpu.memory_space<vmem>>, %arg14: memref<32x96xf32, #tpu.memory_space<vmem>>, %arg15: memref<1x64xf32, #tpu.memory_space<vmem>>, %arg16: memref<1x64xf32, #tpu.memory_space<vmem>>, %arg17: memref<256x64xf32, #tpu.memory_space<vmem>>, %arg18: memref<64x256xf32, #tpu.memory_space<vmem>>, %arg19: memref<1x10x5xf32, #tpu.memory_space<vmem>>, %arg20: memref<26x72xf32, #tpu.memory_space<vmem>>, %arg21: memref<18x80xf32, #tpu.memory_space<vmem>>, %arg22: memref<14x96xf32, #tpu.memory_space<vmem>>, %arg23: memref<16x256xf32, #tpu.memory_space<vmem>>) attributes {dimension_semantics = [#tpu.dimension_semantics<parallel>], iteration_bounds = array<i64: 2>, scalar_prefetch = 0 : i64, scratch_operands = 4 : i64, tpu.core_type = #tpu.core_type<tc>, window_params = [{transform_indices = @transform_0, window_bounds = array<i64: 1, 40, 48>}, {pipeline_mode = #tpu.pipeline_mode<synchronous>, transform_indices = @transform_1, window_bounds = array<i64: 192, 72>}, {pipeline_mode = #tpu.pipeline_mode<synchronous>, transform_indices = @transform_2, window_bounds = array<i64: 288, 80>}, {pipeline_mode = #tpu.pipeline_mode<synchronous>, transform_indices = @transform_3, window_bounds = array<i64: 320, 96>}, {pipeline_mode = #tpu.pipeline_mode<synchronous>, transform_indices = @transform_4, window_bounds = array<i64: 384, 256>}, {pipeline_mode = #tpu.pipeline_mode<synchronous>, transform_indices = @transform_5, window_bounds = array<i64: 1024, 5>}, {pipeline_mode = #tpu.pipeline_mode<synchronous>, transform_indices = @transform_6, window_bounds = array<i64: 1, 16>}, {pipeline_mode = #tpu.pipeline_mode<synchronous>, transform_indices = @transform_7, window_bounds = array<i64: 1, 16>}, {pipeline_mode = #tpu.pipeline_mode<synchronous>, transform_indices = @transform_8, window_bounds = array<i64: 80, 16>}, {pipeline_mode = #tpu.pipeline_mode<synchronous>, transform_indices = @transform_9, window_bounds = array<i64: 16, 80>}, {pipeline_mode = #tpu.pipeline_mode<synchronous>, transform_indices = @transform_10, window_bounds = array<i64: 1, 32>}, {pipeline_mode = #tpu.pipeline_mode<synchronous>, transform_indices = @transform_11, window_bounds = array<i64: 1, 32>}, {pipeline_mode = #tpu.pipeline_mode<synchronous>, transform_indices = @transform_12, window_bounds = array<i64: 96, 32>}, {pipeline_mode = #tpu.pipeline_mode<synchronous>, transform_indices = @transform_13, window_bounds = array<i64: 32, 96>}, {pipeline_mode = #tpu.pipeline_mode<synchronous>, transform_indices = @transform_14, window_bounds = array<i64: 1, 64>}, {pipeline_mode = #tpu.pipeline_mode<synchronous>, transform_indices = @transform_15, window_bounds = array<i64: 1, 64>}, {pipeline_mode = #tpu.pipeline_mode<synchronous>, transform_indices = @transform_16, window_bounds = array<i64: 256, 64>}, {pipeline_mode = #tpu.pipeline_mode<synchronous>, transform_indices = @transform_17, window_bounds = array<i64: 64, 256>}, {transform_indices = @transform_18, window_bounds = array<i64: 1, 10, 5>}]} {
    %cst = arith.constant 0.000000e+00 : f32
    %0 = vector.broadcast %cst : f32 to vector<2x72xf32>
    %c0 = arith.constant 0 : index
    %c0_0 = arith.constant 0 : index
    %1 = vector.load %arg20[%c0, %c0_0] : memref<26x72xf32, #tpu.memory_space<vmem>>, vector<2x72xf32>
    tpu.vector_store %arg20[%c0, %c0_0], %0 {strides = array<i32>} : memref<26x72xf32, #tpu.memory_space<vmem>>, vector<2x72xf32>,
    %c11 = arith.constant 11 : index
    %c0_1 = arith.constant 0 : index
    %2 = vector.load %arg20[%c11, %c0_1] : memref<26x72xf32, #tpu.memory_space<vmem>>, vector<2x72xf32>
    tpu.vector_store %arg20[%c11, %c0_1], %0 {strides = array<i32>} : memref<26x72xf32, #tpu.memory_space<vmem>>, vector<2x72xf32>,
    %c13 = arith.constant 13 : index
    %c0_2 = arith.constant 0 : index
    %3 = vector.load %arg20[%c13, %c0_2] : memref<26x72xf32, #tpu.memory_space<vmem>>, vector<2x72xf32>
    tpu.vector_store %arg20[%c13, %c0_2], %0 {strides = array<i32>} : memref<26x72xf32, #tpu.memory_space<vmem>>, vector<2x72xf32>,
    %c24 = arith.constant 24 : index
    %c0_3 = arith.constant 0 : index
    %4 = vector.load %arg20[%c24, %c0_3] : memref<26x72xf32, #tpu.memory_space<vmem>>, vector<2x72xf32>
    tpu.vector_store %arg20[%c24, %c0_3], %0 {strides = array<i32>} : memref<26x72xf32, #tpu.memory_space<vmem>>, vector<2x72xf32>,
    %cst_4 = arith.constant 0.000000e+00 : f32
    %5 = vector.broadcast %cst_4 : f32 to vector<2x80xf32>
    %c0_5 = arith.constant 0 : index
    %c0_6 = arith.constant 0 : index
    %6 = vector.load %arg21[%c0_5, %c0_6] : memref<18x80xf32, #tpu.memory_space<vmem>>, vector<2x80xf32>
    tpu.vector_store %arg21[%c0_5, %c0_6], %5 {strides = array<i32>} : memref<18x80xf32, #tpu.memory_space<vmem>>, vector<2x80xf32>,
    %c7 = arith.constant 7 : index
    %c0_7 = arith.constant 0 : index
    %7 = vector.load %arg21[%c7, %c0_7] : memref<18x80xf32, #tpu.memory_space<vmem>>, vector<2x80xf32>
    tpu.vector_store %arg21[%c7, %c0_7], %5 {strides = array<i32>} : memref<18x80xf32, #tpu.memory_space<vmem>>, vector<2x80xf32>,
    %c9 = arith.constant 9 : index
    %c0_8 = arith.constant 0 : index
    %8 = vector.load %arg21[%c9, %c0_8] : memref<18x80xf32, #tpu.memory_space<vmem>>, vector<2x80xf32>
    tpu.vector_store %arg21[%c9, %c0_8], %5 {strides = array<i32>} : memref<18x80xf32, #tpu.memory_space<vmem>>, vector<2x80xf32>,
    %c16 = arith.constant 16 : index
    %c0_9 = arith.constant 0 : index
    %9 = vector.load %arg21[%c16, %c0_9] : memref<18x80xf32, #tpu.memory_space<vmem>>, vector<2x80xf32>
    tpu.vector_store %arg21[%c16, %c0_9], %5 {strides = array<i32>} : memref<18x80xf32, #tpu.memory_space<vmem>>, vector<2x80xf32>,
    %cst_10 = arith.constant 0.000000e+00 : f32
    %10 = vector.broadcast %cst_10 : f32 to vector<2x96xf32>
    %c0_11 = arith.constant 0 : index
    %c0_12 = arith.constant 0 : index
    %11 = vector.load %arg22[%c0_11, %c0_12] : memref<14x96xf32, #tpu.memory_space<vmem>>, vector<2x96xf32>
    tpu.vector_store %arg22[%c0_11, %c0_12], %10 {strides = array<i32>} : memref<14x96xf32, #tpu.memory_space<vmem>>, vector<2x96xf32>,
    %c5 = arith.constant 5 : index
    %c0_13 = arith.constant 0 : index
    %12 = vector.load %arg22[%c5, %c0_13] : memref<14x96xf32, #tpu.memory_space<vmem>>, vector<2x96xf32>
    tpu.vector_store %arg22[%c5, %c0_13], %10 {strides = array<i32>} : memref<14x96xf32, #tpu.memory_space<vmem>>, vector<2x96xf32>,
    %c7_14 = arith.constant 7 : index
    %c0_15 = arith.constant 0 : index
    %13 = vector.load %arg22[%c7_14, %c0_15] : memref<14x96xf32, #tpu.memory_space<vmem>>, vector<2x96xf32>
    tpu.vector_store %arg22[%c7_14, %c0_15], %10 {strides = array<i32>} : memref<14x96xf32, #tpu.memory_space<vmem>>, vector<2x96xf32>,
    %c12 = arith.constant 12 : index
    %c0_16 = arith.constant 0 : index
    %14 = vector.load %arg22[%c12, %c0_16] : memref<14x96xf32, #tpu.memory_space<vmem>>, vector<2x96xf32>
    tpu.vector_store %arg22[%c12, %c0_16], %10 {strides = array<i32>} : memref<14x96xf32, #tpu.memory_space<vmem>>, vector<2x96xf32>,
    %cst_17 = arith.constant 0.000000e+00 : f32
    %15 = vector.broadcast %cst_17 : f32 to vector<2x256xf32>
    %c0_18 = arith.constant 0 : index
    %c0_19 = arith.constant 0 : index
    %16 = vector.load %arg23[%c0_18, %c0_19] : memref<16x256xf32, #tpu.memory_space<vmem>>, vector<2x256xf32>
    tpu.vector_store %arg23[%c0_18, %c0_19], %15 {strides = array<i32>} : memref<16x256xf32, #tpu.memory_space<vmem>>, vector<2x256xf32>,
    %c6 = arith.constant 6 : index
    %c0_20 = arith.constant 0 : index
    %17 = vector.load %arg23[%c6, %c0_20] : memref<16x256xf32, #tpu.memory_space<vmem>>, vector<2x256xf32>
    tpu.vector_store %arg23[%c6, %c0_20], %15 {strides = array<i32>} : memref<16x256xf32, #tpu.memory_space<vmem>>, vector<2x256xf32>,
    %c8 = arith.constant 8 : index
    %c0_21 = arith.constant 0 : index
    %18 = vector.load %arg23[%c8, %c0_21] : memref<16x256xf32, #tpu.memory_space<vmem>>, vector<2x256xf32>
    tpu.vector_store %arg23[%c8, %c0_21], %15 {strides = array<i32>} : memref<16x256xf32, #tpu.memory_space<vmem>>, vector<2x256xf32>,
    %c14 = arith.constant 14 : index
    %c0_22 = arith.constant 0 : index
    %19 = vector.load %arg23[%c14, %c0_22] : memref<16x256xf32, #tpu.memory_space<vmem>>, vector<2x256xf32>
    tpu.vector_store %arg23[%c14, %c0_22], %15 {strides = array<i32>} : memref<16x256xf32, #tpu.memory_space<vmem>>, vector<2x256xf32>,
    %c0_23 = arith.constant 0 : index
    %c0_24 = arith.constant 0 : index
    %c0_25 = arith.constant 0 : index
    %20 = tpu.strided_load %arg1[%c0_23, %c0_24, %c0_25] {strides = array<i32: 1, 2, 1>} : memref<1x40x48xf32, #tpu.memory_space<vmem>>, vector<1x9x48xf32>
    %21 = vector.shape_cast %20 : vector<1x9x48xf32> to vector<9x48xf32>
    %c0_26 = arith.constant 0 : index
    %c1 = arith.constant 1 : index
    %c0_27 = arith.constant 0 : index
    %22 = tpu.strided_load %arg1[%c0_26, %c1, %c0_27] {strides = array<i32: 1, 2, 1>} : memref<1x40x48xf32, #tpu.memory_space<vmem>>, vector<1x9x48xf32>
    %23 = vector.shape_cast %22 : vector<1x9x48xf32> to vector<9x48xf32>
    %c0_28 = arith.constant 0 : index
    %c2 = arith.constant 2 : index
    %c0_29 = arith.constant 0 : index
    %24 = tpu.strided_load %arg1[%c0_28, %c2, %c0_29] {strides = array<i32: 1, 2, 1>} : memref<1x40x48xf32, #tpu.memory_space<vmem>>, vector<1x9x48xf32>
    %25 = vector.shape_cast %24 : vector<1x9x48xf32> to vector<9x48xf32>
    %c0_30 = arith.constant 0 : index
    %c3 = arith.constant 3 : index
    %c0_31 = arith.constant 0 : index
    %26 = tpu.strided_load %arg1[%c0_30, %c3, %c0_31] {strides = array<i32: 1, 2, 1>} : memref<1x40x48xf32, #tpu.memory_space<vmem>>, vector<1x9x48xf32>
    %27 = vector.shape_cast %26 : vector<1x9x48xf32> to vector<9x48xf32>
    %28 = tpu.concatenate %21, %23, %25, %27 in 1 : vector<9x48xf32>, vector<9x48xf32>, vector<9x48xf32>, vector<9x48xf32> -> vector<9x192xf32>
    %c0_32 = arith.constant 0 : index
    %c20 = arith.constant 20 : index
    %c0_33 = arith.constant 0 : index
    %29 = tpu.strided_load %arg1[%c0_32, %c20, %c0_33] {strides = array<i32: 1, 2, 1>} : memref<1x40x48xf32, #tpu.memory_space<vmem>>, vector<1x9x48xf32>
    %30 = vector.shape_cast %29 : vector<1x9x48xf32> to vector<9x48xf32>
    %c0_34 = arith.constant 0 : index
    %c21 = arith.constant 21 : index
    %c0_35 = arith.constant 0 : index
    %31 = tpu.strided_load %arg1[%c0_34, %c21, %c0_35] {strides = array<i32: 1, 2, 1>} : memref<1x40x48xf32, #tpu.memory_space<vmem>>, vector<1x9x48xf32>
    %32 = vector.shape_cast %31 : vector<1x9x48xf32> to vector<9x48xf32>
    %c0_36 = arith.constant 0 : index
    %c22 = arith.constant 22 : index
    %c0_37 = arith.constant 0 : index
    %33 = tpu.strided_load %arg1[%c0_36, %c22, %c0_37] {strides = array<i32: 1, 2, 1>} : memref<1x40x48xf32, #tpu.memory_space<vmem>>, vector<1x9x48xf32>
    %34 = vector.shape_cast %33 : vector<1x9x48xf32> to vector<9x48xf32>
    %c0_38 = arith.constant 0 : index
    %c23 = arith.constant 23 : index
    %c0_39 = arith.constant 0 : index
    %35 = tpu.strided_load %arg1[%c0_38, %c23, %c0_39] {strides = array<i32: 1, 2, 1>} : memref<1x40x48xf32, #tpu.memory_space<vmem>>, vector<1x9x48xf32>
    %36 = vector.shape_cast %35 : vector<1x9x48xf32> to vector<9x48xf32>
    %37 = tpu.concatenate %30, %32, %34, %36 in 1 : vector<9x48xf32>, vector<9x48xf32>, vector<9x48xf32>, vector<9x48xf32> -> vector<9x192xf32>
    %38 = tpu.concatenate %28, %37 in 0 : vector<9x192xf32>, vector<9x192xf32> -> vector<18x192xf32>
    %39 = arith.truncf %38 : vector<18x192xf32> to vector<18x192xbf16>
    %c0_40 = arith.constant 0 : index
    %c0_41 = arith.constant 0 : index
    %40 = vector.load %arg2[%c0_40, %c0_41] : memref<192x72xbf16, #tpu.memory_space<vmem>>, vector<192x72xbf16>
    %cst_42 = arith.constant dense<0.000000e+00> : vector<18x72xf32>
    %41 = tpu.matmul %39, %40, %cst_42 {dimension_numbers = #tpu.dot_dimension_numbers<[1], [0], [0], [1], [0, 0, 1, 1], [], []>} : vector<18x192xbf16>, vector<192x72xbf16>, vector<18x72xf32> -> vector<18x72xf32>
    %cst_43 = arith.constant 0.000000e+00 : f32
    %42 = vector.broadcast %cst_43 : f32 to vector<18x72xf32>
    %43 = arith.cmpf ogt, %41, %42 : vector<18x72xf32>
    %cst_44 = arith.constant 2.000000e-01 : f32
    %44 = vector.broadcast %cst_44 : f32 to vector<18x72xf32>
    %45 = arith.mulf %44, %41 : vector<18x72xf32>
    %46 = arith.select %43, %41, %45 : vector<18x72xi1>, vector<18x72xf32>
    %47 = vector.extract_strided_slice %46 {offsets = [0, 0], sizes = [9, 72], strides = [1, 1]} : vector<18x72xf32> to vector<9x72xf32>
    %c2_45 = arith.constant 2 : index
    %c0_46 = arith.constant 0 : index
    %48 = vector.load %arg20[%c2_45, %c0_46] : memref<26x72xf32, #tpu.memory_space<vmem>>, vector<9x72xf32>
    tpu.vector_store %arg20[%c2_45, %c0_46], %47 {strides = array<i32>} : memref<26x72xf32, #tpu.memory_space<vmem>>, vector<9x72xf32>,
    %49 = vector.extract_strided_slice %46 {offsets = [9, 0], sizes = [9, 72], strides = [1, 1]} : vector<18x72xf32> to vector<9x72xf32>
    %c15 = arith.constant 15 : index
    %c0_47 = arith.constant 0 : index
    %50 = vector.load %arg20[%c15, %c0_47] : memref<26x72xf32, #tpu.memory_space<vmem>>, vector<9x72xf32>
    tpu.vector_store %arg20[%c15, %c0_47], %49 {strides = array<i32>} : memref<26x72xf32, #tpu.memory_space<vmem>>, vector<9x72xf32>,
    %c0_48 = arith.constant 0 : index
    %c0_49 = arith.constant 0 : index
    %51 = tpu.strided_load %arg20[%c0_48, %c0_49] {strides = array<i32: 2, 1>} : memref<26x72xf32, #tpu.memory_space<vmem>>, vector<5x72xf32>
    %c1_50 = arith.constant 1 : index
    %c0_51 = arith.constant 0 : index
    %52 = tpu.strided_load %arg20[%c1_50, %c0_51] {strides = array<i32: 2, 1>} : memref<26x72xf32, #tpu.memory_space<vmem>>, vector<5x72xf32>
    %c2_52 = arith.constant 2 : index
    %c0_53 = arith.constant 0 : index
    %53 = tpu.strided_load %arg20[%c2_52, %c0_53] {strides = array<i32: 2, 1>} : memref<26x72xf32, #tpu.memory_space<vmem>>, vector<5x72xf32>
    %c3_54 = arith.constant 3 : index
    %c0_55 = arith.constant 0 : index
    %54 = tpu.strided_load %arg20[%c3_54, %c0_55] {strides = array<i32: 2, 1>} : memref<26x72xf32, #tpu.memory_space<vmem>>, vector<5x72xf32>
    %55 = tpu.concatenate %51, %52, %53, %54 in 1 : vector<5x72xf32>, vector<5x72xf32>, vector<5x72xf32>, vector<5x72xf32> -> vector<5x288xf32>
    %c13_56 = arith.constant 13 : index
    %c0_57 = arith.constant 0 : index
    %56 = tpu.strided_load %arg20[%c13_56, %c0_57] {strides = array<i32: 2, 1>} : memref<26x72xf32, #tpu.memory_space<vmem>>, vector<5x72xf32>
    %c14_58 = arith.constant 14 : index
    %c0_59 = arith.constant 0 : index
    %57 = tpu.strided_load %arg20[%c14_58, %c0_59] {strides = array<i32: 2, 1>} : memref<26x72xf32, #tpu.memory_space<vmem>>, vector<5x72xf32>
    %c15_60 = arith.constant 15 : index
    %c0_61 = arith.constant 0 : index
    %58 = tpu.strided_load %arg20[%c15_60, %c0_61] {strides = array<i32: 2, 1>} : memref<26x72xf32, #tpu.memory_space<vmem>>, vector<5x72xf32>
    %c16_62 = arith.constant 16 : index
    %c0_63 = arith.constant 0 : index
    %59 = tpu.strided_load %arg20[%c16_62, %c0_63] {strides = array<i32: 2, 1>} : memref<26x72xf32, #tpu.memory_space<vmem>>, vector<5x72xf32>
    %60 = tpu.concatenate %56, %57, %58, %59 in 1 : vector<5x72xf32>, vector<5x72xf32>, vector<5x72xf32>, vector<5x72xf32> -> vector<5x288xf32>
    %61 = tpu.concatenate %55, %60 in 0 : vector<5x288xf32>, vector<5x288xf32> -> vector<10x288xf32>
    %62 = arith.truncf %61 : vector<10x288xf32> to vector<10x288xbf16>
    %c0_64 = arith.constant 0 : index
    %c0_65 = arith.constant 0 : index
    %63 = vector.load %arg3[%c0_64, %c0_65] : memref<288x80xbf16, #tpu.memory_space<vmem>>, vector<288x80xbf16>
    %cst_66 = arith.constant dense<0.000000e+00> : vector<10x80xf32>
    %64 = tpu.matmul %62, %63, %cst_66 {dimension_numbers = #tpu.dot_dimension_numbers<[1], [0], [0], [1], [0, 0, 1, 1], [], []>} : vector<10x288xbf16>, vector<288x80xbf16>, vector<10x80xf32> -> vector<10x80xf32>
    %c0_67 = arith.constant 0 : index
    %c0_68 = arith.constant 0 : index
    %65 = vector.load %arg7[%c0_67, %c0_68] : memref<1x16xf32, #tpu.memory_space<vmem>>, vector<1x16xf32>
    %c0_69 = arith.constant 0 : index
    %c0_70 = arith.constant 0 : index
    %66 = vector.load %arg8[%c0_69, %c0_70] : memref<1x16xf32, #tpu.memory_space<vmem>>, vector<1x16xf32>
    %c0_71 = arith.constant 0 : index
    %c0_72 = arith.constant 0 : index
    %67 = vector.load %arg9[%c0_71, %c0_72] : memref<80x16xf32, #tpu.memory_space<vmem>>, vector<80x16xf32>
    %c0_73 = arith.constant 0 : index
    %c0_74 = arith.constant 0 : index
    %68 = vector.load %arg10[%c0_73, %c0_74] : memref<16x80xf32, #tpu.memory_space<vmem>>, vector<16x80xf32>
    %69 = arith.mulf %64, %64 : vector<10x80xf32>
    %70 = vector.extract_strided_slice %64 {offsets = [0, 0], sizes = [5, 80], strides = [1, 1]} : vector<10x80xf32> to vector<5x80xf32>
    %cst_75 = arith.constant dense<0.000000e+00> : vector<80xf32>
    %71 = vector.multi_reduction <add>, %70, %cst_75 [0] : vector<5x80xf32> to vector<80xf32>
    %72 = vector.shape_cast %71 : vector<80xf32> to vector<1x80xf32>
    %73 = vector.extract_strided_slice %69 {offsets = [0, 0], sizes = [5, 80], strides = [1, 1]} : vector<10x80xf32> to vector<5x80xf32>
    %cst_76 = arith.constant dense<0.000000e+00> : vector<80xf32>
    %74 = vector.multi_reduction <add>, %73, %cst_76 [0] : vector<5x80xf32> to vector<80xf32>
    %75 = vector.shape_cast %74 : vector<80xf32> to vector<1x80xf32>
    %76 = tpu.concatenate %72, %75 in 0 : vector<1x80xf32>, vector<1x80xf32> -> vector<2x80xf32>
    %cst_77 = arith.constant dense<0.000000e+00> : vector<2x16xf32>
    %77 = tpu.matmul %76, %67, %cst_77 {dimension_numbers = #tpu.dot_dimension_numbers<[1], [0], [0], [1], [0, 0, 1, 1], [], []>} : vector<2x80xf32>, vector<80x16xf32>, vector<2x16xf32> -> vector<2x16xf32>
    %cst_78 = arith.constant 4.000000e-02 : f32
    %78 = vector.broadcast %cst_78 : f32 to vector<2x16xf32>
    %79 = arith.mulf %77, %78 : vector<2x16xf32>
    %80 = vector.extract_strided_slice %79 {offsets = [0, 0], sizes = [1, 16], strides = [1, 1]} : vector<2x16xf32> to vector<1x16xf32>
    %81 = vector.extract_strided_slice %79 {offsets = [1, 0], sizes = [1, 16], strides = [1, 1]} : vector<2x16xf32> to vector<1x16xf32>
    %82 = arith.mulf %80, %80 : vector<1x16xf32>
    %83 = arith.subf %81, %82 : vector<1x16xf32>
    %cst_79 = arith.constant 0.000000e+00 : f32
    %84 = vector.broadcast %cst_79 : f32 to vector<1x16xf32>
    %85 = arith.maximumf %83, %84 : vector<1x16xf32>
    %cst_80 = arith.constant 9.99999974E-6 : f32
    %86 = vector.broadcast %cst_80 : f32 to vector<1x16xf32>
    %87 = arith.addf %85, %86 : vector<1x16xf32>
    %88 = math.rsqrt %87 : vector<1x16xf32>
    %89 = arith.mulf %65, %88 : vector<1x16xf32>
    %90 = arith.mulf %80, %89 : vector<1x16xf32>
    %91 = arith.subf %66, %90 : vector<1x16xf32>
    %92 = tpu.concatenate %89, %91 in 0 : vector<1x16xf32>, vector<1x16xf32> -> vector<2x16xf32>
    %cst_81 = arith.constant dense<0.000000e+00> : vector<2x80xf32>
    %93 = tpu.matmul %92, %68, %cst_81 {dimension_numbers = #tpu.dot_dimension_numbers<[1], [0], [0], [1], [0, 0, 1, 1], [], []>} : vector<2x16xf32>, vector<16x80xf32>, vector<2x80xf32> -> vector<2x80xf32>
    %94 = vector.extract_strided_slice %93 {offsets = [0, 0], sizes = [1, 80], strides = [1, 1]} : vector<2x80xf32> to vector<1x80xf32>
    %95 = vector.broadcast %94 : vector<1x80xf32> to vector<5x80xf32>
    %96 = arith.mulf %70, %95 : vector<5x80xf32>
    %97 = vector.extract_strided_slice %93 {offsets = [1, 0], sizes = [1, 80], strides = [1, 1]} : vector<2x80xf32> to vector<1x80xf32>
    %98 = vector.broadcast %97 : vector<1x80xf32> to vector<5x80xf32>
    %99 = arith.addf %96, %98 : vector<5x80xf32>
    %cst_82 = arith.constant 0.000000e+00 : f32
    %100 = vector.broadcast %cst_82 : f32 to vector<5x80xf32>
    %101 = arith.cmpf ogt, %99, %100 : vector<5x80xf32>
    %cst_83 = arith.constant 2.000000e-01 : f32
    %102 = vector.broadcast %cst_83 : f32 to vector<5x80xf32>
    %103 = arith.mulf %102, %99 : vector<5x80xf32>
    %104 = arith.select %101, %99, %103 : vector<5x80xi1>, vector<5x80xf32>
    %c2_84 = arith.constant 2 : index
    %c0_85 = arith.constant 0 : index
    %105 = vector.load %arg21[%c2_84, %c0_85] : memref<18x80xf32, #tpu.memory_space<vmem>>, vector<5x80xf32>
    tpu.vector_store %arg21[%c2_84, %c0_85], %104 {strides = array<i32>} : memref<18x80xf32, #tpu.memory_space<vmem>>, vector<5x80xf32>,
    %106 = vector.extract_strided_slice %64 {offsets = [5, 0], sizes = [5, 80], strides = [1, 1]} : vector<10x80xf32> to vector<5x80xf32>
    %cst_86 = arith.constant dense<0.000000e+00> : vector<80xf32>
    %107 = vector.multi_reduction <add>, %106, %cst_86 [0] : vector<5x80xf32> to vector<80xf32>
    %108 = vector.shape_cast %107 : vector<80xf32> to vector<1x80xf32>
    %109 = vector.extract_strided_slice %69 {offsets = [5, 0], sizes = [5, 80], strides = [1, 1]} : vector<10x80xf32> to vector<5x80xf32>
    %cst_87 = arith.constant dense<0.000000e+00> : vector<80xf32>
    %110 = vector.multi_reduction <add>, %109, %cst_87 [0] : vector<5x80xf32> to vector<80xf32>
    %111 = vector.shape_cast %110 : vector<80xf32> to vector<1x80xf32>
    %112 = tpu.concatenate %108, %111 in 0 : vector<1x80xf32>, vector<1x80xf32> -> vector<2x80xf32>
    %cst_88 = arith.constant dense<0.000000e+00> : vector<2x16xf32>
    %113 = tpu.matmul %112, %67, %cst_88 {dimension_numbers = #tpu.dot_dimension_numbers<[1], [0], [0], [1], [0, 0, 1, 1], [], []>} : vector<2x80xf32>, vector<80x16xf32>, vector<2x16xf32> -> vector<2x16xf32>
    %cst_89 = arith.constant 4.000000e-02 : f32
    %114 = vector.broadcast %cst_89 : f32 to vector<2x16xf32>
    %115 = arith.mulf %113, %114 : vector<2x16xf32>
    %116 = vector.extract_strided_slice %115 {offsets = [0, 0], sizes = [1, 16], strides = [1, 1]} : vector<2x16xf32> to vector<1x16xf32>
    %117 = vector.extract_strided_slice %115 {offsets = [1, 0], sizes = [1, 16], strides = [1, 1]} : vector<2x16xf32> to vector<1x16xf32>
    %118 = arith.mulf %116, %116 : vector<1x16xf32>
    %119 = arith.subf %117, %118 : vector<1x16xf32>
    %cst_90 = arith.constant 0.000000e+00 : f32
    %120 = vector.broadcast %cst_90 : f32 to vector<1x16xf32>
    %121 = arith.maximumf %119, %120 : vector<1x16xf32>
    %cst_91 = arith.constant 9.99999974E-6 : f32
    %122 = vector.broadcast %cst_91 : f32 to vector<1x16xf32>
    %123 = arith.addf %121, %122 : vector<1x16xf32>
    %124 = math.rsqrt %123 : vector<1x16xf32>
    %125 = arith.mulf %65, %124 : vector<1x16xf32>
    %126 = arith.mulf %116, %125 : vector<1x16xf32>
    %127 = arith.subf %66, %126 : vector<1x16xf32>
    %128 = tpu.concatenate %125, %127 in 0 : vector<1x16xf32>, vector<1x16xf32> -> vector<2x16xf32>
    %cst_92 = arith.constant dense<0.000000e+00> : vector<2x80xf32>
    %129 = tpu.matmul %128, %68, %cst_92 {dimension_numbers = #tpu.dot_dimension_numbers<[1], [0], [0], [1], [0, 0, 1, 1], [], []>} : vector<2x16xf32>, vector<16x80xf32>, vector<2x80xf32> -> vector<2x80xf32>
    %130 = vector.extract_strided_slice %129 {offsets = [0, 0], sizes = [1, 80], strides = [1, 1]} : vector<2x80xf32> to vector<1x80xf32>
    %131 = vector.broadcast %130 : vector<1x80xf32> to vector<5x80xf32>
    %132 = arith.mulf %106, %131 : vector<5x80xf32>
    %133 = vector.extract_strided_slice %129 {offsets = [1, 0], sizes = [1, 80], strides = [1, 1]} : vector<2x80xf32> to vector<1x80xf32>
    %134 = vector.broadcast %133 : vector<1x80xf32> to vector<5x80xf32>
    %135 = arith.addf %132, %134 : vector<5x80xf32>
    %cst_93 = arith.constant 0.000000e+00 : f32
    %136 = vector.broadcast %cst_93 : f32 to vector<5x80xf32>
    %137 = arith.cmpf ogt, %135, %136 : vector<5x80xf32>
    %cst_94 = arith.constant 2.000000e-01 : f32
    %138 = vector.broadcast %cst_94 : f32 to vector<5x80xf32>
    %139 = arith.mulf %138, %135 : vector<5x80xf32>
    %140 = arith.select %137, %135, %139 : vector<5x80xi1>, vector<5x80xf32>
    %c11_95 = arith.constant 11 : index
    %c0_96 = arith.constant 0 : index
    %141 = vector.load %arg21[%c11_95, %c0_96] : memref<18x80xf32, #tpu.memory_space<vmem>>, vector<5x80xf32>
    tpu.vector_store %arg21[%c11_95, %c0_96], %140 {strides = array<i32>} : memref<18x80xf32, #tpu.memory_space<vmem>>, vector<5x80xf32>,
    %c0_97 = arith.constant 0 : index
    %c0_98 = arith.constant 0 : index
    %142 = tpu.strided_load %arg21[%c0_97, %c0_98] {strides = array<i32: 2, 1>} : memref<18x80xf32, #tpu.memory_space<vmem>>, vector<3x80xf32>
    %c1_99 = arith.constant 1 : index
    %c0_100 = arith.constant 0 : index
    %143 = tpu.strided_load %arg21[%c1_99, %c0_100] {strides = array<i32: 2, 1>} : memref<18x80xf32, #tpu.memory_space<vmem>>, vector<3x80xf32>
    %c2_101 = arith.constant 2 : index
    %c0_102 = arith.constant 0 : index
    %144 = tpu.strided_load %arg21[%c2_101, %c0_102] {strides = array<i32: 2, 1>} : memref<18x80xf32, #tpu.memory_space<vmem>>, vector<3x80xf32>
    %c3_103 = arith.constant 3 : index
    %c0_104 = arith.constant 0 : index
    %145 = tpu.strided_load %arg21[%c3_103, %c0_104] {strides = array<i32: 2, 1>} : memref<18x80xf32, #tpu.memory_space<vmem>>, vector<3x80xf32>
    %146 = tpu.concatenate %142, %143, %144, %145 in 1 : vector<3x80xf32>, vector<3x80xf32>, vector<3x80xf32>, vector<3x80xf32> -> vector<3x320xf32>
    %c9_105 = arith.constant 9 : index
    %c0_106 = arith.constant 0 : index
    %147 = tpu.strided_load %arg21[%c9_105, %c0_106] {strides = array<i32: 2, 1>} : memref<18x80xf32, #tpu.memory_space<vmem>>, vector<3x80xf32>
    %c10 = arith.constant 10 : index
    %c0_107 = arith.constant 0 : index
    %148 = tpu.strided_load %arg21[%c10, %c0_107] {strides = array<i32: 2, 1>} : memref<18x80xf32, #tpu.memory_space<vmem>>, vector<3x80xf32>
    %c11_108 = arith.constant 11 : index
    %c0_109 = arith.constant 0 : index
    %149 = tpu.strided_load %arg21[%c11_108, %c0_109] {strides = array<i32: 2, 1>} : memref<18x80xf32, #tpu.memory_space<vmem>>, vector<3x80xf32>
    %c12_110 = arith.constant 12 : index
    %c0_111 = arith.constant 0 : index
    %150 = tpu.strided_load %arg21[%c12_110, %c0_111] {strides = array<i32: 2, 1>} : memref<18x80xf32, #tpu.memory_space<vmem>>, vector<3x80xf32>
    %151 = tpu.concatenate %147, %148, %149, %150 in 1 : vector<3x80xf32>, vector<3x80xf32>, vector<3x80xf32>, vector<3x80xf32> -> vector<3x320xf32>
    %152 = tpu.concatenate %146, %151 in 0 : vector<3x320xf32>, vector<3x320xf32> -> vector<6x320xf32>
    %153 = arith.truncf %152 : vector<6x320xf32> to vector<6x320xbf16>
    %c0_112 = arith.constant 0 : index
    %c0_113 = arith.constant 0 : index
    %154 = vector.load %arg4[%c0_112, %c0_113] : memref<320x96xbf16, #tpu.memory_space<vmem>>, vector<320x96xbf16>
    %cst_114 = arith.constant dense<0.000000e+00> : vector<6x96xf32>
    %155 = tpu.matmul %153, %154, %cst_114 {dimension_numbers = #tpu.dot_dimension_numbers<[1], [0], [0], [1], [0, 0, 1, 1], [], []>} : vector<6x320xbf16>, vector<320x96xbf16>, vector<6x96xf32> -> vector<6x96xf32>
    %c0_115 = arith.constant 0 : index
    %c0_116 = arith.constant 0 : index
    %156 = vector.load %arg11[%c0_115, %c0_116] : memref<1x32xf32, #tpu.memory_space<vmem>>, vector<1x32xf32>
    %c0_117 = arith.constant 0 : index
    %c0_118 = arith.constant 0 : index
    %157 = vector.load %arg12[%c0_117, %c0_118] : memref<1x32xf32, #tpu.memory_space<vmem>>, vector<1x32xf32>
    %c0_119 = arith.constant 0 : index
    %c0_120 = arith.constant 0 : index
    %158 = vector.load %arg13[%c0_119, %c0_120] : memref<96x32xf32, #tpu.memory_space<vmem>>, vector<96x32xf32>
    %c0_121 = arith.constant 0 : index
    %c0_122 = arith.constant 0 : index
    %159 = vector.load %arg14[%c0_121, %c0_122] : memref<32x96xf32, #tpu.memory_space<vmem>>, vector<32x96xf32>
    %160 = arith.mulf %155, %155 : vector<6x96xf32>
    %161 = vector.extract_strided_slice %155 {offsets = [0, 0], sizes = [3, 96], strides = [1, 1]} : vector<6x96xf32> to vector<3x96xf32>
    %cst_123 = arith.constant dense<0.000000e+00> : vector<96xf32>
    %162 = vector.multi_reduction <add>, %161, %cst_123 [0] : vector<3x96xf32> to vector<96xf32>
    %163 = vector.shape_cast %162 : vector<96xf32> to vector<1x96xf32>
    %164 = vector.extract_strided_slice %160 {offsets = [0, 0], sizes = [3, 96], strides = [1, 1]} : vector<6x96xf32> to vector<3x96xf32>
    %cst_124 = arith.constant dense<0.000000e+00> : vector<96xf32>
    %165 = vector.multi_reduction <add>, %164, %cst_124 [0] : vector<3x96xf32> to vector<96xf32>
    %166 = vector.shape_cast %165 : vector<96xf32> to vector<1x96xf32>
    %167 = tpu.concatenate %163, %166 in 0 : vector<1x96xf32>, vector<1x96xf32> -> vector<2x96xf32>
    %cst_125 = arith.constant dense<0.000000e+00> : vector<2x32xf32>
    %168 = tpu.matmul %167, %158, %cst_125 {dimension_numbers = #tpu.dot_dimension_numbers<[1], [0], [0], [1], [0, 0, 1, 1], [], []>} : vector<2x96xf32>, vector<96x32xf32>, vector<2x32xf32> -> vector<2x32xf32>
    %cst_126 = arith.constant 0.111111112 : f32
    %169 = vector.broadcast %cst_126 : f32 to vector<2x32xf32>
    %170 = arith.mulf %168, %169 : vector<2x32xf32>
    %171 = vector.extract_strided_slice %170 {offsets = [0, 0], sizes = [1, 32], strides = [1, 1]} : vector<2x32xf32> to vector<1x32xf32>
    %172 = vector.extract_strided_slice %170 {offsets = [1, 0], sizes = [1, 32], strides = [1, 1]} : vector<2x32xf32> to vector<1x32xf32>
    %173 = arith.mulf %171, %171 : vector<1x32xf32>
    %174 = arith.subf %172, %173 : vector<1x32xf32>
    %cst_127 = arith.constant 0.000000e+00 : f32
    %175 = vector.broadcast %cst_127 : f32 to vector<1x32xf32>
    %176 = arith.maximumf %174, %175 : vector<1x32xf32>
    %cst_128 = arith.constant 9.99999974E-6 : f32
    %177 = vector.broadcast %cst_128 : f32 to vector<1x32xf32>
    %178 = arith.addf %176, %177 : vector<1x32xf32>
    %179 = math.rsqrt %178 : vector<1x32xf32>
    %180 = arith.mulf %156, %179 : vector<1x32xf32>
    %181 = arith.mulf %171, %180 : vector<1x32xf32>
    %182 = arith.subf %157, %181 : vector<1x32xf32>
    %183 = tpu.concatenate %180, %182 in 0 : vector<1x32xf32>, vector<1x32xf32> -> vector<2x32xf32>
    %cst_129 = arith.constant dense<0.000000e+00> : vector<2x96xf32>
    %184 = tpu.matmul %183, %159, %cst_129 {dimension_numbers = #tpu.dot_dimension_numbers<[1], [0], [0], [1], [0, 0, 1, 1], [], []>} : vector<2x32xf32>, vector<32x96xf32>, vector<2x96xf32> -> vector<2x96xf32>
    %185 = vector.extract_strided_slice %184 {offsets = [0, 0], sizes = [1, 96], strides = [1, 1]} : vector<2x96xf32> to vector<1x96xf32>
    %186 = vector.broadcast %185 : vector<1x96xf32> to vector<3x96xf32>
    %187 = arith.mulf %161, %186 : vector<3x96xf32>
    %188 = vector.extract_strided_slice %184 {offsets = [1, 0], sizes = [1, 96], strides = [1, 1]} : vector<2x96xf32> to vector<1x96xf32>
    %189 = vector.broadcast %188 : vector<1x96xf32> to vector<3x96xf32>
    %190 = arith.addf %187, %189 : vector<3x96xf32>
    %cst_130 = arith.constant 0.000000e+00 : f32
    %191 = vector.broadcast %cst_130 : f32 to vector<3x96xf32>
    %192 = arith.cmpf ogt, %190, %191 : vector<3x96xf32>
    %cst_131 = arith.constant 2.000000e-01 : f32
    %193 = vector.broadcast %cst_131 : f32 to vector<3x96xf32>
    %194 = arith.mulf %193, %190 : vector<3x96xf32>
    %195 = arith.select %192, %190, %194 : vector<3x96xi1>, vector<3x96xf32>
    %c2_132 = arith.constant 2 : index
    %c0_133 = arith.constant 0 : index
    %196 = vector.load %arg22[%c2_132, %c0_133] : memref<14x96xf32, #tpu.memory_space<vmem>>, vector<3x96xf32>
    tpu.vector_store %arg22[%c2_132, %c0_133], %195 {strides = array<i32>} : memref<14x96xf32, #tpu.memory_space<vmem>>, vector<3x96xf32>,
    %197 = vector.extract_strided_slice %155 {offsets = [3, 0], sizes = [3, 96], strides = [1, 1]} : vector<6x96xf32> to vector<3x96xf32>
    %cst_134 = arith.constant dense<0.000000e+00> : vector<96xf32>
    %198 = vector.multi_reduction <add>, %197, %cst_134 [0] : vector<3x96xf32> to vector<96xf32>
    %199 = vector.shape_cast %198 : vector<96xf32> to vector<1x96xf32>
    %200 = vector.extract_strided_slice %160 {offsets = [3, 0], sizes = [3, 96], strides = [1, 1]} : vector<6x96xf32> to vector<3x96xf32>
    %cst_135 = arith.constant dense<0.000000e+00> : vector<96xf32>
    %201 = vector.multi_reduction <add>, %200, %cst_135 [0] : vector<3x96xf32> to vector<96xf32>
    %202 = vector.shape_cast %201 : vector<96xf32> to vector<1x96xf32>
    %203 = tpu.concatenate %199, %202 in 0 : vector<1x96xf32>, vector<1x96xf32> -> vector<2x96xf32>
    %cst_136 = arith.constant dense<0.000000e+00> : vector<2x32xf32>
    %204 = tpu.matmul %203, %158, %cst_136 {dimension_numbers = #tpu.dot_dimension_numbers<[1], [0], [0], [1], [0, 0, 1, 1], [], []>} : vector<2x96xf32>, vector<96x32xf32>, vector<2x32xf32> -> vector<2x32xf32>
    %cst_137 = arith.constant 0.111111112 : f32
    %205 = vector.broadcast %cst_137 : f32 to vector<2x32xf32>
    %206 = arith.mulf %204, %205 : vector<2x32xf32>
    %207 = vector.extract_strided_slice %206 {offsets = [0, 0], sizes = [1, 32], strides = [1, 1]} : vector<2x32xf32> to vector<1x32xf32>
    %208 = vector.extract_strided_slice %206 {offsets = [1, 0], sizes = [1, 32], strides = [1, 1]} : vector<2x32xf32> to vector<1x32xf32>
    %209 = arith.mulf %207, %207 : vector<1x32xf32>
    %210 = arith.subf %208, %209 : vector<1x32xf32>
    %cst_138 = arith.constant 0.000000e+00 : f32
    %211 = vector.broadcast %cst_138 : f32 to vector<1x32xf32>
    %212 = arith.maximumf %210, %211 : vector<1x32xf32>
    %cst_139 = arith.constant 9.99999974E-6 : f32
    %213 = vector.broadcast %cst_139 : f32 to vector<1x32xf32>
    %214 = arith.addf %212, %213 : vector<1x32xf32>
    %215 = math.rsqrt %214 : vector<1x32xf32>
    %216 = arith.mulf %156, %215 : vector<1x32xf32>
    %217 = arith.mulf %207, %216 : vector<1x32xf32>
    %218 = arith.subf %157, %217 : vector<1x32xf32>
    %219 = tpu.concatenate %216, %218 in 0 : vector<1x32xf32>, vector<1x32xf32> -> vector<2x32xf32>
    %cst_140 = arith.constant dense<0.000000e+00> : vector<2x96xf32>
    %220 = tpu.matmul %219, %159, %cst_140 {dimension_numbers = #tpu.dot_dimension_numbers<[1], [0], [0], [1], [0, 0, 1, 1], [], []>} : vector<2x32xf32>, vector<32x96xf32>, vector<2x96xf32> -> vector<2x96xf32>
    %221 = vector.extract_strided_slice %220 {offsets = [0, 0], sizes = [1, 96], strides = [1, 1]} : vector<2x96xf32> to vector<1x96xf32>
    %222 = vector.broadcast %221 : vector<1x96xf32> to vector<3x96xf32>
    %223 = arith.mulf %197, %222 : vector<3x96xf32>
    %224 = vector.extract_strided_slice %220 {offsets = [1, 0], sizes = [1, 96], strides = [1, 1]} : vector<2x96xf32> to vector<1x96xf32>
    %225 = vector.broadcast %224 : vector<1x96xf32> to vector<3x96xf32>
    %226 = arith.addf %223, %225 : vector<3x96xf32>
    %cst_141 = arith.constant 0.000000e+00 : f32
    %227 = vector.broadcast %cst_141 : f32 to vector<3x96xf32>
    %228 = arith.cmpf ogt, %226, %227 : vector<3x96xf32>
    %cst_142 = arith.constant 2.000000e-01 : f32
    %229 = vector.broadcast %cst_142 : f32 to vector<3x96xf32>
    %230 = arith.mulf %229, %226 : vector<3x96xf32>
    %231 = arith.select %228, %226, %230 : vector<3x96xi1>, vector<3x96xf32>
    %c9_143 = arith.constant 9 : index
    %c0_144 = arith.constant 0 : index
    %232 = vector.load %arg22[%c9_143, %c0_144] : memref<14x96xf32, #tpu.memory_space<vmem>>, vector<3x96xf32>
    tpu.vector_store %arg22[%c9_143, %c0_144], %231 {strides = array<i32>} : memref<14x96xf32, #tpu.memory_space<vmem>>, vector<3x96xf32>,
    %c0_145 = arith.constant 0 : index
    %c0_146 = arith.constant 0 : index
    %233 = vector.load %arg22[%c0_145, %c0_146] : memref<14x96xf32, #tpu.memory_space<vmem>>, vector<4x96xf32>
    %c1_147 = arith.constant 1 : index
    %c0_148 = arith.constant 0 : index
    %234 = vector.load %arg22[%c1_147, %c0_148] : memref<14x96xf32, #tpu.memory_space<vmem>>, vector<4x96xf32>
    %c2_149 = arith.constant 2 : index
    %c0_150 = arith.constant 0 : index
    %235 = vector.load %arg22[%c2_149, %c0_150] : memref<14x96xf32, #tpu.memory_space<vmem>>, vector<4x96xf32>
    %c3_151 = arith.constant 3 : index
    %c0_152 = arith.constant 0 : index
    %236 = vector.load %arg22[%c3_151, %c0_152] : memref<14x96xf32, #tpu.memory_space<vmem>>, vector<4x96xf32>
    %237 = tpu.concatenate %233, %234, %235, %236 in 1 : vector<4x96xf32>, vector<4x96xf32>, vector<4x96xf32>, vector<4x96xf32> -> vector<4x384xf32>
    %c7_153 = arith.constant 7 : index
    %c0_154 = arith.constant 0 : index
    %238 = vector.load %arg22[%c7_153, %c0_154] : memref<14x96xf32, #tpu.memory_space<vmem>>, vector<4x96xf32>
    %c8_155 = arith.constant 8 : index
    %c0_156 = arith.constant 0 : index
    %239 = vector.load %arg22[%c8_155, %c0_156] : memref<14x96xf32, #tpu.memory_space<vmem>>, vector<4x96xf32>
    %c9_157 = arith.constant 9 : index
    %c0_158 = arith.constant 0 : index
    %240 = vector.load %arg22[%c9_157, %c0_158] : memref<14x96xf32, #tpu.memory_space<vmem>>, vector<4x96xf32>
    %c10_159 = arith.constant 10 : index
    %c0_160 = arith.constant 0 : index
    %241 = vector.load %arg22[%c10_159, %c0_160] : memref<14x96xf32, #tpu.memory_space<vmem>>, vector<4x96xf32>
    %242 = tpu.concatenate %238, %239, %240, %241 in 1 : vector<4x96xf32>, vector<4x96xf32>, vector<4x96xf32>, vector<4x96xf32> -> vector<4x384xf32>
    %243 = tpu.concatenate %237, %242 in 0 : vector<4x384xf32>, vector<4x384xf32> -> vector<8x384xf32>
    %244 = arith.truncf %243 : vector<8x384xf32> to vector<8x384xbf16>
    %c0_161 = arith.constant 0 : index
    %c0_162 = arith.constant 0 : index
    %245 = vector.load %arg5[%c0_161, %c0_162] : memref<384x256xbf16, #tpu.memory_space<vmem>>, vector<384x256xbf16>
    %cst_163 = arith.constant dense<0.000000e+00> : vector<8x256xf32>
    %246 = tpu.matmul %244, %245, %cst_163 {dimension_numbers = #tpu.dot_dimension_numbers<[1], [0], [0], [1], [0, 0, 1, 1], [], []>} : vector<8x384xbf16>, vector<384x256xbf16>, vector<8x256xf32> -> vector<8x256xf32>
    %c0_164 = arith.constant 0 : index
    %c0_165 = arith.constant 0 : index
    %247 = vector.load %arg15[%c0_164, %c0_165] : memref<1x64xf32, #tpu.memory_space<vmem>>, vector<1x64xf32>
    %c0_166 = arith.constant 0 : index
    %c0_167 = arith.constant 0 : index
    %248 = vector.load %arg16[%c0_166, %c0_167] : memref<1x64xf32, #tpu.memory_space<vmem>>, vector<1x64xf32>
    %c0_168 = arith.constant 0 : index
    %c0_169 = arith.constant 0 : index
    %249 = vector.load %arg17[%c0_168, %c0_169] : memref<256x64xf32, #tpu.memory_space<vmem>>, vector<256x64xf32>
    %c0_170 = arith.constant 0 : index
    %c0_171 = arith.constant 0 : index
    %250 = vector.load %arg18[%c0_170, %c0_171] : memref<64x256xf32, #tpu.memory_space<vmem>>, vector<64x256xf32>
    %251 = arith.mulf %246, %246 : vector<8x256xf32>
    %252 = vector.extract_strided_slice %246 {offsets = [0, 0], sizes = [4, 256], strides = [1, 1]} : vector<8x256xf32> to vector<4x256xf32>
    %cst_172 = arith.constant dense<0.000000e+00> : vector<256xf32>
    %253 = vector.multi_reduction <add>, %252, %cst_172 [0] : vector<4x256xf32> to vector<256xf32>
    %254 = vector.shape_cast %253 : vector<256xf32> to vector<1x256xf32>
    %255 = vector.extract_strided_slice %251 {offsets = [0, 0], sizes = [4, 256], strides = [1, 1]} : vector<8x256xf32> to vector<4x256xf32>
    %cst_173 = arith.constant dense<0.000000e+00> : vector<256xf32>
    %256 = vector.multi_reduction <add>, %255, %cst_173 [0] : vector<4x256xf32> to vector<256xf32>
    %257 = vector.shape_cast %256 : vector<256xf32> to vector<1x256xf32>
    %258 = tpu.concatenate %254, %257 in 0 : vector<1x256xf32>, vector<1x256xf32> -> vector<2x256xf32>
    %cst_174 = arith.constant dense<0.000000e+00> : vector<2x64xf32>
    %259 = tpu.matmul %258, %249, %cst_174 {dimension_numbers = #tpu.dot_dimension_numbers<[1], [0], [0], [1], [0, 0, 1, 1], [], []>} : vector<2x256xf32>, vector<256x64xf32>, vector<2x64xf32> -> vector<2x64xf32>
    %cst_175 = arith.constant 6.250000e-02 : f32
    %260 = vector.broadcast %cst_175 : f32 to vector<2x64xf32>
    %261 = arith.mulf %259, %260 : vector<2x64xf32>
    %262 = vector.extract_strided_slice %261 {offsets = [0, 0], sizes = [1, 64], strides = [1, 1]} : vector<2x64xf32> to vector<1x64xf32>
    %263 = vector.extract_strided_slice %261 {offsets = [1, 0], sizes = [1, 64], strides = [1, 1]} : vector<2x64xf32> to vector<1x64xf32>
    %264 = arith.mulf %262, %262 : vector<1x64xf32>
    %265 = arith.subf %263, %264 : vector<1x64xf32>
    %cst_176 = arith.constant 0.000000e+00 : f32
    %266 = vector.broadcast %cst_176 : f32 to vector<1x64xf32>
    %267 = arith.maximumf %265, %266 : vector<1x64xf32>
    %cst_177 = arith.constant 9.99999974E-6 : f32
    %268 = vector.broadcast %cst_177 : f32 to vector<1x64xf32>
    %269 = arith.addf %267, %268 : vector<1x64xf32>
    %270 = math.rsqrt %269 : vector<1x64xf32>
    %271 = arith.mulf %247, %270 : vector<1x64xf32>
    %272 = arith.mulf %262, %271 : vector<1x64xf32>
    %273 = arith.subf %248, %272 : vector<1x64xf32>
    %274 = tpu.concatenate %271, %273 in 0 : vector<1x64xf32>, vector<1x64xf32> -> vector<2x64xf32>
    %cst_178 = arith.constant dense<0.000000e+00> : vector<2x256xf32>
    %275 = tpu.matmul %274, %250, %cst_178 {dimension_numbers = #tpu.dot_dimension_numbers<[1], [0], [0], [1], [0, 0, 1, 1], [], []>} : vector<2x64xf32>, vector<64x256xf32>, vector<2x256xf32> -> vector<2x256xf32>
    %276 = vector.extract_strided_slice %275 {offsets = [0, 0], sizes = [1, 256], strides = [1, 1]} : vector<2x256xf32> to vector<1x256xf32>
    %277 = vector.broadcast %276 : vector<1x256xf32> to vector<4x256xf32>
    %278 = arith.mulf %252, %277 : vector<4x256xf32>
    %279 = vector.extract_strided_slice %275 {offsets = [1, 0], sizes = [1, 256], strides = [1, 1]} : vector<2x256xf32> to vector<1x256xf32>
    %280 = vector.broadcast %279 : vector<1x256xf32> to vector<4x256xf32>
    %281 = arith.addf %278, %280 : vector<4x256xf32>
    %cst_179 = arith.constant 0.000000e+00 : f32
    %282 = vector.broadcast %cst_179 : f32 to vector<4x256xf32>
    %283 = arith.cmpf ogt, %281, %282 : vector<4x256xf32>
    %cst_180 = arith.constant 2.000000e-01 : f32
    %284 = vector.broadcast %cst_180 : f32 to vector<4x256xf32>
    %285 = arith.mulf %284, %281 : vector<4x256xf32>
    %286 = arith.select %283, %281, %285 : vector<4x256xi1>, vector<4x256xf32>
    %c2_181 = arith.constant 2 : index
    %c0_182 = arith.constant 0 : index
    %287 = vector.load %arg23[%c2_181, %c0_182] : memref<16x256xf32, #tpu.memory_space<vmem>>, vector<4x256xf32>
    tpu.vector_store %arg23[%c2_181, %c0_182], %286 {strides = array<i32>} : memref<16x256xf32, #tpu.memory_space<vmem>>, vector<4x256xf32>,
    %288 = vector.extract_strided_slice %246 {offsets = [4, 0], sizes = [4, 256], strides = [1, 1]} : vector<8x256xf32> to vector<4x256xf32>
    %cst_183 = arith.constant dense<0.000000e+00> : vector<256xf32>
    %289 = vector.multi_reduction <add>, %288, %cst_183 [0] : vector<4x256xf32> to vector<256xf32>
    %290 = vector.shape_cast %289 : vector<256xf32> to vector<1x256xf32>
    %291 = vector.extract_strided_slice %251 {offsets = [4, 0], sizes = [4, 256], strides = [1, 1]} : vector<8x256xf32> to vector<4x256xf32>
    %cst_184 = arith.constant dense<0.000000e+00> : vector<256xf32>
    %292 = vector.multi_reduction <add>, %291, %cst_184 [0] : vector<4x256xf32> to vector<256xf32>
    %293 = vector.shape_cast %292 : vector<256xf32> to vector<1x256xf32>
    %294 = tpu.concatenate %290, %293 in 0 : vector<1x256xf32>, vector<1x256xf32> -> vector<2x256xf32>
    %cst_185 = arith.constant dense<0.000000e+00> : vector<2x64xf32>
    %295 = tpu.matmul %294, %249, %cst_185 {dimension_numbers = #tpu.dot_dimension_numbers<[1], [0], [0], [1], [0, 0, 1, 1], [], []>} : vector<2x256xf32>, vector<256x64xf32>, vector<2x64xf32> -> vector<2x64xf32>
    %cst_186 = arith.constant 6.250000e-02 : f32
    %296 = vector.broadcast %cst_186 : f32 to vector<2x64xf32>
    %297 = arith.mulf %295, %296 : vector<2x64xf32>
    %298 = vector.extract_strided_slice %297 {offsets = [0, 0], sizes = [1, 64], strides = [1, 1]} : vector<2x64xf32> to vector<1x64xf32>
    %299 = vector.extract_strided_slice %297 {offsets = [1, 0], sizes = [1, 64], strides = [1, 1]} : vector<2x64xf32> to vector<1x64xf32>
    %300 = arith.mulf %298, %298 : vector<1x64xf32>
    %301 = arith.subf %299, %300 : vector<1x64xf32>
    %cst_187 = arith.constant 0.000000e+00 : f32
    %302 = vector.broadcast %cst_187 : f32 to vector<1x64xf32>
    %303 = arith.maximumf %301, %302 : vector<1x64xf32>
    %cst_188 = arith.constant 9.99999974E-6 : f32
    %304 = vector.broadcast %cst_188 : f32 to vector<1x64xf32>
    %305 = arith.addf %303, %304 : vector<1x64xf32>
    %306 = math.rsqrt %305 : vector<1x64xf32>
    %307 = arith.mulf %247, %306 : vector<1x64xf32>
    %308 = arith.mulf %298, %307 : vector<1x64xf32>
    %309 = arith.subf %248, %308 : vector<1x64xf32>
    %310 = tpu.concatenate %307, %309 in 0 : vector<1x64xf32>, vector<1x64xf32> -> vector<2x64xf32>
    %cst_189 = arith.constant dense<0.000000e+00> : vector<2x256xf32>
    %311 = tpu.matmul %310, %250, %cst_189 {dimension_numbers = #tpu.dot_dimension_numbers<[1], [0], [0], [1], [0, 0, 1, 1], [], []>} : vector<2x64xf32>, vector<64x256xf32>, vector<2x256xf32> -> vector<2x256xf32>
    %312 = vector.extract_strided_slice %311 {offsets = [0, 0], sizes = [1, 256], strides = [1, 1]} : vector<2x256xf32> to vector<1x256xf32>
    %313 = vector.broadcast %312 : vector<1x256xf32> to vector<4x256xf32>
    %314 = arith.mulf %288, %313 : vector<4x256xf32>
    %315 = vector.extract_strided_slice %311 {offsets = [1, 0], sizes = [1, 256], strides = [1, 1]} : vector<2x256xf32> to vector<1x256xf32>
    %316 = vector.broadcast %315 : vector<1x256xf32> to vector<4x256xf32>
    %317 = arith.addf %314, %316 : vector<4x256xf32>
    %cst_190 = arith.constant 0.000000e+00 : f32
    %318 = vector.broadcast %cst_190 : f32 to vector<4x256xf32>
    %319 = arith.cmpf ogt, %317, %318 : vector<4x256xf32>
    %cst_191 = arith.constant 2.000000e-01 : f32
    %320 = vector.broadcast %cst_191 : f32 to vector<4x256xf32>
    %321 = arith.mulf %320, %317 : vector<4x256xf32>
    %322 = arith.select %319, %317, %321 : vector<4x256xi1>, vector<4x256xf32>
    %c10_192 = arith.constant 10 : index
    %c0_193 = arith.constant 0 : index
    %323 = vector.load %arg23[%c10_192, %c0_193] : memref<16x256xf32, #tpu.memory_space<vmem>>, vector<4x256xf32>
    tpu.vector_store %arg23[%c10_192, %c0_193], %322 {strides = array<i32>} : memref<16x256xf32, #tpu.memory_space<vmem>>, vector<4x256xf32>,
    %c0_194 = arith.constant 0 : index
    %c0_195 = arith.constant 0 : index
    %324 = vector.load %arg23[%c0_194, %c0_195] : memref<16x256xf32, #tpu.memory_space<vmem>>, vector<5x256xf32>
    %c1_196 = arith.constant 1 : index
    %c0_197 = arith.constant 0 : index
    %325 = vector.load %arg23[%c1_196, %c0_197] : memref<16x256xf32, #tpu.memory_space<vmem>>, vector<5x256xf32>
    %c2_198 = arith.constant 2 : index
    %c0_199 = arith.constant 0 : index
    %326 = vector.load %arg23[%c2_198, %c0_199] : memref<16x256xf32, #tpu.memory_space<vmem>>, vector<5x256xf32>
    %c3_200 = arith.constant 3 : index
    %c0_201 = arith.constant 0 : index
    %327 = vector.load %arg23[%c3_200, %c0_201] : memref<16x256xf32, #tpu.memory_space<vmem>>, vector<5x256xf32>
    %328 = tpu.concatenate %324, %325, %326, %327 in 1 : vector<5x256xf32>, vector<5x256xf32>, vector<5x256xf32>, vector<5x256xf32> -> vector<5x1024xf32>
    %c8_202 = arith.constant 8 : index
    %c0_203 = arith.constant 0 : index
    %329 = vector.load %arg23[%c8_202, %c0_203] : memref<16x256xf32, #tpu.memory_space<vmem>>, vector<5x256xf32>
    %c9_204 = arith.constant 9 : index
    %c0_205 = arith.constant 0 : index
    %330 = vector.load %arg23[%c9_204, %c0_205] : memref<16x256xf32, #tpu.memory_space<vmem>>, vector<5x256xf32>
    %c10_206 = arith.constant 10 : index
    %c0_207 = arith.constant 0 : index
    %331 = vector.load %arg23[%c10_206, %c0_207] : memref<16x256xf32, #tpu.memory_space<vmem>>, vector<5x256xf32>
    %c11_208 = arith.constant 11 : index
    %c0_209 = arith.constant 0 : index
    %332 = vector.load %arg23[%c11_208, %c0_209] : memref<16x256xf32, #tpu.memory_space<vmem>>, vector<5x256xf32>
    %333 = tpu.concatenate %329, %330, %331, %332 in 1 : vector<5x256xf32>, vector<5x256xf32>, vector<5x256xf32>, vector<5x256xf32> -> vector<5x1024xf32>
    %334 = tpu.concatenate %328, %333 in 0 : vector<5x1024xf32>, vector<5x1024xf32> -> vector<10x1024xf32>
    %335 = arith.truncf %334 : vector<10x1024xf32> to vector<10x1024xbf16>
    %c0_210 = arith.constant 0 : index
    %c0_211 = arith.constant 0 : index
    %336 = vector.load %arg6[%c0_210, %c0_211] : memref<1024x5xbf16, #tpu.memory_space<vmem>>, vector<1024x5xbf16>
    %cst_212 = arith.constant dense<0.000000e+00> : vector<10x5xf32>
    %337 = tpu.matmul %335, %336, %cst_212 {dimension_numbers = #tpu.dot_dimension_numbers<[1], [0], [0], [1], [0, 0, 1, 1], [], []>} : vector<10x1024xbf16>, vector<1024x5xbf16>, vector<10x5xf32> -> vector<10x5xf32>
    %c0_213 = arith.constant 0 : index
    %c0_214 = arith.constant 0 : index
    %c0_215 = arith.constant 0 : index
    %338 = vector.load %arg19[%c0_213, %c0_214, %c0_215] : memref<1x10x5xf32, #tpu.memory_space<vmem>>, vector<1x10x5xf32>
    %339 = vector.shape_cast %338 : vector<1x10x5xf32> to vector<10x5xf32>
    %340 = vector.shape_cast %337 : vector<10x5xf32> to vector<1x10x5xf32>
    tpu.vector_store %arg19[%c0_213, %c0_214, %c0_215], %340 {strides = array<i32>} : memref<1x10x5xf32, #tpu.memory_space<vmem>>, vector<1x10x5xf32>,
    return
  }
  func.func @transform_0(%arg0: i32) -> (i32, i32, i32) {
    %c0_i32 = arith.constant 0 : i32
    %c0_i32_0 = arith.constant 0 : i32
    %c0_i32_1 = arith.constant 0 : i32
    return %arg0, %c0_i32, %c0_i32_0 : i32, i32, i32
  }
  func.func @transform_1(%arg0: i32) -> (i32, i32) {
    %c0_i32 = arith.constant 0 : i32
    %c0_i32_0 = arith.constant 0 : i32
    %c0_i32_1 = arith.constant 0 : i32
    return %c0_i32, %c0_i32_0 : i32, i32
  }
  func.func @transform_2(%arg0: i32) -> (i32, i32) {
    %c0_i32 = arith.constant 0 : i32
    %c0_i32_0 = arith.constant 0 : i32
    %c0_i32_1 = arith.constant 0 : i32
    return %c0_i32, %c0_i32_0 : i32, i32
  }
  func.func @transform_3(%arg0: i32) -> (i32, i32) {
    %c0_i32 = arith.constant 0 : i32
    %c0_i32_0 = arith.constant 0 : i32
    %c0_i32_1 = arith.constant 0 : i32
    return %c0_i32, %c0_i32_0 : i32, i32
  }
  func.func @transform_4(%arg0: i32) -> (i32, i32) {
    %c0_i32 = arith.constant 0 : i32
    %c0_i32_0 = arith.constant 0 : i32
    %c0_i32_1 = arith.constant 0 : i32
    return %c0_i32, %c0_i32_0 : i32, i32
  }
  func.func @transform_5(%arg0: i32) -> (i32, i32) {
    %c0_i32 = arith.constant 0 : i32
    %c0_i32_0 = arith.constant 0 : i32
    %c0_i32_1 = arith.constant 0 : i32
    return %c0_i32, %c0_i32_0 : i32, i32
  }
  func.func @transform_6(%arg0: i32) -> (i32, i32) {
    %c0_i32 = arith.constant 0 : i32
    %c0_i32_0 = arith.constant 0 : i32
    %c0_i32_1 = arith.constant 0 : i32
    return %c0_i32, %c0_i32_0 : i32, i32
  }
  func.func @transform_7(%arg0: i32) -> (i32, i32) {
    %c0_i32 = arith.constant 0 : i32
    %c0_i32_0 = arith.constant 0 : i32
    %c0_i32_1 = arith.constant 0 : i32
    return %c0_i32, %c0_i32_0 : i32, i32
  }
  func.func @transform_8(%arg0: i32) -> (i32, i32) {
    %c0_i32 = arith.constant 0 : i32
    %c0_i32_0 = arith.constant 0 : i32
    %c0_i32_1 = arith.constant 0 : i32
    return %c0_i32, %c0_i32_0 : i32, i32
  }
  func.func @transform_9(%arg0: i32) -> (i32, i32) {
    %c0_i32 = arith.constant 0 : i32
    %c0_i32_0 = arith.constant 0 : i32
    %c0_i32_1 = arith.constant 0 : i32
    return %c0_i32, %c0_i32_0 : i32, i32
  }
  func.func @transform_10(%arg0: i32) -> (i32, i32) {
    %c0_i32 = arith.constant 0 : i32
    %c0_i32_0 = arith.constant 0 : i32
    %c0_i32_1 = arith.constant 0 : i32
    return %c0_i32, %c0_i32_0 : i32, i32
  }
  func.func @transform_11(%arg0: i32) -> (i32, i32) {
    %c0_i32 = arith.constant 0 : i32
    %c0_i32_0 = arith.constant 0 : i32
    %c0_i32_1 = arith.constant 0 : i32
    return %c0_i32, %c0_i32_0 : i32, i32
  }
  func.func @transform_12(%arg0: i32) -> (i32, i32) {
    %c0_i32 = arith.constant 0 : i32
    %c0_i32_0 = arith.constant 0 : i32
    %c0_i32_1 = arith.constant 0 : i32
    return %c0_i32, %c0_i32_0 : i32, i32
  }
  func.func @transform_13(%arg0: i32) -> (i32, i32) {
    %c0_i32 = arith.constant 0 : i32
    %c0_i32_0 = arith.constant 0 : i32
    %c0_i32_1 = arith.constant 0 : i32
    return %c0_i32, %c0_i32_0 : i32, i32
  }
  func.func @transform_14(%arg0: i32) -> (i32, i32) {
    %c0_i32 = arith.constant 0 : i32
    %c0_i32_0 = arith.constant 0 : i32
    %c0_i32_1 = arith.constant 0 : i32
    return %c0_i32, %c0_i32_0 : i32, i32
  }
  func.func @transform_15(%arg0: i32) -> (i32, i32) {
    %c0_i32 = arith.constant 0 : i32
    %c0_i32_0 = arith.constant 0 : i32
    %c0_i32_1 = arith.constant 0 : i32
    return %c0_i32, %c0_i32_0 : i32, i32
  }
  func.func @transform_16(%arg0: i32) -> (i32, i32) {
    %c0_i32 = arith.constant 0 : i32
    %c0_i32_0 = arith.constant 0 : i32
    %c0_i32_1 = arith.constant 0 : i32
    return %c0_i32, %c0_i32_0 : i32, i32
  }
  func.func @transform_17(%arg0: i32) -> (i32, i32) {
    %c0_i32 = arith.constant 0 : i32
    %c0_i32_0 = arith.constant 0 : i32
    %c0_i32_1 = arith.constant 0 : i32
    return %c0_i32, %c0_i32_0 : i32, i32
  }
  func.func @transform_18(%arg0: i32) -> (i32, i32, i32) {
    %c0_i32 = arith.constant 0 : i32
    %c0_i32_0 = arith.constant 0 : i32
    %c0_i32_1 = arith.constant 0 : i32
    return %arg0, %c0_i32, %c0_i32_0 : i32, i32, i32
  }
}

</mosaic_0001>

<llo_original>
// kernel: tpu_custom_call.1
$region0: #{tpu_custom_call.1}
  #allocation0 [shape = 'u32[]', space=smem, size = 0x4, offset = 0x4, fixed_abs, tag = 'smem constant byte address 0x4 - core index']
  #allocation1 [shape = 'u32[144,128]{1,0:T(1,128)}', space=vmem, size = 0x12000, scoped, tag = 'internal scratch']
  #allocation2 [shape = 'f32[26,72]{1,0:T(8,128)}', space=vmem, size = 0x4000, scoped, tag = 'scratch operand']
  #allocation3 [shape = 'f32[18,80]{1,0:T(8,128)}', space=vmem, size = 0x3000, scoped, tag = 'scratch operand']
  #allocation4 [shape = 'f32[14,96]{1,0:T(8,128)}', space=vmem, size = 0x2000, scoped, tag = 'scratch operand']
  #allocation5 [shape = 'f32[16,256]{1,0:T(8,128)}', space=vmem, size = 0x4000, scoped, tag = 'scratch operand']
  %s0 = inlined_call_operand.vmem [shape: f32[2,40,48], index: 0, kind: input, shape index: {}]
  %s1 = inlined_call_operand.vmem [shape: bf16[192,72], index: 1, kind: input, shape index: {}]
  %s2 = inlined_call_operand.vmem [shape: bf16[288,80], index: 2, kind: input, shape index: {}]
  %s3 = inlined_call_operand.vmem [shape: bf16[320,96], index: 3, kind: input, shape index: {}]
  %s4 = inlined_call_operand.vmem [shape: bf16[384,256], index: 4, kind: input, shape index: {}]
  %s5 = inlined_call_operand.vmem [shape: bf16[1024,5], index: 5, kind: input, shape index: {}]
  %s6 = inlined_call_operand.vmem [shape: f32[1,16], index: 6, kind: input, shape index: {}]
  %s7 = inlined_call_operand.vmem [shape: f32[1,16], index: 7, kind: input, shape index: {}]
  %s8 = inlined_call_operand.vmem [shape: f32[80,16], index: 8, kind: input, shape index: {}]
  %s9 = inlined_call_operand.vmem [shape: f32[16,80], index: 9, kind: input, shape index: {}]
  %s10 = inlined_call_operand.vmem [shape: f32[1,32], index: 10, kind: input, shape index: {}]
  %s11 = inlined_call_operand.vmem [shape: f32[1,32], index: 11, kind: input, shape index: {}]
  %s12 = inlined_call_operand.vmem [shape: f32[96,32], index: 12, kind: input, shape index: {}]
  %s13 = inlined_call_operand.vmem [shape: f32[32,96], index: 13, kind: input, shape index: {}]
  %s14 = inlined_call_operand.vmem [shape: f32[1,64], index: 14, kind: input, shape index: {}]
  %s15 = inlined_call_operand.vmem [shape: f32[1,64], index: 15, kind: input, shape index: {}]
  %s16 = inlined_call_operand.vmem [shape: f32[256,64], index: 16, kind: input, shape index: {}]
  %s17 = inlined_call_operand.vmem [shape: f32[64,256], index: 17, kind: input, shape index: {}]
  %s18 = inlined_call_operand.vmem [shape: f32[2,10,5], index: 18, kind: output, shape index: {}]
  %s19 = sld [smem:[#allocation0]]
  $region105: #{tpu_custom_call.1} parent=0
    _
  %s21 = ssub.s32 1, %s19
  %s22 = scalar_select 0, %s21, %s19
  loop: start=0, step=1, limit=4
  $region2: #{tpu_custom_call.1} parent=0 // loop_pre_header
    _
  $region3: #{tpu_custom_call.1} parent=0 // loop_header
    %s24 = sphi 0, %s28
    %p25 = scmp.ge.s32.totalorder %s24, 4
    %s34 = sphi 0, %s36
    %s37 = sphi 0, %s34
    %s38 = sphi 0, %s37
    %s54 = sphi 0, %s38
    %s58 = sphi 0, %s58
    %s60 = sphi 0, %s58
    %s61 = sphi 0, %s60
    %s75 = sphi 0, %s61
    %s79 = sphi 0, %s79
    %s81 = sphi 0, %s79
    %s82 = sphi 0, %s81
    %s96 = sphi 0, %s82
    %s100 = sphi 0, %s100
    %s102 = sphi 0, %s100
    %s103 = sphi 0, %s102
    %s117 = sphi 0, %s103
    %s121 = sphi 0, %s121
    %s123 = sphi 0, %s121
    %s124 = sphi 0, %s123
    %s138 = sphi 0, %s124
    %s142 = sphi 0, %s142
    %s144 = sphi 0, %s142
    %s145 = sphi 0, %s144
    %s159 = sphi 0, %s145
    %s163 = sphi 0, %s163
    %s165 = sphi 0, %s163
    %s166 = sphi 0, %s165
    %s180 = sphi 0, %s166
    %s184 = sphi 0, %s184
    %s186 = sphi 0, %s184
    %s187 = sphi 0, %s186
    %s201 = sphi 0, %s187
    %s205 = sphi 0, %s205
    %s207 = sphi 0, %s205
    %s208 = sphi 0, %s207
    %s222 = sphi 0, %s208
    %s226 = sphi 0, %s226
    %s228 = sphi 0, %s226
    %s229 = sphi 0, %s228
    %s243 = sphi 0, %s229
    %s247 = sphi 0, %s247
    %s249 = sphi 0, %s247
    %s250 = sphi 0, %s249
    %s264 = sphi 0, %s250
    %s268 = sphi 0, %s268
    %s270 = sphi 0, %s268
    %s271 = sphi 0, %s270
    %s285 = sphi 0, %s271
    %s289 = sphi 0, %s289
    %s291 = sphi 0, %s289
    %s292 = sphi 0, %s291
    %s306 = sphi 0, %s292
    %s310 = sphi 0, %s310
    %s312 = sphi 0, %s310
    %s313 = sphi 0, %s312
    %s327 = sphi 0, %s313
    %s331 = sphi 0, %s331
    %s333 = sphi 0, %s331
    %s334 = sphi 0, %s333
    %s348 = sphi 0, %s334
    %s352 = sphi 0, %s352
    %s354 = sphi 0, %s352
    %s355 = sphi 0, %s354
    %s369 = sphi 0, %s355
    %s373 = sphi 0, %s373
    %s375 = sphi 0, %s373
    %s376 = sphi 0, %s375
    %s390 = sphi 0, %s376
    %s394 = sphi 0, %s394
    %s396 = sphi 0, %s394
    %s397 = sphi 0, %s396
    %s411 = sphi 0, %s397
    %s417 = sphi 0, %s419
    %s420 = sphi 0, %s417
    %s421 = sphi 0, %s420
    %s437 = sphi 0, %s421
  $region4: #{tpu_custom_call.1} parent=0 // loop_header_branch
    %27 = sbr.rel (%p25) target = $region8
  $region5: #{tpu_custom_call.1} parent=0 // loop_body
    %s29 = ssub.s32 %s24, 1
    %s30 = ssub.s32 %s24, 2
    %s31 = sadd.s32 %s24, 1
    %s32 = ssub.s32 %s24, %s31
    %p33 = scmp.eq.s32.totalorder %s32, 0
    %s35 = sadd.s32 %s34, 1
    %s36 = scalar_select %p33, %s34, %s35
    %p39 = pneg %p33
    %p40 = scmp.eq.s32.totalorder %s24, 1
    %p41 = por %p39, %p40
    %p42 = scmp.ne.s32.totalorder %s34, %s37
    %p43 = scmp.eq.s32.totalorder %s24, 0
    %p44 = por %p42, %p43
    %p45 = scmp.ne.s32.totalorder %s34, %s37
    %p46 = scmp.eq.s32.totalorder %s29, 1
    %p47 = por %p45, %p46
    %p48 = scmp.ne.s32.totalorder %s37, %s38
    %p49 = scmp.eq.s32.totalorder %s29, 0
    %p50 = por %p48, %p49
    %p51 = scmp.ne.s32.totalorder %s37, %s38
    %p52 = scmp.eq.s32.totalorder %s30, 1
    %p53 = por %p51, %p52
    %p55 = scmp.ne.s32.totalorder %s38, %s54
    %p56 = scmp.eq.s32.totalorder %s30, 0
    %p57 = por %p55, %p56
    %s59 = sadd.s32 %s58, 1
    %p62 = scmp.eq.s32.totalorder %s24, 1
    %p63 = scmp.ne.s32.totalorder %s58, %s60
    %p64 = scmp.eq.s32.totalorder %s24, 0
    %p65 = por %p63, %p64
    %p66 = scmp.ne.s32.totalorder %s58, %s60
    %p67 = scmp.eq.s32.totalorder %s29, 1
    %p68 = por %p66, %p67
    %p69 = scmp.ne.s32.totalorder %s60, %s61
    %p70 = scmp.eq.s32.totalorder %s29, 0
    %p71 = por %p69, %p70
    %p72 = scmp.ne.s32.totalorder %s60, %s61
    %p73 = scmp.eq.s32.totalorder %s30, 1
    %p74 = por %p72, %p73
    %p76 = scmp.ne.s32.totalorder %s61, %s75
    %p77 = scmp.eq.s32.totalorder %s30, 0
    %p78 = por %p76, %p77
    %s80 = sadd.s32 %s79, 1
    %p83 = scmp.eq.s32.totalorder %s24, 1
    %p84 = scmp.ne.s32.totalorder %s79, %s81
    %p85 = scmp.eq.s32.totalorder %s24, 0
    %p86 = por %p84, %p85
    %p87 = scmp.ne.s32.totalorder %s79, %s81
    %p88 = scmp.eq.s32.totalorder %s29, 1
    %p89 = por %p87, %p88
    %p90 = scmp.ne.s32.totalorder %s81, %s82
    %p91 = scmp.eq.s32.totalorder %s29, 0
    %p92 = por %p90, %p91
    %p93 = scmp.ne.s32.totalorder %s81, %s82
    %p94 = scmp.eq.s32.totalorder %s30, 1
    %p95 = por %p93, %p94
    %p97 = scmp.ne.s32.totalorder %s82, %s96
    %p98 = scmp.eq.s32.totalorder %s30, 0
    %p99 = por %p97, %p98
    %s101 = sadd.s32 %s100, 1
    %p104 = scmp.eq.s32.totalorder %s24, 1
    %p105 = scmp.ne.s32.totalorder %s100, %s102
    %p106 = scmp.eq.s32.totalorder %s24, 0
    %p107 = por %p105, %p106
    %p108 = scmp.ne.s32.totalorder %s100, %s102
    %p109 = scmp.eq.s32.totalorder %s29, 1
    %p110 = por %p108, %p109
    %p111 = scmp.ne.s32.totalorder %s102, %s103
    %p112 = scmp.eq.s32.totalorder %s29, 0
    %p113 = por %p111, %p112
    %p114 = scmp.ne.s32.totalorder %s102, %s103
    %p115 = scmp.eq.s32.totalorder %s30, 1
    %p116 = por %p114, %p115
    %p118 = scmp.ne.s32.totalorder %s103, %s117
    %p119 = scmp.eq.s32.totalorder %s30, 0
    %p120 = por %p118, %p119
    %s122 = sadd.s32 %s121, 1
    %p125 = scmp.eq.s32.totalorder %s24, 1
    %p126 = scmp.ne.s32.totalorder %s121, %s123
    %p127 = scmp.eq.s32.totalorder %s24, 0
    %p128 = por %p126, %p127
    %p129 = scmp.ne.s32.totalorder %s121, %s123
    %p130 = scmp.eq.s32.totalorder %s29, 1
    %p131 = por %p129, %p130
    %p132 = scmp.ne.s32.totalorder %s123, %s124
    %p133 = scmp.eq.s32.totalorder %s29, 0
    %p134 = por %p132, %p133
    %p135 = scmp.ne.s32.totalorder %s123, %s124
    %p136 = scmp.eq.s32.totalorder %s30, 1
    %p137 = por %p135, %p136
    %p139 = scmp.ne.s32.totalorder %s124, %s138
    %p140 = scmp.eq.s32.totalorder %s30, 0
    %p141 = por %p139, %p140
    %s143 = sadd.s32 %s142, 1
    %p146 = scmp.eq.s32.totalorder %s24, 1
    %p147 = scmp.ne.s32.totalorder %s142, %s144
    %p148 = scmp.eq.s32.totalorder %s24, 0
    %p149 = por %p147, %p148
    %p150 = scmp.ne.s32.totalorder %s142, %s144
    %p151 = scmp.eq.s32.totalorder %s29, 1
    %p152 = por %p150, %p151
    %p153 = scmp.ne.s32.totalorder %s144, %s145
    %p154 = scmp.eq.s32.totalorder %s29, 0
    %p155 = por %p153, %p154
    %p156 = scmp.ne.s32.totalorder %s144, %s145
    %p157 = scmp.eq.s32.totalorder %s30, 1
    %p158 = por %p156, %p157
    %p160 = scmp.ne.s32.totalorder %s145, %s159
    %p161 = scmp.eq.s32.totalorder %s30, 0
    %p162 = por %p160, %p161
    %s164 = sadd.s32 %s163, 1
    %p167 = scmp.eq.s32.totalorder %s24, 1
    %p168 = scmp.ne.s32.totalorder %s163, %s165
    %p169 = scmp.eq.s32.totalorder %s24, 0
    %p170 = por %p168, %p169
    %p171 = scmp.ne.s32.totalorder %s163, %s165
    %p172 = scmp.eq.s32.totalorder %s29, 1
    %p173 = por %p171, %p172
    %p174 = scmp.ne.s32.totalorder %s165, %s166
    %p175 = scmp.eq.s32.totalorder %s29, 0
    %p176 = por %p174, %p175
    %p177 = scmp.ne.s32.totalorder %s165, %s166
    %p178 = scmp.eq.s32.totalorder %s30, 1
    %p179 = por %p177, %p178
    %p181 = scmp.ne.s32.totalorder %s166, %s180
    %p182 = scmp.eq.s32.totalorder %s30, 0
    %p183 = por %p181, %p182
    %s185 = sadd.s32 %s184, 1
    %p188 = scmp.eq.s32.totalorder %s24, 1
    %p189 = scmp.ne.s32.totalorder %s184, %s186
    %p190 = scmp.eq.s32.totalorder %s24, 0
    %p191 = por %p189, %p190
    %p192 = scmp.ne.s32.totalorder %s184, %s186
    %p193 = scmp.eq.s32.totalorder %s29, 1
    %p194 = por %p192, %p193
    %p195 = scmp.ne.s32.totalorder %s186, %s187
    %p196 = scmp.eq.s32.totalorder %s29, 0
    %p197 = por %p195, %p196
    %p198 = scmp.ne.s32.totalorder %s186, %s187
    %p199 = scmp.eq.s32.totalorder %s30, 1
    %p200 = por %p198, %p199
    %p202 = scmp.ne.s32.totalorder %s187, %s201
    %p203 = scmp.eq.s32.totalorder %s30, 0
    %p204 = por %p202, %p203
    %s206 = sadd.s32 %s205, 1
    %p209 = scmp.eq.s32.totalorder %s24, 1
    %p210 = scmp.ne.s32.totalorder %s205, %s207
    %p211 = scmp.eq.s32.totalorder %s24, 0
    %p212 = por %p210, %p211
    %p213 = scmp.ne.s32.totalorder %s205, %s207
    %p214 = scmp.eq.s32.totalorder %s29, 1
    %p215 = por %p213, %p214
    %p216 = scmp.ne.s32.totalorder %s207, %s208
    %p217 = scmp.eq.s32.totalorder %s29, 0
    %p218 = por %p216, %p217
    %p219 = scmp.ne.s32.totalorder %s207, %s208
    %p220 = scmp.eq.s32.totalorder %s30, 1
    %p221 = por %p219, %p220
    %p223 = scmp.ne.s32.totalorder %s208, %s222
    %p224 = scmp.eq.s32.totalorder %s30, 0
    %p225 = por %p223, %p224
    %s227 = sadd.s32 %s226, 1
    %p230 = scmp.eq.s32.totalorder %s24, 1
    %p231 = scmp.ne.s32.totalorder %s226, %s228
    %p232 = scmp.eq.s32.totalorder %s24, 0
    %p233 = por %p231, %p232
    %p234 = scmp.ne.s32.totalorder %s226, %s228
    %p235 = scmp.eq.s32.totalorder %s29, 1
    %p236 = por %p234, %p235
    %p237 = scmp.ne.s32.totalorder %s228, %s229
    %p238 = scmp.eq.s32.totalorder %s29, 0
    %p239 = por %p237, %p238
    %p240 = scmp.ne.s32.totalorder %s228, %s229
    %p241 = scmp.eq.s32.totalorder %s30, 1
    %p242 = por %p240, %p241
    %p244 = scmp.ne.s32.totalorder %s229, %s243
    %p245 = scmp.eq.s32.totalorder %s30, 0
    %p246 = por %p244, %p245
    %s248 = sadd.s32 %s247, 1
    %p251 = scmp.eq.s32.totalorder %s24, 1
    %p252 = scmp.ne.s32.totalorder %s247, %s249
    %p253 = scmp.eq.s32.totalorder %s24, 0
    %p254 = por %p252, %p253
    %p255 = scmp.ne.s32.totalorder %s247, %s249
    %p256 = scmp.eq.s32.totalorder %s29, 1
    %p257 = por %p255, %p256
    %p258 = scmp.ne.s32.totalorder %s249, %s250
    %p259 = scmp.eq.s32.totalorder %s29, 0
    %p260 = por %p258, %p259
    %p261 = scmp.ne.s32.totalorder %s249, %s250
    %p262 = scmp.eq.s32.totalorder %s30, 1
    %p263 = por %p261, %p262
    %p265 = scmp.ne.s32.totalorder %s250, %s264
    %p266 = scmp.eq.s32.totalorder %s30, 0
    %p267 = por %p265, %p266
    %s269 = sadd.s32 %s268, 1
    %p272 = scmp.eq.s32.totalorder %s24, 1
    %p273 = scmp.ne.s32.totalorder %s268, %s270
    %p274 = scmp.eq.s32.totalorder %s24, 0
    %p275 = por %p273, %p274
    %p276 = scmp.ne.s32.totalorder %s268, %s270
    %p277 = scmp.eq.s32.totalorder %s29, 1
    %p278 = por %p276, %p277
    %p279 = scmp.ne.s32.totalorder %s270, %s271
    %p280 = scmp.eq.s32.totalorder %s29, 0
    %p281 = por %p279, %p280
    %p282 = scmp.ne.s32.totalorder %s270, %s271
    %p283 = scmp.eq.s32.totalorder %s30, 1
    %p284 = por %p282, %p283
    %p286 = scmp.ne.s32.totalorder %s271, %s285
    %p287 = scmp.eq.s32.totalorder %s30, 0
    %p288 = por %p286, %p287
    %s290 = sadd.s32 %s289, 1
    %p293 = scmp.eq.s32.totalorder %s24, 1
    %p294 = scmp.ne.s32.totalorder %s289, %s291
    %p295 = scmp.eq.s32.totalorder %s24, 0
    %p296 = por %p294, %p295
    %p297 = scmp.ne.s32.totalorder %s289, %s291
    %p298 = scmp.eq.s32.totalorder %s29, 1
    %p299 = por %p297, %p298
    %p300 = scmp.ne.s32.totalorder %s291, %s292
    %p301 = scmp.eq.s32.totalorder %s29, 0
    %p302 = por %p300, %p301
    %p303 = scmp.ne.s32.totalorder %s291, %s292
    %p304 = scmp.eq.s32.totalorder %s30, 1
    %p305 = por %p303, %p304
    %p307 = scmp.ne.s32.totalorder %s292, %s306
    %p308 = scmp.eq.s32.totalorder %s30, 0
    %p309 = por %p307, %p308
    %s311 = sadd.s32 %s310, 1
    %p314 = scmp.eq.s32.totalorder %s24, 1
    %p315 = scmp.ne.s32.totalorder %s310, %s312
    %p316 = scmp.eq.s32.totalorder %s24, 0
    %p317 = por %p315, %p316
    %p318 = scmp.ne.s32.totalorder %s310, %s312
    %p319 = scmp.eq.s32.totalorder %s29, 1
    %p320 = por %p318, %p319
    %p321 = scmp.ne.s32.totalorder %s312, %s313
    %p322 = scmp.eq.s32.totalorder %s29, 0
    %p323 = por %p321, %p322
    %p324 = scmp.ne.s32.totalorder %s312, %s313
    %p325 = scmp.eq.s32.totalorder %s30, 1
    %p326 = por %p324, %p325
    %p328 = scmp.ne.s32.totalorder %s313, %s327
    %p329 = scmp.eq.s32.totalorder %s30, 0
    %p330 = por %p328, %p329
    %s332 = sadd.s32 %s331, 1
    %p335 = scmp.eq.s32.totalorder %s24, 1
    %p336 = scmp.ne.s32.totalorder %s331, %s333
    %p337 = scmp.eq.s32.totalorder %s24, 0
    %p338 = por %p336, %p337
    %p339 = scmp.ne.s32.totalorder %s331, %s333
    %p340 = scmp.eq.s32.totalorder %s29, 1
    %p341 = por %p339, %p340
    %p342 = scmp.ne.s32.totalorder %s333, %s334
    %p343 = scmp.eq.s32.totalorder %s29, 0
    %p344 = por %p342, %p343
    %p345 = scmp.ne.s32.totalorder %s333, %s334
    %p346 = scmp.eq.s32.totalorder %s30, 1
    %p347 = por %p345, %p346
    %p349 = scmp.ne.s32.totalorder %s334, %s348
    %p350 = scmp.eq.s32.totalorder %s30, 0
    %p351 = por %p349, %p350
    %s353 = sadd.s32 %s352, 1
    %p356 = scmp.eq.s32.totalorder %s24, 1
    %p357 = scmp.ne.s32.totalorder %s352, %s354
    %p358 = scmp.eq.s32.totalorder %s24, 0
    %p359 = por %p357, %p358
    %p360 = scmp.ne.s32.totalorder %s352, %s354
    %p361 = scmp.eq.s32.totalorder %s29, 1
    %p362 = por %p360, %p361
    %p363 = scmp.ne.s32.totalorder %s354, %s355
    %p364 = scmp.eq.s32.totalorder %s29, 0
    %p365 = por %p363, %p364
    %p366 = scmp.ne.s32.totalorder %s354, %s355
    %p367 = scmp.eq.s32.totalorder %s30, 1
    %p368 = por %p366, %p367
    %p370 = scmp.ne.s32.totalorder %s355, %s369
    %p371 = scmp.eq.s32.totalorder %s30, 0
    %p372 = por %p370, %p371
    %s374 = sadd.s32 %s373, 1
    %p377 = scmp.eq.s32.totalorder %s24, 1
    %p378 = scmp.ne.s32.totalorder %s373, %s375
    %p379 = scmp.eq.s32.totalorder %s24, 0
    %p380 = por %p378, %p379
    %p381 = scmp.ne.s32.totalorder %s373, %s375
    %p382 = scmp.eq.s32.totalorder %s29, 1
    %p383 = por %p381, %p382
    %p384 = scmp.ne.s32.totalorder %s375, %s376
    %p385 = scmp.eq.s32.totalorder %s29, 0
    %p386 = por %p384, %p385
    %p387 = scmp.ne.s32.totalorder %s375, %s376
    %p388 = scmp.eq.s32.totalorder %s30, 1
    %p389 = por %p387, %p388
    %p391 = scmp.ne.s32.totalorder %s376, %s390
    %p392 = scmp.eq.s32.totalorder %s30, 0
    %p393 = por %p391, %p392
    %s395 = sadd.s32 %s394, 1
    %p398 = scmp.eq.s32.totalorder %s24, 1
    %p399 = scmp.ne.s32.totalorder %s394, %s396
    %p400 = scmp.eq.s32.totalorder %s24, 0
    %p401 = por %p399, %p400
    %p402 = scmp.ne.s32.totalorder %s394, %s396
    %p403 = scmp.eq.s32.totalorder %s29, 1
    %p404 = por %p402, %p403
    %p405 = scmp.ne.s32.totalorder %s396, %s397
    %p406 = scmp.eq.s32.totalorder %s29, 0
    %p407 = por %p405, %p406
    %p408 = scmp.ne.s32.totalorder %s396, %s397
    %p409 = scmp.eq.s32.totalorder %s30, 1
    %p410 = por %p408, %p409
    %p412 = scmp.ne.s32.totalorder %s397, %s411
    %p413 = scmp.eq.s32.totalorder %s30, 0
    %p414 = por %p412, %p413
    %s415 = ssub.s32 %s24, %s31
    %p416 = scmp.eq.s32.totalorder %s415, 0
    %s418 = sadd.s32 %s417, 1
    %s419 = scalar_select %p416, %s417, %s418
    %p422 = pneg %p416
    %p423 = scmp.eq.s32.totalorder %s24, 1
    %p424 = por %p422, %p423
    %p425 = scmp.ne.s32.totalorder %s417, %s420
    %p426 = scmp.eq.s32.totalorder %s24, 0
    %p427 = por %p425, %p426
    %p428 = scmp.ne.s32.totalorder %s417, %s420
    %p429 = scmp.eq.s32.totalorder %s29, 1
    %p430 = por %p428, %p429
    %p431 = scmp.ne.s32.totalorder %s420, %s421
    %p432 = scmp.eq.s32.totalorder %s29, 0
    %p433 = por %p431, %p432
    %p434 = scmp.ne.s32.totalorder %s420, %s421
    %p435 = scmp.eq.s32.totalorder %s30, 1
    %p436 = por %p434, %p435
    %p438 = scmp.ne.s32.totalorder %s421, %s437
    %p439 = scmp.eq.s32.totalorder %s30, 0
    %p440 = por %p438, %p439
    %p441 = scmp.le.s32.totalorder 1, %s24
    %p442 = scmp.lt.s32.totalorder %s24, 3
    %p443 = pnand %p441, %p442
    %p444 = pneg %p443
    // Predicated region
    $region9: #{tpu_custom_call.1} parent=5 // pred_check
      _
    $region10: #{tpu_custom_call.1} parent=5 // pred_check_branch
      %446 = sbr.rel (%p443) target = $region12
    $region11: #{tpu_custom_call.1} parent=5 // pred_region
      %s447 = ssub.s32 %s24, 1
      // Predicated region
      $region13: #{tpu_custom_call.1} parent=11 // pred_check
        %p448 = pneg %p71
      $region14: #{tpu_custom_call.1} parent=11 // pred_check_branch
        %450 = sbr.rel (%p448) target = $region16
      $region15: #{tpu_custom_call.1} parent=11 // pred_region
        _
      $region16: #{tpu_custom_call.1} parent=11 // pred_fallthru
        _
      // Predicated region
      $region17: #{tpu_custom_call.1} parent=11 // pred_check
        %p451 = pneg %p92
      $region18: #{tpu_custom_call.1} parent=11 // pred_check_branch
        %453 = sbr.rel (%p451) target = $region20
      $region19: #{tpu_custom_call.1} parent=11 // pred_region
        _
      $region20: #{tpu_custom_call.1} parent=11 // pred_fallthru
        _
      // Predicated region
      $region21: #{tpu_custom_call.1} parent=11 // pred_check
        %p454 = pneg %p113
      $region22: #{tpu_custom_call.1} parent=11 // pred_check_branch
        %456 = sbr.rel (%p454) target = $region24
      $region23: #{tpu_custom_call.1} parent=11 // pred_region
        _
      $region24: #{tpu_custom_call.1} parent=11 // pred_fallthru
        _
      // Predicated region
      $region25: #{tpu_custom_call.1} parent=11 // pred_check
        %p457 = pneg %p134
      $region26: #{tpu_custom_call.1} parent=11 // pred_check_branch
        %459 = sbr.rel (%p457) target = $region28
      $region27: #{tpu_custom_call.1} parent=11 // pred_region
        _
      $region28: #{tpu_custom_call.1} parent=11 // pred_fallthru
        _
      // Predicated region
      $region29: #{tpu_custom_call.1} parent=11 // pred_check
        %p460 = pneg %p155
      $region30: #{tpu_custom_call.1} parent=11 // pred_check_branch
        %462 = sbr.rel (%p460) target = $region32
      $region31: #{tpu_custom_call.1} parent=11 // pred_region
        _
      $region32: #{tpu_custom_call.1} parent=11 // pred_fallthru
        _
      // Predicated region
      $region33: #{tpu_custom_call.1} parent=11 // pred_check
        %p463 = pneg %p176
      $region34: #{tpu_custom_call.1} parent=11 // pred_check_branch
        %465 = sbr.rel (%p463) target = $region36
      $region35: #{tpu_custom_call.1} parent=11 // pred_region
        _
      $region36: #{tpu_custom_call.1} parent=11 // pred_fallthru
        _
      // Predicated region
      $region37: #{tpu_custom_call.1} parent=11 // pred_check
        %p466 = pneg %p197
      $region38: #{tpu_custom_call.1} parent=11 // pred_check_branch
        %468 = sbr.rel (%p466) target = $region40
      $region39: #{tpu_custom_call.1} parent=11 // pred_region
        _
      $region40: #{tpu_custom_call.1} parent=11 // pred_fallthru
        _
      // Predicated region
      $region41: #{tpu_custom_call.1} parent=11 // pred_check
        %p469 = pneg %p218
      $region42: #{tpu_custom_call.1} parent=11 // pred_check_branch
        %471 = sbr.rel (%p469) target = $region44
      $region43: #{tpu_custom_call.1} parent=11 // pred_region
        _
      $region44: #{tpu_custom_call.1} parent=11 // pred_fallthru
        _
      // Predicated region
      $region45: #{tpu_custom_call.1} parent=11 // pred_check
        %p472 = pneg %p239
      $region46: #{tpu_custom_call.1} parent=11 // pred_check_branch
        %474 = sbr.rel (%p472) target = $region48
      $region47: #{tpu_custom_call.1} parent=11 // pred_region
        _
      $region48: #{tpu_custom_call.1} parent=11 // pred_fallthru
        _
      // Predicated region
      $region49: #{tpu_custom_call.1} parent=11 // pred_check
        %p475 = pneg %p260
      $region50: #{tpu_custom_call.1} parent=11 // pred_check_branch
        %477 = sbr.rel (%p475) target = $region52
      $region51: #{tpu_custom_call.1} parent=11 // pred_region
        _
      $region52: #{tpu_custom_call.1} parent=11 // pred_fallthru
        _
      // Predicated region
      $region53: #{tpu_custom_call.1} parent=11 // pred_check
        %p478 = pneg %p281
      $region54: #{tpu_custom_call.1} parent=11 // pred_check_branch
        %480 = sbr.rel (%p478) target = $region56
      $region55: #{tpu_custom_call.1} parent=11 // pred_region
        _
      $region56: #{tpu_custom_call.1} parent=11 // pred_fallthru
        _
      // Predicated region
      $region57: #{tpu_custom_call.1} parent=11 // pred_check
        %p481 = pneg %p302
      $region58: #{tpu_custom_call.1} parent=11 // pred_check_branch
        %483 = sbr.rel (%p481) target = $region60
      $region59: #{tpu_custom_call.1} parent=11 // pred_region
        _
      $region60: #{tpu_custom_call.1} parent=11 // pred_fallthru
        _
      // Predicated region
      $region61: #{tpu_custom_call.1} parent=11 // pred_check
        %p484 = pneg %p323
      $region62: #{tpu_custom_call.1} parent=11 // pred_check_branch
        %486 = sbr.rel (%p484) target = $region64
      $region63: #{tpu_custom_call.1} parent=11 // pred_region
        _
      $region64: #{tpu_custom_call.1} parent=11 // pred_fallthru
        _
      // Predicated region
      $region65: #{tpu_custom_call.1} parent=11 // pred_check
        %p487 = pneg %p344
      $region66: #{tpu_custom_call.1} parent=11 // pred_check_branch
        %489 = sbr.rel (%p487) target = $region68
      $region67: #{tpu_custom_call.1} parent=11 // pred_region
        _
      $region68: #{tpu_custom_call.1} parent=11 // pred_fallthru
        _
      // Predicated region
      $region69: #{tpu_custom_call.1} parent=11 // pred_check
        %p490 = pneg %p365
      $region70: #{tpu_custom_call.1} parent=11 // pred_check_branch
        %492 = sbr.rel (%p490) target = $region72
      $region71: #{tpu_custom_call.1} parent=11 // pred_region
        _
      $region72: #{tpu_custom_call.1} parent=11 // pred_fallthru
        _
      // Predicated region
      $region73: #{tpu_custom_call.1} parent=11 // pred_check
        %p493 = pneg %p386
      $region74: #{tpu_custom_call.1} parent=11 // pred_check_branch
        %495 = sbr.rel (%p493) target = $region76
      $region75: #{tpu_custom_call.1} parent=11 // pred_region
        _
      $region76: #{tpu_custom_call.1} parent=11 // pred_fallthru
        _
      // Predicated region
      $region77: #{tpu_custom_call.1} parent=11 // pred_check
        %p496 = pneg %p407
      $region78: #{tpu_custom_call.1} parent=11 // pred_check_branch
        %498 = sbr.rel (%p496) target = $region80
      $region79: #{tpu_custom_call.1} parent=11 // pred_region
        _
      $region80: #{tpu_custom_call.1} parent=11 // pred_fallthru
        _
    $region12: #{tpu_custom_call.1} parent=5 // pred_fallthru
      _
    %p499 = scmp.lt.s32.totalorder %s24, 2
    // Predicated region
    $region81: #{tpu_custom_call.1} parent=5 // pred_check
      %p500 = pneg %p499
    $region82: #{tpu_custom_call.1} parent=5 // pred_check_branch
      %502 = sbr.rel (%p500) target = $region84
    $region83: #{tpu_custom_call.1} parent=5 // pred_region
      // Predicated region
      $region85: #{tpu_custom_call.1} parent=83 // pred_check
        %p503 = pneg %p44
      $region86: #{tpu_custom_call.1} parent=83 // pred_check_branch
        %505 = sbr.rel (%p503) target = $region88
      $region87: #{tpu_custom_call.1} parent=83 // pred_region
        %p506 = scmp.lt.s32.totalorder %s24, 1
        %s507 = scalar_select %p506, %s24, 1
        %s508 = smul.addr %s507, 5
        %s509 = smul.addr %s508, 8
        %s510 = scalar_lea.vmem %s0, %s509
      $region88: #{tpu_custom_call.1} parent=83 // pred_fallthru
        _
    $region84: #{tpu_custom_call.1} parent=5 // pred_fallthru
      _
    %p511 = scmp.le.s32.totalorder 1, %s24
    %p512 = scmp.lt.s32.totalorder %s24, 3
    %p513 = pnand %p511, %p512
    %p514 = pneg %p513
    // Predicated region
    $region89: #{tpu_custom_call.1} parent=5 // pred_check
      _
    $region90: #{tpu_custom_call.1} parent=5 // pred_check_branch
      %516 = sbr.rel (%p513) target = $region92
    $region91: #{tpu_custom_call.1} parent=5 // pred_region
      %s517 = ssub.s32 %s24, 1
      %p518 = scmp.lt.s32.totalorder %s29, 1
      %s519 = scalar_select %p518, %s29, 1
      %s520 = smul.addr %s519, 5
      %s521 = smul.addr %s520, 8
      %s522 = scalar_lea.vmem %s0, %s521
      %p523 = pneg %p50
      %p524 = pneg %p47
      %p525 = pneg %p71
      %p526 = pneg %p68
      %p527 = pneg %p92
      %p528 = pneg %p89
      %p529 = pneg %p113
      %p530 = pneg %p110
      %p531 = pneg %p134
      %p532 = pneg %p131
      %p533 = pneg %p155
      %p534 = pneg %p152
      %p535 = pneg %p176
      %p536 = pneg %p173
      %p537 = pneg %p197
      %p538 = pneg %p194
      %p539 = pneg %p218
      %p540 = pneg %p215
      %p541 = pneg %p239
      %p542 = pneg %p236
      %p543 = pneg %p260
      %p544 = pneg %p257
      %p545 = pneg %p281
      %p546 = pneg %p278
      %p547 = pneg %p302
      %p548 = pneg %p299
      %p549 = pneg %p323
      %p550 = pneg %p320
      %p551 = pneg %p344
      %p552 = pneg %p341
      %p553 = pneg %p365
      %p554 = pneg %p362
      %p555 = pneg %p386
      %p556 = pneg %p383
      %p557 = pneg %p407
      %p558 = pneg %p404
      %p559 = pneg %p433
      %p560 = pneg %p430
      %p561 = scmp.lt.s32.totalorder %s29, 1
      %s562 = scalar_select %p561, %s29, 1
      %s563 = smul.addr %s562, 2
      %s564 = smul.addr %s563, 8
      %s565 = scalar_lea.vmem %s18, %s564
      %p566 = scmp.lt.s32.totalorder %s29, 1
      %s567 = scalar_select %p566, %s29, 1
      %s568 = smul.addr %s567, 5
      %s569 = smul.addr %s568, 8
      %s570 = scalar_lea.vmem %s0, %s569
      %p571 = scmp.lt.s32.totalorder %s29, 1
      %s572 = scalar_select %p571, %s29, 1
      %s573 = smul.addr %s572, 2
      %s574 = smul.addr %s573, 8
      %s575 = scalar_lea.vmem %s18, %s574
      %vm577 = vcmask 582656
      %578 = vst.msk [vmem:[#allocation2] sm:$0x3] %vm577, 0.0
      %579 = vst.msk [vmem:[#allocation2 + $0xb] sm:$0x3] %vm577, 0.0
      %580 = vst.msk [vmem:[#allocation2 + $0xd] sm:$0x3] %vm577, 0.0
      %581 = vst.msk [vmem:[#allocation2 + $0x18] sm:$0x3] %vm577, 0.0
      %vm582 = vcmask 648192
      %583 = vst.msk [vmem:[#allocation3] sm:$0x3] %vm582, 0.0
      %584 = vst.msk [vmem:[#allocation3 + $0x7] sm:$0x3] %vm582, 0.0
      %585 = vst.msk [vmem:[#allocation3 + $0x9] sm:$0x3] %vm582, 0.0
      %586 = vst.msk [vmem:[#allocation3 + $0x10] sm:$0x3] %vm582, 0.0
      %vm587 = vcmask 779264
      %588 = vst.msk [vmem:[#allocation4] sm:$0x3] %vm587, 0.0
      %589 = vst.msk [vmem:[#allocation4 + $0x5] sm:$0x3] %vm587, 0.0
      %590 = vst.msk [vmem:[#allocation4 + $0x7] sm:$0x3] %vm587, 0.0
      %591 = vst.msk [vmem:[#allocation4 + $0xc] sm:$0x3] %vm587, 0.0
      %592 = vst [vmem:[#allocation5] sm:$0x3] 0.0
      %593 = vst [vmem:[#allocation5 + $0x8] sm:$0x3] 0.0
      %594 = vst [vmem:[#allocation5] sm:$0xc0] 0.0
      %595 = vst [vmem:[#allocation5 + $0x8] sm:$0xc0] 0.0
      %596 = vst [vmem:[#allocation5 + $0x10] sm:$0x3] 0.0
      %597 = vst [vmem:[#allocation5 + $0x18] sm:$0x3] 0.0
      %598 = vst [vmem:[#allocation5 + $0x10] sm:$0xc0] 0.0
      %599 = vst [vmem:[#allocation5 + $0x18] sm:$0xc0] 0.0
      %v600 = vld [vmem:[%s570] ss:$2 sm:$0xff]
      %s601 = scalar_lea.vmem %s570, 16
      %v602 = vld [vmem:[%s601] ss:$2 sm:$0x1]
      %s603 = scalar_lea.vmem %s570, 1
      %v604 = vld [vmem:[%s603] ss:$2 sm:$0xff]
      %s605 = scalar_lea.vmem %s570, 17
      %v606 = vld [vmem:[%s605] ss:$2 sm:$0x1]
      %s607 = scalar_lea.vmem %s570, 2
      %v608 = vld [vmem:[%s607] ss:$2 sm:$0xff]
      %s609 = scalar_lea.vmem %s570, 18
      %v610 = vld [vmem:[%s609] ss:$2 sm:$0x1]
      %s611 = scalar_lea.vmem %s570, 3
      %v612 = vld [vmem:[%s611] ss:$2 sm:$0xff]
      %s613 = scalar_lea.vmem %s570, 19
      %v614 = vld [vmem:[%s613] ss:$2 sm:$0x1]
      %617 = vrot.lane.b32.xlu0 %v604, 48
      %v618 = vpop.permute.xlu0 %617
      %619 = vrot.lane.b32.xlu0 %v606, 48
      %v620 = vpop.permute.xlu0 %619
      %625 = vrot.lane.b32.xlu0 %v608, 96
      %v626 = vpop.permute.xlu0 %625
      %627 = vrot.lane.b32.xlu0 %v610, 96
      %v628 = vpop.permute.xlu0 %627
      %633 = vrot.lane.b32.xlu0 %v612, 16
      %v634 = vpop.permute.xlu0 %633
      %635 = vrot.lane.b32.xlu0 %v614, 16
      %v636 = vpop.permute.xlu0 %635
      %vm639 = vcmask 392192
      %v640 = vsel %vm639, %v600, %v618
      %v641 = vsel %vm639, %v602, %v620
      %vm642 = vcmask 785408
      %v643 = vsel %vm642, %v640, %v626
      %v644 = vsel %vm642, %v641, %v628
      %vm645 = vcmask 130048
      %v646 = vsel %vm645, %v626, %v634
      %v647 = vsel %vm645, %v628, %v636
      %s648 = scalar_lea.vmem %s570, 20
      %v649 = vld [vmem:[%s648] ss:$2 sm:$0xff]
      %s650 = scalar_lea.vmem %s570, 36
      %v651 = vld [vmem:[%s650] ss:$2 sm:$0x1]
      %s652 = scalar_lea.vmem %s570, 21
      %v653 = vld [vmem:[%s652] ss:$2 sm:$0xff]
      %s654 = scalar_lea.vmem %s570, 37
      %v655 = vld [vmem:[%s654] ss:$2 sm:$0x1]
      %s656 = scalar_lea.vmem %s570, 22
      %v657 = vld [vmem:[%s656] ss:$2 sm:$0xff]
      %s658 = scalar_lea.vmem %s570, 38
      %v659 = vld [vmem:[%s658] ss:$2 sm:$0x1]
      %s660 = scalar_lea.vmem %s570, 23
      %v661 = vld [vmem:[%s660] ss:$2 sm:$0xff]
      %s662 = scalar_lea.vmem %s570, 39
      %v663 = vld [vmem:[%s662] ss:$2 sm:$0x1]
      %666 = vrot.lane.b32.xlu0 %v653, 48
      %v667 = vpop.permute.xlu0 %666
      %668 = vrot.lane.b32.xlu0 %v655, 48
      %v669 = vpop.permute.xlu0 %668
      %674 = vrot.lane.b32.xlu0 %v657, 96
      %v675 = vpop.permute.xlu0 %674
      %676 = vrot.lane.b32.xlu0 %v659, 96
      %v677 = vpop.permute.xlu0 %676
      %682 = vrot.lane.b32.xlu0 %v661, 16
      %v683 = vpop.permute.xlu0 %682
      %684 = vrot.lane.b32.xlu0 %v663, 16
      %v685 = vpop.permute.xlu0 %684
      %v688 = vsel %vm639, %v649, %v667
      %v689 = vsel %vm639, %v651, %v669
      %v690 = vsel %vm642, %v688, %v675
      %v691 = vsel %vm642, %v689, %v677
      %v692 = vsel %vm645, %v675, %v683
      %v693 = vsel %vm645, %v677, %v685
      %vm698 = vcmask 1040384
      %v699 = vrot.slane %v690, 7
      %v700 = vrot.slane %v692, 7
      %v701 = vrot.slane %v691, 7
      %v702 = vsel %vm698, %v699, %v701
      %v703 = vrot.slane %v693, 7
      %v704 = vsel %vm698, %v700, %v703
      %v709 = vsel %vm698, %v644, %v699
      %v710 = vsel %vm698, %v647, %v700
      %v711 = vpack.c.bf16 %v709, %v643
      %v712 = vpack.c.bf16 %v710, %v646
      %v713 = vpack.c.bf16 %v702, %v702
      %v714 = vpack.c.bf16 %v704, %v704
      %v715 = vld [vmem:[%s1] sm:$0xf]
      %v716 = vld [vmem:[%s1 + $0x4] sm:$0xf]
      %v717 = vld [vmem:[%s1 + $0x8] sm:$0xf]
      %v718 = vld [vmem:[%s1 + $0xc] sm:$0xf]
      %v719 = vld [vmem:[%s1 + $0x10] sm:$0xf]
      %v720 = vld [vmem:[%s1 + $0x14] sm:$0xf]
      %v721 = vld [vmem:[%s1 + $0x18] sm:$0xf]
      %v722 = vld [vmem:[%s1 + $0x1c] sm:$0xf]
      %v723 = vld [vmem:[%s1 + $0x20] sm:$0xf]
      %v724 = vld [vmem:[%s1 + $0x24] sm:$0xf]
      %v725 = vld [vmem:[%s1 + $0x28] sm:$0xf]
      %v726 = vld [vmem:[%s1 + $0x2c] sm:$0xf]
      %v727 = vld [vmem:[%s1 + $0x30] sm:$0xf]
      %v728 = vld [vmem:[%s1 + $0x34] sm:$0xf]
      %v729 = vld [vmem:[%s1 + $0x38] sm:$0xf]
      %v730 = vld [vmem:[%s1 + $0x3c] sm:$0xf]
      %v731 = vld [vmem:[%s1 + $0x40] sm:$0xf]
      %v732 = vld [vmem:[%s1 + $0x44] sm:$0xf]
      %v733 = vld [vmem:[%s1 + $0x48] sm:$0xf]
      %v734 = vld [vmem:[%s1 + $0x4c] sm:$0xf]
      %v735 = vld [vmem:[%s1 + $0x50] sm:$0xf]
      %v736 = vld [vmem:[%s1 + $0x54] sm:$0xf]
      %v737 = vld [vmem:[%s1 + $0x58] sm:$0xf]
      %v738 = vld [vmem:[%s1 + $0x5c] sm:$0xf]
      %v763 = vunpack.c.l.b16 %v715
      %v764 = vunpack.c.l.b16 %v716
      %v765 = vunpack.c.l.b16 %v717
      %v766 = vunpack.c.l.b16 %v718
      %v767 = vunpack.c.l.b16 %v719
      %v768 = vunpack.c.l.b16 %v720
      %v769 = vunpack.c.l.b16 %v721
      %v770 = vunpack.c.l.b16 %v722
      %v771 = vunpack.c.l.b16 %v723
      %v772 = vunpack.c.l.b16 %v724
      %v773 = vunpack.c.l.b16 %v725
      %v774 = vunpack.c.l.b16 %v726
      %v775 = vunpack.c.l.b16 %v727
      %v776 = vunpack.c.l.b16 %v728
      %v777 = vunpack.c.l.b16 %v729
      %v778 = vunpack.c.l.b16 %v730
      %v779 = vunpack.c.l.b16 %v731
      %v780 = vunpack.c.l.b16 %v732
      %v781 = vunpack.c.l.b16 %v733
      %v782 = vunpack.c.l.b16 %v734
      %v783 = vunpack.c.l.b16 %v735
      %v784 = vunpack.c.l.b16 %v736
      %v785 = vunpack.c.l.b16 %v737
      %v786 = vunpack.c.l.b16 %v738
      %v787 = vpack.c.b16 %v764, %v763
      %v788 = vpack.c.b16 %v766, %v765
      %v789 = vpack.c.b16 %v768, %v767
      %v790 = vpack.c.b16 %v770, %v769
      %v791 = vpack.c.b16 %v772, %v771
      %v792 = vpack.c.b16 %v774, %v773
      %v793 = vpack.c.b16 %v776, %v775
      %v794 = vpack.c.b16 %v778, %v777
      %v795 = vpack.c.b16 %v780, %v779
      %v796 = vpack.c.b16 %v782, %v781
      %v797 = vpack.c.b16 %v784, %v783
      %v798 = vpack.c.b16 %v786, %v785
      %vm811 = vcmask 523264
      %v813 = vsel %vm811, %v712, 0
      %v816 = vsel %vm811, %v714, 0
      %818 = vmatprep.subr.bf16.mxu0 0
      %819 = vmatpush1.bf16.msra.mxu0 %v794
      %820 = vmatprep.subr.bf16.mxu0 0
      %821 = vmatpush1.bf16.msra.mxu0 %v793
      %822 = vmatprep.subr.bf16.mxu0 0
      %823 = vmatpush1.bf16.msra.mxu0 %v792
      %824 = vmatprep.subr.bf16.mxu0 0
      %825 = vmatpush1.bf16.msra.mxu0 %v791
      %826 = vmatprep.subr.bf16.mxu0 0
      %827 = vmatpush1.bf16.msra.mxu0 %v790
      %828 = vmatprep.subr.bf16.mxu0 0
      %829 = vmatpush1.bf16.msra.mxu0 %v789
      %830 = vmatprep.subr.bf16.mxu0 0
      %831 = vmatpush1.bf16.msra.mxu0 %v788
      %832 = vmatprep.subr.bf16.mxu0 0
      %833 = vmatpush1.bf16.msra.mxu0 %v787
      %834 = vmatprep.subr.bf16.mxu0 0
      %835 = vmatpush2.bf16.msra.mxu0 0
      %836 = vmatprep.subr.bf16.mxu0 0
      %837 = vmatpush2.bf16.msra.mxu0 0
      %838 = vmatprep.subr.bf16.mxu0 0
      %839 = vmatpush2.bf16.msra.mxu0 0
      %840 = vmatprep.subr.bf16.mxu0 0
      %841 = vmatpush2.bf16.msra.mxu0 0
      %842 = vmatprep.subr.bf16.mxu0 0
      %843 = vmatpush2.bf16.msra.mxu0 %v798
      %844 = vmatprep.subr.bf16.mxu0 0
      %845 = vmatpush2.bf16.msra.mxu0 %v797
      %846 = vmatprep.subr.bf16.mxu0 0
      %847 = vmatpush2.bf16.msra.mxu0 %v796
      %848 = vmatprep.subr.bf16.mxu0 0
      %849 = vmatpush2.bf16.msra.mxu0 %v795
      %850 = vmatprep.mubr.bf16.mxu0 %v813
      %851 = vmatmul.mubr.bf16.gmra.mxu0 %v711
      %v852 = vpop.f32.mrf.mxu0
      %v853 = vadd.f32 0.0, %v852
      %v854 = vpop.f32.mrf.mxu0
      %v855 = vpop.f32.mrf.mxu0
      %v856 = vadd.f32 0.0, %v855
      %v857 = vpop.f32.mrf.mxu0
      %858 = vmatprep.mubr.bf16.mxu0 %v816
      %859 = vmatmul.mubr.bf16.gmra.mxu0 %v713
      %v860 = vpop.f32.mrf.mxu0
      %v861 = vadd.f32 0.0, %v860
      %v862 = vpop.f32.mrf.mxu0
      %v863 = vpop.f32.mrf.mxu0
      %v864 = vpop.f32.mrf.mxu0
      %865 = vdwg.mxu0
      %vm866 = vcmp.gt.f32.partialorder %v853, 0.0
      %vm867 = vcmp.gt.f32.partialorder %v856, 0.0
      %vm868 = vcmp.gt.f32.partialorder %v861, 0.0
      %v869 = vmul.f32 %v853, 0.2
      %v870 = vmul.f32 %v856, 0.2
      %v871 = vmul.f32 %v861, 0.2
      %v872 = vsel %vm866, %v853, %v869
      %v873 = vsel %vm867, %v856, %v870
      %v874 = vsel %vm868, %v861, %v871
      %vm875 = vcmask 588800
      %876 = vst.msk [vmem:[#allocation2 + $0x2] sm:$0xff] %vm875, %v872
      %vm877 = vcmask 581632
      %878 = vst.msk [vmem:[#allocation2 + $0xa] sm:$0x1] %vm877, %v873
      %vm879 = vcmask 588801
      %880 = vst.msk [vmem:[#allocation2 + $0xe] sm:$0xfe] %vm879, %v873
      %881 = vst.msk [vmem:[#allocation2 + $0x16] sm:$0x3] %vm577, %v874
      %v882 = vld [vmem:[#allocation2] ss:$2 sm:$0x1f]
      %s883 = scalar_lea.vmem [#allocation2], 1
      %v884 = vld [vmem:[%s883] ss:$2 sm:$0x1f]
      %s885 = scalar_lea.vmem [#allocation2], 2
      %v886 = vld [vmem:[%s885] ss:$2 sm:$0x1f]
      %s887 = scalar_lea.vmem [#allocation2], 3
      %v888 = vld [vmem:[%s887] ss:$2 sm:$0x1f]
      %890 = vrot.lane.b32.xlu0 %v884, 72
      %v891 = vpop.permute.xlu0 %890
      %894 = vrot.lane.b32.xlu0 %v886, 16
      %v895 = vpop.permute.xlu0 %894
      %898 = vrot.lane.b32.xlu0 %v888, 88
      %v899 = vpop.permute.xlu0 %898
      %v901 = vsel %vm875, %v882, %v891
      %v902 = vsel %vm645, %v891, %v895
      %vm903 = vcmask 719872
      %v904 = vsel %vm903, %v902, %v899
      %s905 = scalar_lea.vmem [#allocation2], 13
      %v906 = vld [vmem:[%s905] ss:$2 sm:$0x1f]
      %s907 = scalar_lea.vmem [#allocation2], 14
      %v908 = vld [vmem:[%s907] ss:$2 sm:$0x1f]
      %s909 = scalar_lea.vmem [#allocation2], 15
      %v910 = vld [vmem:[%s909] ss:$2 sm:$0x1f]
      %s911 = scalar_lea.vmem [#allocation2], 16
      %v912 = vld [vmem:[%s911] ss:$2 sm:$0x1f]
      %914 = vrot.lane.b32.xlu0 %v908, 72
      %v915 = vpop.permute.xlu0 %914
      %918 = vrot.lane.b32.xlu0 %v910, 16
      %v919 = vpop.permute.xlu0 %918
      %922 = vrot.lane.b32.xlu0 %v912, 88
      %v923 = vpop.permute.xlu0 %922
      %v925 = vsel %vm875, %v906, %v915
      %v926 = vsel %vm645, %v915, %v919
      %v927 = vsel %vm903, %v926, %v923
      %v930 = vrot.slane %v925, 3
      %v931 = vrot.slane %v927, 3
      %v932 = vrot.slane %v923, 3
      %vm936 = vcmask 1044480
      %v937 = vsel %vm936, %v901, %v930
      %v938 = vsel %vm936, %v904, %v931
      %v939 = vsel %vm936, %v899, %v932
      %v940 = vpack.c.bf16 %v930, %v937
      %v941 = vpack.c.bf16 %v931, %v938
      %v942 = vpack.c.bf16 %v932, %v939
      %v943 = vld [vmem:[%s2] sm:$0xf]
      %v944 = vld [vmem:[%s2 + $0x4] sm:$0xf]
      %v945 = vld [vmem:[%s2 + $0x8] sm:$0xf]
      %v946 = vld [vmem:[%s2 + $0xc] sm:$0xf]
      %v947 = vld [vmem:[%s2 + $0x10] sm:$0xf]
      %v948 = vld [vmem:[%s2 + $0x14] sm:$0xf]
      %v949 = vld [vmem:[%s2 + $0x18] sm:$0xf]
      %v950 = vld [vmem:[%s2 + $0x1c] sm:$0xf]
      %v951 = vld [vmem:[%s2 + $0x20] sm:$0xf]
      %v952 = vld [vmem:[%s2 + $0x24] sm:$0xf]
      %v953 = vld [vmem:[%s2 + $0x28] sm:$0xf]
      %v954 = vld [vmem:[%s2 + $0x2c] sm:$0xf]
      %v955 = vld [vmem:[%s2 + $0x30] sm:$0xf]
      %v956 = vld [vmem:[%s2 + $0x34] sm:$0xf]
      %v957 = vld [vmem:[%s2 + $0x38] sm:$0xf]
      %v958 = vld [vmem:[%s2 + $0x3c] sm:$0xf]
      %v959 = vld [vmem:[%s2 + $0x40] sm:$0xf]
      %v960 = vld [vmem:[%s2 + $0x44] sm:$0xf]
      %v961 = vld [vmem:[%s2 + $0x48] sm:$0xf]
      %v962 = vld [vmem:[%s2 + $0x4c] sm:$0xf]
      %v963 = vld [vmem:[%s2 + $0x50] sm:$0xf]
      %v964 = vld [vmem:[%s2 + $0x54] sm:$0xf]
      %v965 = vld [vmem:[%s2 + $0x58] sm:$0xf]
      %v966 = vld [vmem:[%s2 + $0x5c] sm:$0xf]
      %v967 = vld [vmem:[%s2 + $0x60] sm:$0xf]
      %v968 = vld [vmem:[%s2 + $0x64] sm:$0xf]
      %v969 = vld [vmem:[%s2 + $0x68] sm:$0xf]
      %v970 = vld [vmem:[%s2 + $0x6c] sm:$0xf]
      %v971 = vld [vmem:[%s2 + $0x70] sm:$0xf]
      %v972 = vld [vmem:[%s2 + $0x74] sm:$0xf]
      %v973 = vld [vmem:[%s2 + $0x78] sm:$0xf]
      %v974 = vld [vmem:[%s2 + $0x7c] sm:$0xf]
      %v975 = vld [vmem:[%s2 + $0x80] sm:$0xf]
      %v976 = vld [vmem:[%s2 + $0x84] sm:$0xf]
      %v977 = vld [vmem:[%s2 + $0x88] sm:$0xf]
      %v978 = vld [vmem:[%s2 + $0x8c] sm:$0xf]
      %v1015 = vunpack.c.l.b16 %v943
      %v1016 = vunpack.c.l.b16 %v944
      %v1017 = vunpack.c.l.b16 %v945
      %v1018 = vunpack.c.l.b16 %v946
      %v1019 = vunpack.c.l.b16 %v947
      %v1020 = vunpack.c.l.b16 %v948
      %v1021 = vunpack.c.l.b16 %v949
      %v1022 = vunpack.c.l.b16 %v950
      %v1023 = vunpack.c.l.b16 %v951
      %v1024 = vunpack.c.l.b16 %v952
      %v1025 = vunpack.c.l.b16 %v953
      %v1026 = vunpack.c.l.b16 %v954
      %v1027 = vunpack.c.l.b16 %v955
      %v1028 = vunpack.c.l.b16 %v956
      %v1029 = vunpack.c.l.b16 %v957
      %v1030 = vunpack.c.l.b16 %v958
      %v1031 = vunpack.c.l.b16 %v959
      %v1032 = vunpack.c.l.b16 %v960
      %v1033 = vunpack.c.l.b16 %v961
      %v1034 = vunpack.c.l.b16 %v962
      %v1035 = vunpack.c.l.b16 %v963
      %v1036 = vunpack.c.l.b16 %v964
      %v1037 = vunpack.c.l.b16 %v965
      %v1038 = vunpack.c.l.b16 %v966
      %v1039 = vunpack.c.l.b16 %v967
      %v1040 = vunpack.c.l.b16 %v968
      %v1041 = vunpack.c.l.b16 %v969
      %v1042 = vunpack.c.l.b16 %v970
      %v1043 = vunpack.c.l.b16 %v971
      %v1044 = vunpack.c.l.b16 %v972
      %v1045 = vunpack.c.l.b16 %v973
      %v1046 = vunpack.c.l.b16 %v974
      %v1047 = vunpack.c.l.b16 %v975
      %v1048 = vunpack.c.l.b16 %v976
      %v1049 = vunpack.c.l.b16 %v977
      %v1050 = vunpack.c.l.b16 %v978
      %v1051 = vpack.c.b16 %v1016, %v1015
      %v1052 = vpack.c.b16 %v1018, %v1017
      %v1053 = vpack.c.b16 %v1020, %v1019
      %v1054 = vpack.c.b16 %v1022, %v1021
      %v1055 = vpack.c.b16 %v1024, %v1023
      %v1056 = vpack.c.b16 %v1026, %v1025
      %v1057 = vpack.c.b16 %v1028, %v1027
      %v1058 = vpack.c.b16 %v1030, %v1029
      %v1059 = vpack.c.b16 %v1032, %v1031
      %v1060 = vpack.c.b16 %v1034, %v1033
      %v1061 = vpack.c.b16 %v1036, %v1035
      %v1062 = vpack.c.b16 %v1038, %v1037
      %v1063 = vpack.c.b16 %v1040, %v1039
      %v1064 = vpack.c.b16 %v1042, %v1041
      %v1065 = vpack.c.b16 %v1044, %v1043
      %v1066 = vpack.c.b16 %v1046, %v1045
      %v1067 = vpack.c.b16 %v1048, %v1047
      %v1068 = vpack.c.b16 %v1050, %v1049
      %vm1087 = vcmask 261120
      %v1089 = vsel %vm1087, %v942, 0
      %1091 = vmatprep.subr.bf16.mxu0 0
      %1092 = vmatpush1.bf16.msra.mxu0 %v1058
      %1093 = vmatprep.subr.bf16.mxu0 0
      %1094 = vmatpush1.bf16.msra.mxu0 %v1057
      %1095 = vmatprep.subr.bf16.mxu0 0
      %1096 = vmatpush1.bf16.msra.mxu0 %v1056
      %1097 = vmatprep.subr.bf16.mxu0 0
      %1098 = vmatpush1.bf16.msra.mxu0 %v1055
      %1099 = vmatprep.subr.bf16.mxu0 0
      %1100 = vmatpush1.bf16.msra.mxu0 %v1054
      %1101 = vmatprep.subr.bf16.mxu0 0
      %1102 = vmatpush1.bf16.msra.mxu0 %v1053
      %1103 = vmatprep.subr.bf16.mxu0 0
      %1104 = vmatpush1.bf16.msra.mxu0 %v1052
      %1105 = vmatprep.subr.bf16.mxu0 0
      %1106 = vmatpush1.bf16.msra.mxu0 %v1051
      %1107 = vmatprep.subr.bf16.mxu0 0
      %1108 = vmatpush2.bf16.msra.mxu0 %v1066
      %1109 = vmatprep.subr.bf16.mxu0 0
      %1110 = vmatpush2.bf16.msra.mxu0 %v1065
      %1111 = vmatprep.subr.bf16.mxu0 0
      %1112 = vmatpush2.bf16.msra.mxu0 %v1064
      %1113 = vmatprep.subr.bf16.mxu0 0
      %1114 = vmatpush2.bf16.msra.mxu0 %v1063
      %1115 = vmatprep.subr.bf16.mxu0 0
      %1116 = vmatpush2.bf16.msra.mxu0 %v1062
      %1117 = vmatprep.subr.bf16.mxu0 0
      %1118 = vmatpush2.bf16.msra.mxu0 %v1061
      %1119 = vmatprep.subr.bf16.mxu0 0
      %1120 = vmatpush2.bf16.msra.mxu0 %v1060
      %1121 = vmatprep.subr.bf16.mxu0 0
      %1122 = vmatpush2.bf16.msra.mxu0 %v1059
      %1123 = vmatprep.mubr.bf16.mxu0 %v941
      %1124 = vmatmul.mubr.bf16.gmra.mxu0 %v940
      %v1125 = vpop.f32.mrf.mxu0
      %v1126 = vadd.f32 0.0, %v1125
      %v1127 = vpop.f32.mrf.mxu0
      %v1128 = vpop.f32.mrf.mxu0
      %v1129 = vadd.f32 0.0, %v1128
      %v1130 = vpop.f32.mrf.mxu0
      %1131 = vdwg.mxu0
      %1132 = vmatprep.subr.bf16.mxu0 0
      %1133 = vmatpush1.bf16.msra.mxu0 0
      %1134 = vmatprep.subr.bf16.mxu0 0
      %1135 = vmatpush1.bf16.msra.mxu0 0
      %1136 = vmatprep.subr.bf16.mxu0 0
      %1137 = vmatpush1.bf16.msra.mxu0 0
      %1138 = vmatprep.subr.bf16.mxu0 0
      %1139 = vmatpush1.bf16.msra.mxu0 0
      %1140 = vmatprep.subr.bf16.mxu0 0
      %1141 = vmatpush1.bf16.msra.mxu0 0
      %1142 = vmatprep.subr.bf16.mxu0 0
      %1143 = vmatpush1.bf16.msra.mxu0 0
      %1144 = vmatprep.subr.bf16.mxu0 0
      %1145 = vmatpush1.bf16.msra.mxu0 %v1068
      %1146 = vmatprep.subr.bf16.mxu0 0
      %1147 = vmatpush1.bf16.msra.mxu0 %v1067
      %1148 = vmatprep.subr.bf16.mxu0 0
      %1149 = vmatpush2.bf16.msra.mxu0 0
      %1150 = vmatprep.subr.bf16.mxu0 0
      %1151 = vmatpush2.bf16.msra.mxu0 0
      %1152 = vmatprep.subr.bf16.mxu0 0
      %1153 = vmatpush2.bf16.msra.mxu0 0
      %1154 = vmatprep.subr.bf16.mxu0 0
      %1155 = vmatpush2.bf16.msra.mxu0 0
      %1156 = vmatprep.subr.bf16.mxu0 0
      %1157 = vmatpush2.bf16.msra.mxu0 0
      %1158 = vmatprep.subr.bf16.mxu0 0
      %1159 = vmatpush2.bf16.msra.mxu0 0
      %1160 = vmatprep.subr.bf16.mxu0 0
      %1161 = vmatpush2.bf16.msra.mxu0 0
      %1162 = vmatprep.subr.bf16.mxu0 0
      %1163 = vmatpush2.bf16.msra.mxu0 0
      %1164 = vmatprep.mubr.bf16.mxu0 0
      %1165 = vmatmul.mubr.bf16.gmra.mxu0 %v1089
      %v1166 = vpop.f32.mrf.mxu0
      %v1167 = vadd.f32 %v1126, %v1166
      %v1168 = vpop.f32.mrf.mxu0
      %v1169 = vpop.f32.mrf.mxu0
      %v1170 = vadd.f32 %v1129, %v1169
      %v1171 = vpop.f32.mrf.mxu0
      %1172 = vdwg.mxu0
      %v1173 = vld [vmem:[%s6] sm:$0x1]
      %v1174 = vld [vmem:[%s7] sm:$0x1]
      %v1175 = vld [vmem:[%s8] sm:$0xff]
      %v1176 = vld [vmem:[%s8 + $0x8] sm:$0xff]
      %v1177 = vld [vmem:[%s8 + $0x10] sm:$0xff]
      %v1178 = vld [vmem:[%s8 + $0x18] sm:$0xff]
      %v1179 = vld [vmem:[%s8 + $0x20] sm:$0xff]
      %v1180 = vld [vmem:[%s8 + $0x28] sm:$0xff]
      %v1181 = vld [vmem:[%s8 + $0x30] sm:$0xff]
      %v1182 = vld [vmem:[%s8 + $0x38] sm:$0xff]
      %v1183 = vld [vmem:[%s8 + $0x40] sm:$0xff]
      %v1184 = vld [vmem:[%s8 + $0x48] sm:$0xff]
      %v1185 = vld [vmem:[%s9] sm:$0xff]
      %v1186 = vld [vmem:[%s9 + $0x8] sm:$0xff]
      %v1187 = vmul.f32 %v1167, %v1167
      %v1188 = vmul.f32 %v1170, %v1170
      %vm1189 = vcmask 651264
      %v1190 = vsel %vm1189, %v1167, 0.0
      %v1191 = vrot.slane %v1190, 4
      %v1192 = vadd.f32 %v1190, %v1191
      %v1193 = vrot.slane %v1192, 2
      %v1194 = vadd.f32 %v1192, %v1193
      %v1195 = vrot.slane %v1194, 1
      %v1196 = vadd.f32 %v1194, %v1195
      %v1197 = vsel %vm1189, %v1187, 0.0
      %v1198 = vrot.slane %v1197, 4
      %v1199 = vadd.f32 %v1197, %v1198
      %v1200 = vrot.slane %v1199, 2
      %v1201 = vadd.f32 %v1199, %v1200
      %v1202 = vrot.slane %v1201, 1
      %v1203 = vadd.f32 %v1201, %v1202
      %v1204 = vsel %vm698, %v1196, %v1203
      %vm1205 = vcmask 654336
      %v1207 = vsel %vm1205, %v1204, 0
      %1209 = vmatprep.subr.mxu0 0.0
      %1210 = vmatpush1.msra.mxu0 0.0
      %1211 = vmatprep.subr.mxu0 0.0
      %1212 = vmatpush1.msra.mxu0 0.0
      %1213 = vmatprep.subr.mxu0 0.0
      %1214 = vmatpush1.msra.mxu0 0.0
      %1215 = vmatprep.subr.mxu0 0.0
      %1216 = vmatpush1.msra.mxu0 0.0
      %1217 = vmatprep.subr.mxu0 0.0
      %1218 = vmatpush1.msra.mxu0 0.0
      %1219 = vmatprep.subr.mxu0 0.0
      %1220 = vmatpush1.msra.mxu0 0.0
      %1221 = vmatprep.subr.mxu0 0.0
      %1222 = vmatpush1.msra.mxu0 %v1184
      %1223 = vmatprep.subr.mxu0 0.0
      %1224 = vmatpush1.msra.mxu0 %v1183
      %1225 = vmatprep.subr.mxu0 0.0
      %1226 = vmatpush1.msra.mxu0 %v1182
      %1227 = vmatprep.subr.mxu0 0.0
      %1228 = vmatpush1.msra.mxu0 %v1181
      %1229 = vmatprep.subr.mxu0 0.0
      %1230 = vmatpush1.msra.mxu0 %v1180
      %1231 = vmatprep.subr.mxu0 0.0
      %1232 = vmatpush1.msra.mxu0 %v1179
      %1233 = vmatprep.subr.mxu0 0.0
      %1234 = vmatpush1.msra.mxu0 %v1178
      %1235 = vmatprep.subr.mxu0 0.0
      %1236 = vmatpush1.msra.mxu0 %v1177
      %1237 = vmatprep.subr.mxu0 0.0
      %1238 = vmatpush1.msra.mxu0 %v1176
      %1239 = vmatprep.subr.mxu0 0.0
      %1240 = vmatpush1.msra.mxu0 %v1175
      %1241 = vmatprep.subr.mxu0 0.0
      %1242 = vmatpush2.msra.mxu0 0.0
      %1243 = vmatprep.subr.mxu0 0.0
      %1244 = vmatpush2.msra.mxu0 0.0
      %1245 = vmatprep.subr.mxu0 0.0
      %1246 = vmatpush2.msra.mxu0 0.0
      %1247 = vmatprep.subr.mxu0 0.0
      %1248 = vmatpush2.msra.mxu0 0.0
      %1249 = vmatprep.subr.mxu0 0.0
      %1250 = vmatpush2.msra.mxu0 0.0
      %1251 = vmatprep.subr.mxu0 0.0
      %1252 = vmatpush2.msra.mxu0 0.0
      %1253 = vmatprep.subr.mxu0 0.0
      %1254 = vmatpush2.msra.mxu0 0.0
      %1255 = vmatprep.subr.mxu0 0.0
      %1256 = vmatpush2.msra.mxu0 0.0
      %1257 = vmatprep.subr.mxu0 0.0
      %1258 = vmatpush2.msra.mxu0 0.0
      %1259 = vmatprep.subr.mxu0 0.0
      %1260 = vmatpush2.msra.mxu0 0.0
      %1261 = vmatprep.subr.mxu0 0.0
      %1262 = vmatpush2.msra.mxu0 0.0
      %1263 = vmatprep.subr.mxu0 0.0
      %1264 = vmatpush2.msra.mxu0 0.0
      %1265 = vmatprep.subr.mxu0 0.0
      %1266 = vmatpush2.msra.mxu0 0.0
      %1267 = vmatprep.subr.mxu0 0.0
      %1268 = vmatpush2.msra.mxu0 0.0
      %1269 = vmatprep.subr.mxu0 0.0
      %1270 = vmatpush2.msra.mxu0 0.0
      %1271 = vmatprep.subr.mxu0 0.0
      %1272 = vmatpush2.msra.mxu0 0.0
      %1273 = vmatprep.mubr.f32.mxu0 0.0
      %1274 = vmatmul.mubr.f32.gmra.mxu0 %v1207
      %v1275 = vpop.f32.mrf.mxu0
      %v1276 = vadd.f32 0.0, %v1275
      %v1277 = vpop.f32.mrf.mxu0
      %1278 = vdwg.mxu0
      %v1279 = vmul.f32 %v1276, 0.04
      %v1280 = vmul.f32 %v1279, %v1279
      %v1282 = vrot.slane %v1280, 7
      %v1284 = vsub.f32 %v1279, %v1282
      %v1285 = vmax.f32 %v1284, 0.0
      %v1286 = vadd.f32 %v1285, 1e-05
      %v1287 = vrsqrt.pop %v1286
      %v1290 = vunpack.c.l.s4 1966171168
      %v1291 = vunpack.c.0.s8 %v1290
      %v1292 = vlaneseq
      %v1293 = vshrl.u32 %v1292, 7
      %v1294 = vsub.s32 %v1291, %v1293
      %v1295 = vrot.slane %v1287, %v1294
      %v1296 = vcombine.high %v1295, %v1295
      %v1298 = vunpack.c.l.s4 1966171168
      %v1299 = vunpack.c.0.s8 %v1298
      %v1300 = vlaneseq
      %v1301 = vshrl.u32 %v1300, 7
      %v1302 = vsub.s32 %v1299, %v1301
      %v1303 = vrot.slane %v1296, %v1302
      %v1305 = vmul.f32 %v1173, %v1303
      %v1306 = vmul.f32 %v1279, %v1305
      %v1307 = vsub.f32 %v1174, %v1306
      %v1309 = vlaneseq
      %v1310 = vshrl.u32 %v1309, 7
      %v1311 = vsub.s32 0, %v1310
      %v1312 = vrot.slane %v1307, %v1311
      %v1314 = vsel %vm698, %v1305, %v1312
      %v1316 = vsel %vm645, %v1314, 0
      %1318 = vmatprep.subr.mxu0 0.0
      %1319 = vmatpush1.msra.mxu0 0.0
      %1320 = vmatprep.subr.mxu0 0.0
      %1321 = vmatpush1.msra.mxu0 0.0
      %1322 = vmatprep.subr.mxu0 0.0
      %1323 = vmatpush1.msra.mxu0 0.0
      %1324 = vmatprep.subr.mxu0 0.0
      %1325 = vmatpush1.msra.mxu0 0.0
      %1326 = vmatprep.subr.mxu0 0.0
      %1327 = vmatpush1.msra.mxu0 0.0
      %1328 = vmatprep.subr.mxu0 0.0
      %1329 = vmatpush1.msra.mxu0 0.0
      %1330 = vmatprep.subr.mxu0 0.0
      %1331 = vmatpush1.msra.mxu0 0.0
      %1332 = vmatprep.subr.mxu0 0.0
      %1333 = vmatpush1.msra.mxu0 0.0
      %1334 = vmatprep.subr.mxu0 0.0
      %1335 = vmatpush1.msra.mxu0 0.0
      %1336 = vmatprep.subr.mxu0 0.0
      %1337 = vmatpush1.msra.mxu0 0.0
      %1338 = vmatprep.subr.mxu0 0.0
      %1339 = vmatpush1.msra.mxu0 0.0
      %1340 = vmatprep.subr.mxu0 0.0
      %1341 = vmatpush1.msra.mxu0 0.0
      %1342 = vmatprep.subr.mxu0 0.0
      %1343 = vmatpush1.msra.mxu0 0.0
      %1344 = vmatprep.subr.mxu0 0.0
      %1345 = vmatpush1.msra.mxu0 0.0
      %1346 = vmatprep.subr.mxu0 0.0
      %1347 = vmatpush1.msra.mxu0 %v1186
      %1348 = vmatprep.subr.mxu0 0.0
      %1349 = vmatpush1.msra.mxu0 %v1185
      %1350 = vmatprep.subr.mxu0 0.0
      %1351 = vmatpush2.msra.mxu0 0.0
      %1352 = vmatprep.subr.mxu0 0.0
      %1353 = vmatpush2.msra.mxu0 0.0
      %1354 = vmatprep.subr.mxu0 0.0
      %1355 = vmatpush2.msra.mxu0 0.0
      %1356 = vmatprep.subr.mxu0 0.0
      %1357 = vmatpush2.msra.mxu0 0.0
      %1358 = vmatprep.subr.mxu0 0.0
      %1359 = vmatpush2.msra.mxu0 0.0
      %1360 = vmatprep.subr.mxu0 0.0
      %1361 = vmatpush2.msra.mxu0 0.0
      %1362 = vmatprep.subr.mxu0 0.0
      %1363 = vmatpush2.msra.mxu0 0.0
      %1364 = vmatprep.subr.mxu0 0.0
      %1365 = vmatpush2.msra.mxu0 0.0
      %1366 = vmatprep.subr.mxu0 0.0
      %1367 = vmatpush2.msra.mxu0 0.0
      %1368 = vmatprep.subr.mxu0 0.0
      %1369 = vmatpush2.msra.mxu0 0.0
      %1370 = vmatprep.subr.mxu0 0.0
      %1371 = vmatpush2.msra.mxu0 0.0
      %1372 = vmatprep.subr.mxu0 0.0
      %1373 = vmatpush2.msra.mxu0 0.0
      %1374 = vmatprep.subr.mxu0 0.0
      %1375 = vmatpush2.msra.mxu0 0.0
      %1376 = vmatprep.subr.mxu0 0.0
      %1377 = vmatpush2.msra.mxu0 0.0
      %1378 = vmatprep.subr.mxu0 0.0
      %1379 = vmatpush2.msra.mxu0 0.0
      %1380 = vmatprep.subr.mxu0 0.0
      %1381 = vmatpush2.msra.mxu0 0.0
      %1382 = vmatprep.mubr.f32.mxu0 0.0
      %1383 = vmatmul.mubr.f32.gmra.mxu0 %v1316
      %v1384 = vpop.f32.mrf.mxu0
      %v1385 = vadd.f32 0.0, %v1384
      %v1386 = vpop.f32.mrf.mxu0
      %1387 = vdwg.mxu0
      %v1388 = vlaneseq
      %v1389 = vshrl.u32 %v1388, 7
      %v1390 = vsub.s32 0, %v1389
      %v1391 = vrot.slane %v1385, %v1390
      %v1392 = vmul.f32 %v1167, %v1391
      %v1393 = vlaneseq
      %v1394 = vshrl.u32 %v1393, 7
      %v1395 = vsub.s32 1, %v1394
      %v1396 = vrot.slane %v1385, %v1395
      %v1397 = vadd.f32 %v1392, %v1396
      %vm1398 = vcmp.gt.f32.partialorder %v1397, 0.0
      %v1399 = vmul.f32 %v1397, 0.2
      %v1400 = vsel %vm1398, %v1397, %v1399
      %1401 = vst.msk [vmem:[#allocation3 + $0x2] sm:$0x1f] %vm1189, %v1400
      %vm1404 = vcmask 1042432
      %v1405 = vrot.slane %v1167, 5
      %v1406 = vrot.slane %v1170, 5
      %v1407 = vsel %vm1404, %v1405, %v1406
      %v1409 = vsel %vm1189, %v1407, 0.0
      %v1410 = vrot.slane %v1409, 4
      %v1411 = vadd.f32 %v1409, %v1410
      %v1412 = vrot.slane %v1411, 2
      %v1413 = vadd.f32 %v1411, %v1412
      %v1414 = vrot.slane %v1413, 1
      %v1415 = vadd.f32 %v1413, %v1414
      %v1418 = vrot.slane %v1187, 5
      %v1419 = vrot.slane %v1188, 5
      %v1420 = vsel %vm1404, %v1418, %v1419
      %v1422 = vsel %vm1189, %v1420, 0.0
      %v1423 = vrot.slane %v1422, 4
      %v1424 = vadd.f32 %v1422, %v1423
      %v1425 = vrot.slane %v1424, 2
      %v1426 = vadd.f32 %v1424, %v1425
      %v1427 = vrot.slane %v1426, 1
      %v1428 = vadd.f32 %v1426, %v1427
      %v1429 = vsel %vm698, %v1415, %v1428
      %v1431 = vsel %vm1205, %v1429, 0
      %1433 = vmatprep.subr.mxu0 0.0
      %1434 = vmatpush1.msra.mxu0 0.0
      %1435 = vmatprep.subr.mxu0 0.0
      %1436 = vmatpush1.msra.mxu0 0.0
      %1437 = vmatprep.subr.mxu0 0.0
      %1438 = vmatpush1.msra.mxu0 0.0
      %1439 = vmatprep.subr.mxu0 0.0
      %1440 = vmatpush1.msra.mxu0 0.0
      %1441 = vmatprep.subr.mxu0 0.0
      %1442 = vmatpush1.msra.mxu0 0.0
      %1443 = vmatprep.subr.mxu0 0.0
      %1444 = vmatpush1.msra.mxu0 0.0
      %1445 = vmatprep.subr.mxu0 0.0
      %1446 = vmatpush1.msra.mxu0 %v1184
      %1447 = vmatprep.subr.mxu0 0.0
      %1448 = vmatpush1.msra.mxu0 %v1183
      %1449 = vmatprep.subr.mxu0 0.0
      %1450 = vmatpush1.msra.mxu0 %v1182
      %1451 = vmatprep.subr.mxu0 0.0
      %1452 = vmatpush1.msra.mxu0 %v1181
      %1453 = vmatprep.subr.mxu0 0.0
      %1454 = vmatpush1.msra.mxu0 %v1180
      %1455 = vmatprep.subr.mxu0 0.0
      %1456 = vmatpush1.msra.mxu0 %v1179
      %1457 = vmatprep.subr.mxu0 0.0
      %1458 = vmatpush1.msra.mxu0 %v1178
      %1459 = vmatprep.subr.mxu0 0.0
      %1460 = vmatpush1.msra.mxu0 %v1177
      %1461 = vmatprep.subr.mxu0 0.0
      %1462 = vmatpush1.msra.mxu0 %v1176
      %1463 = vmatprep.subr.mxu0 0.0
      %1464 = vmatpush1.msra.mxu0 %v1175
      %1465 = vmatprep.subr.mxu0 0.0
      %1466 = vmatpush2.msra.mxu0 0.0
      %1467 = vmatprep.subr.mxu0 0.0
      %1468 = vmatpush2.msra.mxu0 0.0
      %1469 = vmatprep.subr.mxu0 0.0
      %1470 = vmatpush2.msra.mxu0 0.0
      %1471 = vmatprep.subr.mxu0 0.0
      %1472 = vmatpush2.msra.mxu0 0.0
      %1473 = vmatprep.subr.mxu0 0.0
      %1474 = vmatpush2.msra.mxu0 0.0
      %1475 = vmatprep.subr.mxu0 0.0
      %1476 = vmatpush2.msra.mxu0 0.0
      %1477 = vmatprep.subr.mxu0 0.0
      %1478 = vmatpush2.msra.mxu0 0.0
      %1479 = vmatprep.subr.mxu0 0.0
      %1480 = vmatpush2.msra.mxu0 0.0
      %1481 = vmatprep.subr.mxu0 0.0
      %1482 = vmatpush2.msra.mxu0 0.0
      %1483 = vmatprep.subr.mxu0 0.0
      %1484 = vmatpush2.msra.mxu0 0.0
      %1485 = vmatprep.subr.mxu0 0.0
      %1486 = vmatpush2.msra.mxu0 0.0
      %1487 = vmatprep.subr.mxu0 0.0
      %1488 = vmatpush2.msra.mxu0 0.0
      %1489 = vmatprep.subr.mxu0 0.0
      %1490 = vmatpush2.msra.mxu0 0.0
      %1491 = vmatprep.subr.mxu0 0.0
      %1492 = vmatpush2.msra.mxu0 0.0
      %1493 = vmatprep.subr.mxu0 0.0
      %1494 = vmatpush2.msra.mxu0 0.0
      %1495 = vmatprep.subr.mxu0 0.0
      %1496 = vmatpush2.msra.mxu0 0.0
      %1497 = vmatprep.mubr.f32.mxu0 0.0
      %1498 = vmatmul.mubr.f32.gmra.mxu0 %v1431
      %v1499 = vpop.f32.mrf.mxu0
      %v1500 = vadd.f32 0.0, %v1499
      %v1501 = vpop.f32.mrf.mxu0
      %1502 = vdwg.mxu0
      %v1503 = vmul.f32 %v1500, 0.04
      %v1504 = vmul.f32 %v1503, %v1503
      %v1506 = vrot.slane %v1504, 7
      %v1508 = vsub.f32 %v1503, %v1506
      %v1509 = vmax.f32 %v1508, 0.0
      %v1510 = vadd.f32 %v1509, 1e-05
      %v1511 = vrsqrt.pop %v1510
      %v1514 = vunpack.c.l.s4 1966171168
      %v1515 = vunpack.c.0.s8 %v1514
      %v1516 = vlaneseq
      %v1517 = vshrl.u32 %v1516, 7
      %v1518 = vsub.s32 %v1515, %v1517
      %v1519 = vrot.slane %v1511, %v1518
      %v1520 = vcombine.high %v1519, %v1519
      %v1522 = vunpack.c.l.s4 1966171168
      %v1523 = vunpack.c.0.s8 %v1522
      %v1524 = vlaneseq
      %v1525 = vshrl.u32 %v1524, 7
      %v1526 = vsub.s32 %v1523, %v1525
      %v1527 = vrot.slane %v1520, %v1526
      %v1529 = vmul.f32 %v1173, %v1527
      %v1530 = vmul.f32 %v1503, %v1529
      %v1531 = vsub.f32 %v1174, %v1530
      %v1533 = vlaneseq
      %v1534 = vshrl.u32 %v1533, 7
      %v1535 = vsub.s32 0, %v1534
      %v1536 = vrot.slane %v1531, %v1535
      %v1538 = vsel %vm698, %v1529, %v1536
      %v1540 = vsel %vm645, %v1538, 0
      %1542 = vmatprep.subr.mxu0 0.0
      %1543 = vmatpush1.msra.mxu0 0.0
      %1544 = vmatprep.subr.mxu0 0.0
      %1545 = vmatpush1.msra.mxu0 0.0
      %1546 = vmatprep.subr.mxu0 0.0
      %1547 = vmatpush1.msra.mxu0 0.0
      %1548 = vmatprep.subr.mxu0 0.0
      %1549 = vmatpush1.msra.mxu0 0.0
      %1550 = vmatprep.subr.mxu0 0.0
      %1551 = vmatpush1.msra.mxu0 0.0
      %1552 = vmatprep.subr.mxu0 0.0
      %1553 = vmatpush1.msra.mxu0 0.0
      %1554 = vmatprep.subr.mxu0 0.0
      %1555 = vmatpush1.msra.mxu0 0.0
      %1556 = vmatprep.subr.mxu0 0.0
      %1557 = vmatpush1.msra.mxu0 0.0
      %1558 = vmatprep.subr.mxu0 0.0
      %1559 = vmatpush1.msra.mxu0 0.0
      %1560 = vmatprep.subr.mxu0 0.0
      %1561 = vmatpush1.msra.mxu0 0.0
      %1562 = vmatprep.subr.mxu0 0.0
      %1563 = vmatpush1.msra.mxu0 0.0
      %1564 = vmatprep.subr.mxu0 0.0
      %1565 = vmatpush1.msra.mxu0 0.0
      %1566 = vmatprep.subr.mxu0 0.0
      %1567 = vmatpush1.msra.mxu0 0.0
      %1568 = vmatprep.subr.mxu0 0.0
      %1569 = vmatpush1.msra.mxu0 0.0
      %1570 = vmatprep.subr.mxu0 0.0
      %1571 = vmatpush1.msra.mxu0 %v1186
      %1572 = vmatprep.subr.mxu0 0.0
      %1573 = vmatpush1.msra.mxu0 %v1185
      %1574 = vmatprep.subr.mxu0 0.0
      %1575 = vmatpush2.msra.mxu0 0.0
      %1576 = vmatprep.subr.mxu0 0.0
      %1577 = vmatpush2.msra.mxu0 0.0
      %1578 = vmatprep.subr.mxu0 0.0
      %1579 = vmatpush2.msra.mxu0 0.0
      %1580 = vmatprep.subr.mxu0 0.0
      %1581 = vmatpush2.msra.mxu0 0.0
      %1582 = vmatprep.subr.mxu0 0.0
      %1583 = vmatpush2.msra.mxu0 0.0
      %1584 = vmatprep.subr.mxu0 0.0
      %1585 = vmatpush2.msra.mxu0 0.0
      %1586 = vmatprep.subr.mxu0 0.0
      %1587 = vmatpush2.msra.mxu0 0.0
      %1588 = vmatprep.subr.mxu0 0.0
      %1589 = vmatpush2.msra.mxu0 0.0
      %1590 = vmatprep.subr.mxu0 0.0
      %1591 = vmatpush2.msra.mxu0 0.0
      %1592 = vmatprep.subr.mxu0 0.0
      %1593 = vmatpush2.msra.mxu0 0.0
      %1594 = vmatprep.subr.mxu0 0.0
      %1595 = vmatpush2.msra.mxu0 0.0
      %1596 = vmatprep.subr.mxu0 0.0
      %1597 = vmatpush2.msra.mxu0 0.0
      %1598 = vmatprep.subr.mxu0 0.0
      %1599 = vmatpush2.msra.mxu0 0.0
      %1600 = vmatprep.subr.mxu0 0.0
      %1601 = vmatpush2.msra.mxu0 0.0
      %1602 = vmatprep.subr.mxu0 0.0
      %1603 = vmatpush2.msra.mxu0 0.0
      %1604 = vmatprep.subr.mxu0 0.0
      %1605 = vmatpush2.msra.mxu0 0.0
      %1606 = vmatprep.mubr.f32.mxu0 0.0
      %1607 = vmatmul.mubr.f32.gmra.mxu0 %v1540
      %v1608 = vpop.f32.mrf.mxu0
      %v1609 = vadd.f32 0.0, %v1608
      %v1610 = vpop.f32.mrf.mxu0
      %1611 = vdwg.mxu0
      %v1612 = vlaneseq
      %v1613 = vshrl.u32 %v1612, 7
      %v1614 = vsub.s32 0, %v1613
      %v1615 = vrot.slane %v1609, %v1614
      %v1616 = vmul.f32 %v1167, %v1615
      %v1617 = vmul.f32 %v1170, %v1615
      %v1618 = vlaneseq
      %v1619 = vshrl.u32 %v1618, 7
      %v1620 = vsub.s32 1, %v1619
      %v1621 = vrot.slane %v1609, %v1620
      %v1622 = vadd.f32 %v1616, %v1621
      %v1623 = vadd.f32 %v1617, %v1621
      %vm1624 = vcmp.gt.f32.partialorder %v1622, 0.0
      %vm1625 = vcmp.gt.f32.partialorder %v1623, 0.0
      %v1626 = vmul.f32 %v1622, 0.2
      %v1627 = vmul.f32 %v1623, 0.2
      %v1628 = vsel %vm1624, %v1622, %v1626
      %v1629 = vsel %vm1625, %v1623, %v1627
      %vm1630 = vcmask 654341
      %1631 = vst.msk [vmem:[#allocation3 + $0x6] sm:$0xe0] %vm1630, %v1628
      %1632 = vst.msk [vmem:[#allocation3 + $0xe] sm:$0x3] %vm582, %v1629
      %v1633 = vld [vmem:[#allocation3] ss:$2 sm:$0x7]
      %s1634 = scalar_lea.vmem [#allocation3], 1
      %v1635 = vld [vmem:[%s1634] ss:$2 sm:$0x7]
      %s1636 = scalar_lea.vmem [#allocation3], 2
      %v1637 = vld [vmem:[%s1636] ss:$2 sm:$0x7]
      %s1638 = scalar_lea.vmem [#allocation3], 3
      %v1639 = vld [vmem:[%s1638] ss:$2 sm:$0x7]
      %1641 = vrot.lane.b32.xlu0 %v1635, 80
      %v1642 = vpop.permute.xlu0 %1641
      %1645 = vrot.lane.b32.xlu0 %v1637, 32
      %v1646 = vpop.permute.xlu0 %1645
      %1649 = vrot.lane.b32.xlu0 %v1639, 112
      %v1650 = vpop.permute.xlu0 %1649
      %v1652 = vsel %vm1205, %v1633, %v1642
      %v1653 = vsel %vm1087, %v1642, %v1646
      %vm1654 = vcmask 916480
      %v1655 = vsel %vm1654, %v1653, %v1650
      %s1656 = scalar_lea.vmem [#allocation3], 9
      %v1657 = vld [vmem:[%s1656] ss:$2 sm:$0x7]
      %s1658 = scalar_lea.vmem [#allocation3], 10
      %v1659 = vld [vmem:[%s1658] ss:$2 sm:$0x7]
      %s1660 = scalar_lea.vmem [#allocation3], 11
      %v1661 = vld [vmem:[%s1660] ss:$2 sm:$0x7]
      %s1662 = scalar_lea.vmem [#allocation3], 12
      %v1663 = vld [vmem:[%s1662] ss:$2 sm:$0x7]
      %1665 = vrot.lane.b32.xlu0 %v1659, 80
      %v1666 = vpop.permute.xlu0 %1665
      %1669 = vrot.lane.b32.xlu0 %v1661, 32
      %v1670 = vpop.permute.xlu0 %1669
      %1673 = vrot.lane.b32.xlu0 %v1663, 112
      %v1674 = vpop.permute.xlu0 %1673
      %v1676 = vsel %vm1205, %v1657, %v1666
      %v1677 = vsel %vm1087, %v1666, %v1670
      %v1678 = vsel %vm1654, %v1677, %v1674
      %v1681 = vrot.slane %v1676, 5
      %v1682 = vrot.slane %v1678, 5
      %v1683 = vrot.slane %v1674, 5
      %v1687 = vsel %vm1404, %v1652, %v1681
      %v1688 = vsel %vm1404, %v1655, %v1682
      %v1689 = vsel %vm1404, %v1650, %v1683
      %v1690 = vpack.c.bf16 %v1687, %v1687
      %v1691 = vpack.c.bf16 %v1688, %v1688
      %v1692 = vpack.c.bf16 %v1689, %v1689
      %v1693 = vld [vmem:[%s3] sm:$0xf]
      %v1694 = vld [vmem:[%s3 + $0x4] sm:$0xf]
      %v1695 = vld [vmem:[%s3 + $0x8] sm:$0xf]
      %v1696 = vld [vmem:[%s3 + $0xc] sm:$0xf]
      %v1697 = vld [vmem:[%s3 + $0x10] sm:$0xf]
      %v1698 = vld [vmem:[%s3 + $0x14] sm:$0xf]
      %v1699 = vld [vmem:[%s3 + $0x18] sm:$0xf]
      %v1700 = vld [vmem:[%s3 + $0x1c] sm:$0xf]
      %v1701 = vld [vmem:[%s3 + $0x20] sm:$0xf]
      %v1702 = vld [vmem:[%s3 + $0x24] sm:$0xf]
      %v1703 = vld [vmem:[%s3 + $0x28] sm:$0xf]
      %v1704 = vld [vmem:[%s3 + $0x2c] sm:$0xf]
      %v1705 = vld [vmem:[%s3 + $0x30] sm:$0xf]
      %v1706 = vld [vmem:[%s3 + $0x34] sm:$0xf]
      %v1707 = vld [vmem:[%s3 + $0x38] sm:$0xf]
      %v1708 = vld [vmem:[%s3 + $0x3c] sm:$0xf]
      %v1709 = vld [vmem:[%s3 + $0x40] sm:$0xf]
      %v1710 = vld [vmem:[%s3 + $0x44] sm:$0xf]
      %v1711 = vld [vmem:[%s3 + $0x48] sm:$0xf]
      %v1712 = vld [vmem:[%s3 + $0x4c] sm:$0xf]
      %v1713 = vld [vmem:[%s3 + $0x50] sm:$0xf]
      %v1714 = vld [vmem:[%s3 + $0x54] sm:$0xf]
      %v1715 = vld [vmem:[%s3 + $0x58] sm:$0xf]
      %v1716 = vld [vmem:[%s3 + $0x5c] sm:$0xf]
      %v1717 = vld [vmem:[%s3 + $0x60] sm:$0xf]
      %v1718 = vld [vmem:[%s3 + $0x64] sm:$0xf]
      %v1719 = vld [vmem:[%s3 + $0x68] sm:$0xf]
      %v1720 = vld [vmem:[%s3 + $0x6c] sm:$0xf]
      %v1721 = vld [vmem:[%s3 + $0x70] sm:$0xf]
      %v1722 = vld [vmem:[%s3 + $0x74] sm:$0xf]
      %v1723 = vld [vmem:[%s3 + $0x78] sm:$0xf]
      %v1724 = vld [vmem:[%s3 + $0x7c] sm:$0xf]
      %v1725 = vld [vmem:[%s3 + $0x80] sm:$0xf]
      %v1726 = vld [vmem:[%s3 + $0x84] sm:$0xf]
      %v1727 = vld [vmem:[%s3 + $0x88] sm:$0xf]
      %v1728 = vld [vmem:[%s3 + $0x8c] sm:$0xf]
      %v1729 = vld [vmem:[%s3 + $0x90] sm:$0xf]
      %v1730 = vld [vmem:[%s3 + $0x94] sm:$0xf]
      %v1731 = vld [vmem:[%s3 + $0x98] sm:$0xf]
      %v1732 = vld [vmem:[%s3 + $0x9c] sm:$0xf]
      %v1773 = vunpack.c.l.b16 %v1693
      %v1774 = vunpack.c.l.b16 %v1694
      %v1775 = vunpack.c.l.b16 %v1695
      %v1776 = vunpack.c.l.b16 %v1696
      %v1777 = vunpack.c.l.b16 %v1697
      %v1778 = vunpack.c.l.b16 %v1698
      %v1779 = vunpack.c.l.b16 %v1699
      %v1780 = vunpack.c.l.b16 %v1700
      %v1781 = vunpack.c.l.b16 %v1701
      %v1782 = vunpack.c.l.b16 %v1702
      %v1783 = vunpack.c.l.b16 %v1703
      %v1784 = vunpack.c.l.b16 %v1704
      %v1785 = vunpack.c.l.b16 %v1705
      %v1786 = vunpack.c.l.b16 %v1706
      %v1787 = vunpack.c.l.b16 %v1707
      %v1788 = vunpack.c.l.b16 %v1708
      %v1789 = vunpack.c.l.b16 %v1709
      %v1790 = vunpack.c.l.b16 %v1710
      %v1791 = vunpack.c.l.b16 %v1711
      %v1792 = vunpack.c.l.b16 %v1712
      %v1793 = vunpack.c.l.b16 %v1713
      %v1794 = vunpack.c.l.b16 %v1714
      %v1795 = vunpack.c.l.b16 %v1715
      %v1796 = vunpack.c.l.b16 %v1716
      %v1797 = vunpack.c.l.b16 %v1717
      %v1798 = vunpack.c.l.b16 %v1718
      %v1799 = vunpack.c.l.b16 %v1719
      %v1800 = vunpack.c.l.b16 %v1720
      %v1801 = vunpack.c.l.b16 %v1721
      %v1802 = vunpack.c.l.b16 %v1722
      %v1803 = vunpack.c.l.b16 %v1723
      %v1804 = vunpack.c.l.b16 %v1724
      %v1805 = vunpack.c.l.b16 %v1725
      %v1806 = vunpack.c.l.b16 %v1726
      %v1807 = vunpack.c.l.b16 %v1727
      %v1808 = vunpack.c.l.b16 %v1728
      %v1809 = vunpack.c.l.b16 %v1729
      %v1810 = vunpack.c.l.b16 %v1730
      %v1811 = vunpack.c.l.b16 %v1731
      %v1812 = vunpack.c.l.b16 %v1732
      %v1813 = vpack.c.b16 %v1774, %v1773
      %v1814 = vpack.c.b16 %v1776, %v1775
      %v1815 = vpack.c.b16 %v1778, %v1777
      %v1816 = vpack.c.b16 %v1780, %v1779
      %v1817 = vpack.c.b16 %v1782, %v1781
      %v1818 = vpack.c.b16 %v1784, %v1783
      %v1819 = vpack.c.b16 %v1786, %v1785
      %v1820 = vpack.c.b16 %v1788, %v1787
      %v1821 = vpack.c.b16 %v1790, %v1789
      %v1822 = vpack.c.b16 %v1792, %v1791
      %v1823 = vpack.c.b16 %v1794, %v1793
      %v1824 = vpack.c.b16 %v1796, %v1795
      %v1825 = vpack.c.b16 %v1798, %v1797
      %v1826 = vpack.c.b16 %v1800, %v1799
      %v1827 = vpack.c.b16 %v1802, %v1801
      %v1828 = vpack.c.b16 %v1804, %v1803
      %v1829 = vpack.c.b16 %v1806, %v1805
      %v1830 = vpack.c.b16 %v1808, %v1807
      %v1831 = vpack.c.b16 %v1810, %v1809
      %v1832 = vpack.c.b16 %v1812, %v1811
      %v1854 = vsel %vm811, %v1692, 0
      %1856 = vmatprep.subr.bf16.mxu0 0
      %1857 = vmatpush1.bf16.msra.mxu0 %v1820
      %1858 = vmatprep.subr.bf16.mxu0 0
      %1859 = vmatpush1.bf16.msra.mxu0 %v1819
      %1860 = vmatprep.subr.bf16.mxu0 0
      %1861 = vmatpush1.bf16.msra.mxu0 %v1818
      %1862 = vmatprep.subr.bf16.mxu0 0
      %1863 = vmatpush1.bf16.msra.mxu0 %v1817
      %1864 = vmatprep.subr.bf16.mxu0 0
      %1865 = vmatpush1.bf16.msra.mxu0 %v1816
      %1866 = vmatprep.subr.bf16.mxu0 0
      %1867 = vmatpush1.bf16.msra.mxu0 %v1815
      %1868 = vmatprep.subr.bf16.mxu0 0
      %1869 = vmatpush1.bf16.msra.mxu0 %v1814
      %1870 = vmatprep.subr.bf16.mxu0 0
      %1871 = vmatpush1.bf16.msra.mxu0 %v1813
      %1872 = vmatprep.subr.bf16.mxu0 0
      %1873 = vmatpush2.bf16.msra.mxu0 %v1828
      %1874 = vmatprep.subr.bf16.mxu0 0
      %1875 = vmatpush2.bf16.msra.mxu0 %v1827
      %1876 = vmatprep.subr.bf16.mxu0 0
      %1877 = vmatpush2.bf16.msra.mxu0 %v1826
      %1878 = vmatprep.subr.bf16.mxu0 0
      %1879 = vmatpush2.bf16.msra.mxu0 %v1825
      %1880 = vmatprep.subr.bf16.mxu0 0
      %1881 = vmatpush2.bf16.msra.mxu0 %v1824
      %1882 = vmatprep.subr.bf16.mxu0 0
      %1883 = vmatpush2.bf16.msra.mxu0 %v1823
      %1884 = vmatprep.subr.bf16.mxu0 0
      %1885 = vmatpush2.bf16.msra.mxu0 %v1822
      %1886 = vmatprep.subr.bf16.mxu0 0
      %1887 = vmatpush2.bf16.msra.mxu0 %v1821
      %1888 = vmatprep.mubr.bf16.mxu0 %v1691
      %1889 = vmatmul.mubr.bf16.gmra.mxu0 %v1690
      %v1890 = vpop.f32.mrf.mxu0
      %v1891 = vadd.f32 0.0, %v1890
      %v1892 = vpop.f32.mrf.mxu0
      %v1893 = vpop.f32.mrf.mxu0
      %v1894 = vpop.f32.mrf.mxu0
      %1895 = vdwg.mxu0
      %1896 = vmatprep.subr.bf16.mxu0 0
      %1897 = vmatpush1.bf16.msra.mxu0 0
      %1898 = vmatprep.subr.bf16.mxu0 0
      %1899 = vmatpush1.bf16.msra.mxu0 0
      %1900 = vmatprep.subr.bf16.mxu0 0
      %1901 = vmatpush1.bf16.msra.mxu0 0
      %1902 = vmatprep.subr.bf16.mxu0 0
      %1903 = vmatpush1.bf16.msra.mxu0 0
      %1904 = vmatprep.subr.bf16.mxu0 0
      %1905 = vmatpush1.bf16.msra.mxu0 %v1832
      %1906 = vmatprep.subr.bf16.mxu0 0
      %1907 = vmatpush1.bf16.msra.mxu0 %v1831
      %1908 = vmatprep.subr.bf16.mxu0 0
      %1909 = vmatpush1.bf16.msra.mxu0 %v1830
      %1910 = vmatprep.subr.bf16.mxu0 0
      %1911 = vmatpush1.bf16.msra.mxu0 %v1829
      %1912 = vmatprep.subr.bf16.mxu0 0
      %1913 = vmatpush2.bf16.msra.mxu0 0
      %1914 = vmatprep.subr.bf16.mxu0 0
      %1915 = vmatpush2.bf16.msra.mxu0 0
      %1916 = vmatprep.subr.bf16.mxu0 0
      %1917 = vmatpush2.bf16.msra.mxu0 0
      %1918 = vmatprep.subr.bf16.mxu0 0
      %1919 = vmatpush2.bf16.msra.mxu0 0
      %1920 = vmatprep.subr.bf16.mxu0 0
      %1921 = vmatpush2.bf16.msra.mxu0 0
      %1922 = vmatprep.subr.bf16.mxu0 0
      %1923 = vmatpush2.bf16.msra.mxu0 0
      %1924 = vmatprep.subr.bf16.mxu0 0
      %1925 = vmatpush2.bf16.msra.mxu0 0
      %1926 = vmatprep.subr.bf16.mxu0 0
      %1927 = vmatpush2.bf16.msra.mxu0 0
      %1928 = vmatprep.mubr.bf16.mxu0 0
      %1929 = vmatmul.mubr.bf16.gmra.mxu0 %v1854
      %v1930 = vpop.f32.mrf.mxu0
      %v1931 = vadd.f32 %v1891, %v1930
      %v1932 = vpop.f32.mrf.mxu0
      %v1933 = vpop.f32.mrf.mxu0
      %v1934 = vpop.f32.mrf.mxu0
      %1935 = vdwg.mxu0
      %v1936 = vld [vmem:[%s10] sm:$0x1]
      %v1937 = vld [vmem:[%s11] sm:$0x1]
      %v1938 = vld [vmem:[%s12] sm:$0xff]
      %v1939 = vld [vmem:[%s12 + $0x8] sm:$0xff]
      %v1940 = vld [vmem:[%s12 + $0x10] sm:$0xff]
      %v1941 = vld [vmem:[%s12 + $0x18] sm:$0xff]
      %v1942 = vld [vmem:[%s12 + $0x20] sm:$0xff]
      %v1943 = vld [vmem:[%s12 + $0x28] sm:$0xff]
      %v1944 = vld [vmem:[%s12 + $0x30] sm:$0xff]
      %v1945 = vld [vmem:[%s12 + $0x38] sm:$0xff]
      %v1946 = vld [vmem:[%s12 + $0x40] sm:$0xff]
      %v1947 = vld [vmem:[%s12 + $0x48] sm:$0xff]
      %v1948 = vld [vmem:[%s12 + $0x50] sm:$0xff]
      %v1949 = vld [vmem:[%s12 + $0x58] sm:$0xff]
      %v1950 = vld [vmem:[%s13] sm:$0xff]
      %v1951 = vld [vmem:[%s13 + $0x8] sm:$0xff]
      %v1952 = vld [vmem:[%s13 + $0x10] sm:$0xff]
      %v1953 = vld [vmem:[%s13 + $0x18] sm:$0xff]
      %v1954 = vmul.f32 %v1931, %v1931
      %vm1955 = vcmask 780288
      %v1956 = vsel %vm1955, %v1931, 0.0
      %v1957 = vrot.slane %v1956, 4
      %v1958 = vadd.f32 %v1956, %v1957
      %v1959 = vrot.slane %v1958, 2
      %v1960 = vadd.f32 %v1958, %v1959
      %v1961 = vrot.slane %v1960, 1
      %v1962 = vadd.f32 %v1960, %v1961
      %v1963 = vsel %vm1955, %v1954, 0.0
      %v1964 = vrot.slane %v1963, 4
      %v1965 = vadd.f32 %v1963, %v1964
      %v1966 = vrot.slane %v1965, 2
      %v1967 = vadd.f32 %v1965, %v1966
      %v1968 = vrot.slane %v1967, 1
      %v1969 = vadd.f32 %v1967, %v1968
      %v1970 = vsel %vm698, %v1962, %v1969
      %v1972 = vsel %vm642, %v1970, 0
      %1974 = vmatprep.subr.mxu0 0.0
      %1975 = vmatpush1.msra.mxu0 0.0
      %1976 = vmatprep.subr.mxu0 0.0
      %1977 = vmatpush1.msra.mxu0 0.0
      %1978 = vmatprep.subr.mxu0 0.0
      %1979 = vmatpush1.msra.mxu0 0.0
      %1980 = vmatprep.subr.mxu0 0.0
      %1981 = vmatpush1.msra.mxu0 0.0
      %1982 = vmatprep.subr.mxu0 0.0
      %1983 = vmatpush1.msra.mxu0 %v1949
      %1984 = vmatprep.subr.mxu0 0.0
      %1985 = vmatpush1.msra.mxu0 %v1948
      %1986 = vmatprep.subr.mxu0 0.0
      %1987 = vmatpush1.msra.mxu0 %v1947
      %1988 = vmatprep.subr.mxu0 0.0
      %1989 = vmatpush1.msra.mxu0 %v1946
      %1990 = vmatprep.subr.mxu0 0.0
      %1991 = vmatpush1.msra.mxu0 %v1945
      %1992 = vmatprep.subr.mxu0 0.0
      %1993 = vmatpush1.msra.mxu0 %v1944
      %1994 = vmatprep.subr.mxu0 0.0
      %1995 = vmatpush1.msra.mxu0 %v1943
      %1996 = vmatprep.subr.mxu0 0.0
      %1997 = vmatpush1.msra.mxu0 %v1942
      %1998 = vmatprep.subr.mxu0 0.0
      %1999 = vmatpush1.msra.mxu0 %v1941
      %2000 = vmatprep.subr.mxu0 0.0
      %2001 = vmatpush1.msra.mxu0 %v1940
      %2002 = vmatprep.subr.mxu0 0.0
      %2003 = vmatpush1.msra.mxu0 %v1939
      %2004 = vmatprep.subr.mxu0 0.0
      %2005 = vmatpush1.msra.mxu0 %v1938
      %2006 = vmatprep.subr.mxu0 0.0
      %2007 = vmatpush2.msra.mxu0 0.0
      %2008 = vmatprep.subr.mxu0 0.0
      %2009 = vmatpush2.msra.mxu0 0.0
      %2010 = vmatprep.subr.mxu0 0.0
      %2011 = vmatpush2.msra.mxu0 0.0
      %2012 = vmatprep.subr.mxu0 0.0
      %2013 = vmatpush2.msra.mxu0 0.0
      %2014 = vmatprep.subr.mxu0 0.0
      %2015 = vmatpush2.msra.mxu0 0.0
      %2016 = vmatprep.subr.mxu0 0.0
      %2017 = vmatpush2.msra.mxu0 0.0
      %2018 = vmatprep.subr.mxu0 0.0
      %2019 = vmatpush2.msra.mxu0 0.0
      %2020 = vmatprep.subr.mxu0 0.0
      %2021 = vmatpush2.msra.mxu0 0.0
      %2022 = vmatprep.subr.mxu0 0.0
      %2023 = vmatpush2.msra.mxu0 0.0
      %2024 = vmatprep.subr.mxu0 0.0
      %2025 = vmatpush2.msra.mxu0 0.0
      %2026 = vmatprep.subr.mxu0 0.0
      %2027 = vmatpush2.msra.mxu0 0.0
      %2028 = vmatprep.subr.mxu0 0.0
      %2029 = vmatpush2.msra.mxu0 0.0
      %2030 = vmatprep.subr.mxu0 0.0
      %2031 = vmatpush2.msra.mxu0 0.0
      %2032 = vmatprep.subr.mxu0 0.0
      %2033 = vmatpush2.msra.mxu0 0.0
      %2034 = vmatprep.subr.mxu0 0.0
      %2035 = vmatpush2.msra.mxu0 0.0
      %2036 = vmatprep.subr.mxu0 0.0
      %2037 = vmatpush2.msra.mxu0 0.0
      %2038 = vmatprep.mubr.f32.mxu0 0.0
      %2039 = vmatmul.mubr.f32.gmra.mxu0 %v1972
      %v2040 = vpop.f32.mrf.mxu0
      %v2041 = vadd.f32 0.0, %v2040
      %v2042 = vpop.f32.mrf.mxu0
      %2043 = vdwg.mxu0
      %v2044 = vmul.f32 %v2041, 0.11111111
      %v2045 = vmul.f32 %v2044, %v2044
      %v2047 = vrot.slane %v2045, 7
      %v2049 = vsub.f32 %v2044, %v2047
      %v2050 = vmax.f32 %v2049, 0.0
      %v2051 = vadd.f32 %v2050, 1e-05
      %v2052 = vrsqrt.pop %v2051
      %v2055 = vunpack.c.l.s4 1966171168
      %v2056 = vunpack.c.0.s8 %v2055
      %v2057 = vlaneseq
      %v2058 = vshrl.u32 %v2057, 7
      %v2059 = vsub.s32 %v2056, %v2058
      %v2060 = vrot.slane %v2052, %v2059
      %v2061 = vcombine.high %v2060, %v2060
      %v2063 = vunpack.c.l.s4 1966171168
      %v2064 = vunpack.c.0.s8 %v2063
      %v2065 = vlaneseq
      %v2066 = vshrl.u32 %v2065, 7
      %v2067 = vsub.s32 %v2064, %v2066
      %v2068 = vrot.slane %v2061, %v2067
      %v2070 = vmul.f32 %v1936, %v2068
      %v2071 = vmul.f32 %v2044, %v2070
      %v2072 = vsub.f32 %v1937, %v2071
      %v2074 = vlaneseq
      %v2075 = vshrl.u32 %v2074, 7
      %v2076 = vsub.s32 0, %v2075
      %v2077 = vrot.slane %v2072, %v2076
      %v2079 = vsel %vm698, %v2070, %v2077
      %v2081 = vsel %vm1087, %v2079, 0
      %2083 = vmatprep.subr.mxu0 0.0
      %2084 = vmatpush1.msra.mxu0 0.0
      %2085 = vmatprep.subr.mxu0 0.0
      %2086 = vmatpush1.msra.mxu0 0.0
      %2087 = vmatprep.subr.mxu0 0.0
      %2088 = vmatpush1.msra.mxu0 0.0
      %2089 = vmatprep.subr.mxu0 0.0
      %2090 = vmatpush1.msra.mxu0 0.0
      %2091 = vmatprep.subr.mxu0 0.0
      %2092 = vmatpush1.msra.mxu0 0.0
      %2093 = vmatprep.subr.mxu0 0.0
      %2094 = vmatpush1.msra.mxu0 0.0
      %2095 = vmatprep.subr.mxu0 0.0
      %2096 = vmatpush1.msra.mxu0 0.0
      %2097 = vmatprep.subr.mxu0 0.0
      %2098 = vmatpush1.msra.mxu0 0.0
      %2099 = vmatprep.subr.mxu0 0.0
      %2100 = vmatpush1.msra.mxu0 0.0
      %2101 = vmatprep.subr.mxu0 0.0
      %2102 = vmatpush1.msra.mxu0 0.0
      %2103 = vmatprep.subr.mxu0 0.0
      %2104 = vmatpush1.msra.mxu0 0.0
      %2105 = vmatprep.subr.mxu0 0.0
      %2106 = vmatpush1.msra.mxu0 0.0
      %2107 = vmatprep.subr.mxu0 0.0
      %2108 = vmatpush1.msra.mxu0 %v1953
      %2109 = vmatprep.subr.mxu0 0.0
      %2110 = vmatpush1.msra.mxu0 %v1952
      %2111 = vmatprep.subr.mxu0 0.0
      %2112 = vmatpush1.msra.mxu0 %v1951
      %2113 = vmatprep.subr.mxu0 0.0
      %2114 = vmatpush1.msra.mxu0 %v1950
      %2115 = vmatprep.subr.mxu0 0.0
      %2116 = vmatpush2.msra.mxu0 0.0
      %2117 = vmatprep.subr.mxu0 0.0
      %2118 = vmatpush2.msra.mxu0 0.0
      %2119 = vmatprep.subr.mxu0 0.0
      %2120 = vmatpush2.msra.mxu0 0.0
      %2121 = vmatprep.subr.mxu0 0.0
      %2122 = vmatpush2.msra.mxu0 0.0
      %2123 = vmatprep.subr.mxu0 0.0
      %2124 = vmatpush2.msra.mxu0 0.0
      %2125 = vmatprep.subr.mxu0 0.0
      %2126 = vmatpush2.msra.mxu0 0.0
      %2127 = vmatprep.subr.mxu0 0.0
      %2128 = vmatpush2.msra.mxu0 0.0
      %2129 = vmatprep.subr.mxu0 0.0
      %2130 = vmatpush2.msra.mxu0 0.0
      %2131 = vmatprep.subr.mxu0 0.0
      %2132 = vmatpush2.msra.mxu0 0.0
      %2133 = vmatprep.subr.mxu0 0.0
      %2134 = vmatpush2.msra.mxu0 0.0
      %2135 = vmatprep.subr.mxu0 0.0
      %2136 = vmatpush2.msra.mxu0 0.0
      %2137 = vmatprep.subr.mxu0 0.0
      %2138 = vmatpush2.msra.mxu0 0.0
      %2139 = vmatprep.subr.mxu0 0.0
      %2140 = vmatpush2.msra.mxu0 0.0
      %2141 = vmatprep.subr.mxu0 0.0
      %2142 = vmatpush2.msra.mxu0 0.0
      %2143 = vmatprep.subr.mxu0 0.0
      %2144 = vmatpush2.msra.mxu0 0.0
      %2145 = vmatprep.subr.mxu0 0.0
      %2146 = vmatpush2.msra.mxu0 0.0
      %2147 = vmatprep.mubr.f32.mxu0 0.0
      %2148 = vmatmul.mubr.f32.gmra.mxu0 %v2081
      %v2149 = vpop.f32.mrf.mxu0
      %v2150 = vadd.f32 0.0, %v2149
      %v2151 = vpop.f32.mrf.mxu0
      %2152 = vdwg.mxu0
      %v2153 = vlaneseq
      %v2154 = vshrl.u32 %v2153, 7
      %v2155 = vsub.s32 0, %v2154
      %v2156 = vrot.slane %v2150, %v2155
      %v2157 = vmul.f32 %v1931, %v2156
      %v2158 = vlaneseq
      %v2159 = vshrl.u32 %v2158, 7
      %v2160 = vsub.s32 1, %v2159
      %v2161 = vrot.slane %v2150, %v2160
      %v2162 = vadd.f32 %v2157, %v2161
      %vm2163 = vcmp.gt.f32.partialorder %v2162, 0.0
      %v2164 = vmul.f32 %v2162, 0.2
      %v2165 = vsel %vm2163, %v2162, %v2164
      %2166 = vst.msk [vmem:[#allocation4 + $0x2] sm:$0x7] %vm1955, %v2165
      %v2168 = vrot.slane %v1931, 3
      %v2170 = vsel %vm1955, %v2168, 0.0
      %v2171 = vrot.slane %v2170, 4
      %v2172 = vadd.f32 %v2170, %v2171
      %v2173 = vrot.slane %v2172, 2
      %v2174 = vadd.f32 %v2172, %v2173
      %v2175 = vrot.slane %v2174, 1
      %v2176 = vadd.f32 %v2174, %v2175
      %v2178 = vrot.slane %v1954, 3
      %v2180 = vsel %vm1955, %v2178, 0.0
      %v2181 = vrot.slane %v2180, 4
      %v2182 = vadd.f32 %v2180, %v2181
      %v2183 = vrot.slane %v2182, 2
      %v2184 = vadd.f32 %v2182, %v2183
      %v2185 = vrot.slane %v2184, 1
      %v2186 = vadd.f32 %v2184, %v2185
      %v2187 = vsel %vm698, %v2176, %v2186
      %v2189 = vsel %vm642, %v2187, 0
      %2191 = vmatprep.subr.mxu0 0.0
      %2192 = vmatpush1.msra.mxu0 0.0
      %2193 = vmatprep.subr.mxu0 0.0
      %2194 = vmatpush1.msra.mxu0 0.0
      %2195 = vmatprep.subr.mxu0 0.0
      %2196 = vmatpush1.msra.mxu0 0.0
      %2197 = vmatprep.subr.mxu0 0.0
      %2198 = vmatpush1.msra.mxu0 0.0
      %2199 = vmatprep.subr.mxu0 0.0
      %2200 = vmatpush1.msra.mxu0 %v1949
      %2201 = vmatprep.subr.mxu0 0.0
      %2202 = vmatpush1.msra.mxu0 %v1948
      %2203 = vmatprep.subr.mxu0 0.0
      %2204 = vmatpush1.msra.mxu0 %v1947
      %2205 = vmatprep.subr.mxu0 0.0
      %2206 = vmatpush1.msra.mxu0 %v1946
      %2207 = vmatprep.subr.mxu0 0.0
      %2208 = vmatpush1.msra.mxu0 %v1945
      %2209 = vmatprep.subr.mxu0 0.0
      %2210 = vmatpush1.msra.mxu0 %v1944
      %2211 = vmatprep.subr.mxu0 0.0
      %2212 = vmatpush1.msra.mxu0 %v1943
      %2213 = vmatprep.subr.mxu0 0.0
      %2214 = vmatpush1.msra.mxu0 %v1942
      %2215 = vmatprep.subr.mxu0 0.0
      %2216 = vmatpush1.msra.mxu0 %v1941
      %2217 = vmatprep.subr.mxu0 0.0
      %2218 = vmatpush1.msra.mxu0 %v1940
      %2219 = vmatprep.subr.mxu0 0.0
      %2220 = vmatpush1.msra.mxu0 %v1939
      %2221 = vmatprep.subr.mxu0 0.0
      %2222 = vmatpush1.msra.mxu0 %v1938
      %2223 = vmatprep.subr.mxu0 0.0
      %2224 = vmatpush2.msra.mxu0 0.0
      %2225 = vmatprep.subr.mxu0 0.0
      %2226 = vmatpush2.msra.mxu0 0.0
      %2227 = vmatprep.subr.mxu0 0.0
      %2228 = vmatpush2.msra.mxu0 0.0
      %2229 = vmatprep.subr.mxu0 0.0
      %2230 = vmatpush2.msra.mxu0 0.0
      %2231 = vmatprep.subr.mxu0 0.0
      %2232 = vmatpush2.msra.mxu0 0.0
      %2233 = vmatprep.subr.mxu0 0.0
      %2234 = vmatpush2.msra.mxu0 0.0
      %2235 = vmatprep.subr.mxu0 0.0
      %2236 = vmatpush2.msra.mxu0 0.0
      %2237 = vmatprep.subr.mxu0 0.0
      %2238 = vmatpush2.msra.mxu0 0.0
      %2239 = vmatprep.subr.mxu0 0.0
      %2240 = vmatpush2.msra.mxu0 0.0
      %2241 = vmatprep.subr.mxu0 0.0
      %2242 = vmatpush2.msra.mxu0 0.0
      %2243 = vmatprep.subr.mxu0 0.0
      %2244 = vmatpush2.msra.mxu0 0.0
      %2245 = vmatprep.subr.mxu0 0.0
      %2246 = vmatpush2.msra.mxu0 0.0
      %2247 = vmatprep.subr.mxu0 0.0
      %2248 = vmatpush2.msra.mxu0 0.0
      %2249 = vmatprep.subr.mxu0 0.0
      %2250 = vmatpush2.msra.mxu0 0.0
      %2251 = vmatprep.subr.mxu0 0.0
      %2252 = vmatpush2.msra.mxu0 0.0
      %2253 = vmatprep.subr.mxu0 0.0
      %2254 = vmatpush2.msra.mxu0 0.0
      %2255 = vmatprep.mubr.f32.mxu0 0.0
      %2256 = vmatmul.mubr.f32.gmra.mxu0 %v2189
      %v2257 = vpop.f32.mrf.mxu0
      %v2258 = vadd.f32 0.0, %v2257
      %v2259 = vpop.f32.mrf.mxu0
      %2260 = vdwg.mxu0
      %v2261 = vmul.f32 %v2258, 0.11111111
      %v2262 = vmul.f32 %v2261, %v2261
      %v2264 = vrot.slane %v2262, 7
      %v2266 = vsub.f32 %v2261, %v2264
      %v2267 = vmax.f32 %v2266, 0.0
      %v2268 = vadd.f32 %v2267, 1e-05
      %v2269 = vrsqrt.pop %v2268
      %v2272 = vunpack.c.l.s4 1966171168
      %v2273 = vunpack.c.0.s8 %v2272
      %v2274 = vlaneseq
      %v2275 = vshrl.u32 %v2274, 7
      %v2276 = vsub.s32 %v2273, %v2275
      %v2277 = vrot.slane %v2269, %v2276
      %v2278 = vcombine.high %v2277, %v2277
      %v2280 = vunpack.c.l.s4 1966171168
      %v2281 = vunpack.c.0.s8 %v2280
      %v2282 = vlaneseq
      %v2283 = vshrl.u32 %v2282, 7
      %v2284 = vsub.s32 %v2281, %v2283
      %v2285 = vrot.slane %v2278, %v2284
      %v2287 = vmul.f32 %v1936, %v2285
      %v2288 = vmul.f32 %v2261, %v2287
      %v2289 = vsub.f32 %v1937, %v2288
      %v2291 = vlaneseq
      %v2292 = vshrl.u32 %v2291, 7
      %v2293 = vsub.s32 0, %v2292
      %v2294 = vrot.slane %v2289, %v2293
      %v2296 = vsel %vm698, %v2287, %v2294
      %v2298 = vsel %vm1087, %v2296, 0
      %2300 = vmatprep.subr.mxu0 0.0
      %2301 = vmatpush1.msra.mxu0 0.0
      %2302 = vmatprep.subr.mxu0 0.0
      %2303 = vmatpush1.msra.mxu0 0.0
      %2304 = vmatprep.subr.mxu0 0.0
      %2305 = vmatpush1.msra.mxu0 0.0
      %2306 = vmatprep.subr.mxu0 0.0
      %2307 = vmatpush1.msra.mxu0 0.0
      %2308 = vmatprep.subr.mxu0 0.0
      %2309 = vmatpush1.msra.mxu0 0.0
      %2310 = vmatprep.subr.mxu0 0.0
      %2311 = vmatpush1.msra.mxu0 0.0
      %2312 = vmatprep.subr.mxu0 0.0
      %2313 = vmatpush1.msra.mxu0 0.0
      %2314 = vmatprep.subr.mxu0 0.0
      %2315 = vmatpush1.msra.mxu0 0.0
      %2316 = vmatprep.subr.mxu0 0.0
      %2317 = vmatpush1.msra.mxu0 0.0
      %2318 = vmatprep.subr.mxu0 0.0
      %2319 = vmatpush1.msra.mxu0 0.0
      %2320 = vmatprep.subr.mxu0 0.0
      %2321 = vmatpush1.msra.mxu0 0.0
      %2322 = vmatprep.subr.mxu0 0.0
      %2323 = vmatpush1.msra.mxu0 0.0
      %2324 = vmatprep.subr.mxu0 0.0
      %2325 = vmatpush1.msra.mxu0 %v1953
      %2326 = vmatprep.subr.mxu0 0.0
      %2327 = vmatpush1.msra.mxu0 %v1952
      %2328 = vmatprep.subr.mxu0 0.0
      %2329 = vmatpush1.msra.mxu0 %v1951
      %2330 = vmatprep.subr.mxu0 0.0
      %2331 = vmatpush1.msra.mxu0 %v1950
      %2332 = vmatprep.subr.mxu0 0.0
      %2333 = vmatpush2.msra.mxu0 0.0
      %2334 = vmatprep.subr.mxu0 0.0
      %2335 = vmatpush2.msra.mxu0 0.0
      %2336 = vmatprep.subr.mxu0 0.0
      %2337 = vmatpush2.msra.mxu0 0.0
      %2338 = vmatprep.subr.mxu0 0.0
      %2339 = vmatpush2.msra.mxu0 0.0
      %2340 = vmatprep.subr.mxu0 0.0
      %2341 = vmatpush2.msra.mxu0 0.0
      %2342 = vmatprep.subr.mxu0 0.0
      %2343 = vmatpush2.msra.mxu0 0.0
      %2344 = vmatprep.subr.mxu0 0.0
      %2345 = vmatpush2.msra.mxu0 0.0
      %2346 = vmatprep.subr.mxu0 0.0
      %2347 = vmatpush2.msra.mxu0 0.0
      %2348 = vmatprep.subr.mxu0 0.0
      %2349 = vmatpush2.msra.mxu0 0.0
      %2350 = vmatprep.subr.mxu0 0.0
      %2351 = vmatpush2.msra.mxu0 0.0
      %2352 = vmatprep.subr.mxu0 0.0
      %2353 = vmatpush2.msra.mxu0 0.0
      %2354 = vmatprep.subr.mxu0 0.0
      %2355 = vmatpush2.msra.mxu0 0.0
      %2356 = vmatprep.subr.mxu0 0.0
      %2357 = vmatpush2.msra.mxu0 0.0
      %2358 = vmatprep.subr.mxu0 0.0
      %2359 = vmatpush2.msra.mxu0 0.0
      %2360 = vmatprep.subr.mxu0 0.0
      %2361 = vmatpush2.msra.mxu0 0.0
      %2362 = vmatprep.subr.mxu0 0.0
      %2363 = vmatpush2.msra.mxu0 0.0
      %2364 = vmatprep.mubr.f32.mxu0 0.0
      %2365 = vmatmul.mubr.f32.gmra.mxu0 %v2298
      %v2366 = vpop.f32.mrf.mxu0
      %v2367 = vadd.f32 0.0, %v2366
      %v2368 = vpop.f32.mrf.mxu0
      %2369 = vdwg.mxu0
      %v2370 = vlaneseq
      %v2371 = vshrl.u32 %v2370, 7
      %v2372 = vsub.s32 0, %v2371
      %v2373 = vrot.slane %v2367, %v2372
      %v2374 = vmul.f32 %v1931, %v2373
      %v2375 = vlaneseq
      %v2376 = vshrl.u32 %v2375, 7
      %v2377 = vsub.s32 1, %v2376
      %v2378 = vrot.slane %v2367, %v2377
      %v2379 = vadd.f32 %v2374, %v2378
      %vm2380 = vcmp.gt.f32.partialorder %v2379, 0.0
      %v2381 = vmul.f32 %v2379, 0.2
      %v2382 = vsel %vm2380, %v2379, %v2381
      %vm2383 = vcmask 783363
      %2384 = vst.msk [vmem:[#allocation4 + $0x6] sm:$0x38] %vm2383, %v2382
      %v2385 = vld [vmem:[#allocation4] sm:$0xf]
      %v2386 = vld [vmem:[#allocation4 + $0x1] sm:$0xf]
      %v2387 = vld [vmem:[#allocation4 + $0x2] sm:$0xf]
      %v2388 = vld [vmem:[#allocation4 + $0x3] sm:$0xf]
      %2390 = vrot.lane.b32.xlu0 %v2386, 96
      %v2391 = vpop.permute.xlu0 %2390
      %2394 = vrot.lane.b32.xlu0 %v2387, 64
      %v2395 = vpop.permute.xlu0 %2394
      %2398 = vrot.lane.b32.xlu0 %v2388, 32
      %v2399 = vpop.permute.xlu0 %2398
      %v2401 = vsel %vm642, %v2385, %v2391
      %v2402 = vsel %vm811, %v2391, %v2395
      %v2403 = vsel %vm1087, %v2395, %v2399
      %v2404 = vld [vmem:[#allocation4 + $0x7] sm:$0xf]
      %v2405 = vld [vmem:[#allocation4 + $0x8] sm:$0xf]
      %v2406 = vld [vmem:[#allocation4 + $0x9] sm:$0xf]
      %v2407 = vld [vmem:[#allocation4 + $0xa] sm:$0xf]
      %2409 = vrot.lane.b32.xlu0 %v2405, 96
      %v2410 = vpop.permute.xlu0 %2409
      %2413 = vrot.lane.b32.xlu0 %v2406, 64
      %v2414 = vpop.permute.xlu0 %2413
      %2417 = vrot.lane.b32.xlu0 %v2407, 32
      %v2418 = vpop.permute.xlu0 %2417
      %v2420 = vsel %vm642, %v2404, %v2410
      %v2421 = vsel %vm811, %v2410, %v2414
      %v2422 = vsel %vm1087, %v2414, %v2418
      %v2426 = vrot.slane %v2420, 4
      %v2427 = vrot.slane %v2421, 4
      %v2428 = vrot.slane %v2422, 4
      %vm2432 = vcmask 1043456
      %v2433 = vsel %vm2432, %v2401, %v2426
      %v2434 = vsel %vm2432, %v2402, %v2427
      %v2435 = vsel %vm2432, %v2403, %v2428
      %v2436 = vpack.c.bf16 %v2433, %v2433
      %v2437 = vpack.c.bf16 %v2434, %v2434
      %v2438 = vpack.c.bf16 %v2435, %v2435
      %v2439 = vld [vmem:[%s4] sm:$0xff]
      %v2440 = vld [vmem:[%s4 + $0x8] sm:$0xff]
      %v2441 = vld [vmem:[%s4 + $0x10] sm:$0xff]
      %v2442 = vld [vmem:[%s4 + $0x18] sm:$0xff]
      %v2443 = vld [vmem:[%s4 + $0x20] sm:$0xff]
      %v2444 = vld [vmem:[%s4 + $0x28] sm:$0xff]
      %v2445 = vld [vmem:[%s4 + $0x30] sm:$0xff]
      %v2446 = vld [vmem:[%s4 + $0x38] sm:$0xff]
      %v2447 = vld [vmem:[%s4 + $0x40] sm:$0xff]
      %v2448 = vld [vmem:[%s4 + $0x48] sm:$0xff]
      %v2449 = vld [vmem:[%s4 + $0x50] sm:$0xff]
      %v2450 = vld [vmem:[%s4 + $0x58] sm:$0xff]
      %v2451 = vld [vmem:[%s4 + $0x60] sm:$0xff]
      %v2452 = vld [vmem:[%s4 + $0x68] sm:$0xff]
      %v2453 = vld [vmem:[%s4 + $0x70] sm:$0xff]
      %v2454 = vld [vmem:[%s4 + $0x78] sm:$0xff]
      %v2455 = vld [vmem:[%s4 + $0x80] sm:$0xff]
      %v2456 = vld [vmem:[%s4 + $0x88] sm:$0xff]
      %v2457 = vld [vmem:[%s4 + $0x90] sm:$0xff]
      %v2458 = vld [vmem:[%s4 + $0x98] sm:$0xff]
      %v2459 = vld [vmem:[%s4 + $0xa0] sm:$0xff]
      %v2460 = vld [vmem:[%s4 + $0xa8] sm:$0xff]
      %v2461 = vld [vmem:[%s4 + $0xb0] sm:$0xff]
      %v2462 = vld [vmem:[%s4 + $0xb8] sm:$0xff]
      %v2463 = vld [vmem:[%s4 + $0xc0] sm:$0xff]
      %v2464 = vld [vmem:[%s4 + $0xc8] sm:$0xff]
      %v2465 = vld [vmem:[%s4 + $0xd0] sm:$0xff]
      %v2466 = vld [vmem:[%s4 + $0xd8] sm:$0xff]
      %v2467 = vld [vmem:[%s4 + $0xe0] sm:$0xff]
      %v2468 = vld [vmem:[%s4 + $0xe8] sm:$0xff]
      %v2469 = vld [vmem:[%s4 + $0xf0] sm:$0xff]
      %v2470 = vld [vmem:[%s4 + $0xf8] sm:$0xff]
      %v2471 = vld [vmem:[%s4 + $0x100] sm:$0xff]
      %v2472 = vld [vmem:[%s4 + $0x108] sm:$0xff]
      %v2473 = vld [vmem:[%s4 + $0x110] sm:$0xff]
      %v2474 = vld [vmem:[%s4 + $0x118] sm:$0xff]
      %v2475 = vld [vmem:[%s4 + $0x120] sm:$0xff]
      %v2476 = vld [vmem:[%s4 + $0x128] sm:$0xff]
      %v2477 = vld [vmem:[%s4 + $0x130] sm:$0xff]
      %v2478 = vld [vmem:[%s4 + $0x138] sm:$0xff]
      %v2479 = vld [vmem:[%s4 + $0x140] sm:$0xff]
      %v2480 = vld [vmem:[%s4 + $0x148] sm:$0xff]
      %v2481 = vld [vmem:[%s4 + $0x150] sm:$0xff]
      %v2482 = vld [vmem:[%s4 + $0x158] sm:$0xff]
      %v2483 = vld [vmem:[%s4 + $0x160] sm:$0xff]
      %v2484 = vld [vmem:[%s4 + $0x168] sm:$0xff]
      %v2485 = vld [vmem:[%s4 + $0x170] sm:$0xff]
      %v2486 = vld [vmem:[%s4 + $0x178] sm:$0xff]
      %v2535 = vunpack.c.l.b16 %v2439
      %v2536 = vunpack.c.h.b16 %v2439
      %v2537 = vunpack.c.l.b16 %v2440
      %v2538 = vunpack.c.h.b16 %v2440
      %v2539 = vunpack.c.l.b16 %v2441
      %v2540 = vunpack.c.h.b16 %v2441
      %v2541 = vunpack.c.l.b16 %v2442
      %v2542 = vunpack.c.h.b16 %v2442
      %v2543 = vunpack.c.l.b16 %v2443
      %v2544 = vunpack.c.h.b16 %v2443
      %v2545 = vunpack.c.l.b16 %v2444
      %v2546 = vunpack.c.h.b16 %v2444
      %v2547 = vunpack.c.l.b16 %v2445
      %v2548 = vunpack.c.h.b16 %v2445
      %v2549 = vunpack.c.l.b16 %v2446
      %v2550 = vunpack.c.h.b16 %v2446
      %v2551 = vunpack.c.l.b16 %v2447
      %v2552 = vunpack.c.h.b16 %v2447
      %v2553 = vunpack.c.l.b16 %v2448
      %v2554 = vunpack.c.h.b16 %v2448
      %v2555 = vunpack.c.l.b16 %v2449
      %v2556 = vunpack.c.h.b16 %v2449
      %v2557 = vunpack.c.l.b16 %v2450
      %v2558 = vunpack.c.h.b16 %v2450
      %v2559 = vunpack.c.l.b16 %v2451
      %v2560 = vunpack.c.h.b16 %v2451
      %v2561 = vunpack.c.l.b16 %v2452
      %v2562 = vunpack.c.h.b16 %v2452
      %v2563 = vunpack.c.l.b16 %v2453
      %v2564 = vunpack.c.h.b16 %v2453
      %v2565 = vunpack.c.l.b16 %v2454
      %v2566 = vunpack.c.h.b16 %v2454
      %v2567 = vunpack.c.l.b16 %v2455
      %v2568 = vunpack.c.h.b16 %v2455
      %v2569 = vunpack.c.l.b16 %v2456
      %v2570 = vunpack.c.h.b16 %v2456
      %v2571 = vunpack.c.l.b16 %v2457
      %v2572 = vunpack.c.h.b16 %v2457
      %v2573 = vunpack.c.l.b16 %v2458
      %v2574 = vunpack.c.h.b16 %v2458
      %v2575 = vunpack.c.l.b16 %v2459
      %v2576 = vunpack.c.h.b16 %v2459
      %v2577 = vunpack.c.l.b16 %v2460
      %v2578 = vunpack.c.h.b16 %v2460
      %v2579 = vunpack.c.l.b16 %v2461
      %v2580 = vunpack.c.h.b16 %v2461
      %v2581 = vunpack.c.l.b16 %v2462
      %v2582 = vunpack.c.h.b16 %v2462
      %v2583 = vunpack.c.l.b16 %v2463
      %v2584 = vunpack.c.h.b16 %v2463
      %v2585 = vunpack.c.l.b16 %v2464
      %v2586 = vunpack.c.h.b16 %v2464
      %v2587 = vunpack.c.l.b16 %v2465
      %v2588 = vunpack.c.h.b16 %v2465
      %v2589 = vunpack.c.l.b16 %v2466
      %v2590 = vunpack.c.h.b16 %v2466
      %v2591 = vunpack.c.l.b16 %v2467
      %v2592 = vunpack.c.h.b16 %v2467
      %v2593 = vunpack.c.l.b16 %v2468
      %v2594 = vunpack.c.h.b16 %v2468
      %v2595 = vunpack.c.l.b16 %v2469
      %v2596 = vunpack.c.h.b16 %v2469
      %v2597 = vunpack.c.l.b16 %v2470
      %v2598 = vunpack.c.h.b16 %v2470
      %v2599 = vunpack.c.l.b16 %v2471
      %v2600 = vunpack.c.h.b16 %v2471
      %v2601 = vunpack.c.l.b16 %v2472
      %v2602 = vunpack.c.h.b16 %v2472
      %v2603 = vunpack.c.l.b16 %v2473
      %v2604 = vunpack.c.h.b16 %v2473
      %v2605 = vunpack.c.l.b16 %v2474
      %v2606 = vunpack.c.h.b16 %v2474
      %v2607 = vunpack.c.l.b16 %v2475
      %v2608 = vunpack.c.h.b16 %v2475
      %v2609 = vunpack.c.l.b16 %v2476
      %v2610 = vunpack.c.h.b16 %v2476
      %v2611 = vunpack.c.l.b16 %v2477
      %v2612 = vunpack.c.h.b16 %v2477
      %v2613 = vunpack.c.l.b16 %v2478
      %v2614 = vunpack.c.h.b16 %v2478
      %v2615 = vunpack.c.l.b16 %v2479
      %v2616 = vunpack.c.h.b16 %v2479
      %v2617 = vunpack.c.l.b16 %v2480
      %v2618 = vunpack.c.h.b16 %v2480
      %v2619 = vunpack.c.l.b16 %v2481
      %v2620 = vunpack.c.h.b16 %v2481
      %v2621 = vunpack.c.l.b16 %v2482
      %v2622 = vunpack.c.h.b16 %v2482
      %v2623 = vunpack.c.l.b16 %v2483
      %v2624 = vunpack.c.h.b16 %v2483
      %v2625 = vunpack.c.l.b16 %v2484
      %v2626 = vunpack.c.h.b16 %v2484
      %v2627 = vunpack.c.l.b16 %v2485
      %v2628 = vunpack.c.h.b16 %v2485
      %v2629 = vunpack.c.l.b16 %v2486
      %v2630 = vunpack.c.h.b16 %v2486
      %v2631 = vpack.c.b16 %v2537, %v2535
      %v2632 = vpack.c.b16 %v2538, %v2536
      %v2633 = vpack.c.b16 %v2541, %v2539
      %v2634 = vpack.c.b16 %v2542, %v2540
      %v2635 = vpack.c.b16 %v2545, %v2543
      %v2636 = vpack.c.b16 %v2546, %v2544
      %v2637 = vpack.c.b16 %v2549, %v2547
      %v2638 = vpack.c.b16 %v2550, %v2548
      %v2639 = vpack.c.b16 %v2553, %v2551
      %v2640 = vpack.c.b16 %v2554, %v2552
      %v2641 = vpack.c.b16 %v2557, %v2555
      %v2642 = vpack.c.b16 %v2558, %v2556
      %v2643 = vpack.c.b16 %v2561, %v2559
      %v2644 = vpack.c.b16 %v2562, %v2560
      %v2645 = vpack.c.b16 %v2565, %v2563
      %v2646 = vpack.c.b16 %v2566, %v2564
      %v2647 = vpack.c.b16 %v2569, %v2567
      %v2648 = vpack.c.b16 %v2570, %v2568
      %v2649 = vpack.c.b16 %v2573, %v2571
      %v2650 = vpack.c.b16 %v2574, %v2572
      %v2651 = vpack.c.b16 %v2577, %v2575
      %v2652 = vpack.c.b16 %v2578, %v2576
      %v2653 = vpack.c.b16 %v2581, %v2579
      %v2654 = vpack.c.b16 %v2582, %v2580
      %v2655 = vpack.c.b16 %v2585, %v2583
      %v2656 = vpack.c.b16 %v2586, %v2584
      %v2657 = vpack.c.b16 %v2589, %v2587
      %v2658 = vpack.c.b16 %v2590, %v2588
      %v2659 = vpack.c.b16 %v2593, %v2591
      %v2660 = vpack.c.b16 %v2594, %v2592
      %v2661 = vpack.c.b16 %v2597, %v2595
      %v2662 = vpack.c.b16 %v2598, %v2596
      %v2663 = vpack.c.b16 %v2601, %v2599
      %v2664 = vpack.c.b16 %v2602, %v2600
      %v2665 = vpack.c.b16 %v2605, %v2603
      %v2666 = vpack.c.b16 %v2606, %v2604
      %v2667 = vpack.c.b16 %v2609, %v2607
      %v2668 = vpack.c.b16 %v2610, %v2608
      %v2669 = vpack.c.b16 %v2613, %v2611
      %v2670 = vpack.c.b16 %v2614, %v2612
      %v2671 = vpack.c.b16 %v2617, %v2615
      %v2672 = vpack.c.b16 %v2618, %v2616
      %v2673 = vpack.c.b16 %v2621, %v2619
      %v2674 = vpack.c.b16 %v2622, %v2620
      %v2675 = vpack.c.b16 %v2625, %v2623
      %v2676 = vpack.c.b16 %v2626, %v2624
      %v2677 = vpack.c.b16 %v2629, %v2627
      %v2678 = vpack.c.b16 %v2630, %v2628
      %2727 = vmatprep.subr.bf16.mxu0 %v2646
      %2728 = vmatpush1.bf16.msra.mxu0 %v2645
      %2729 = vmatprep.subr.bf16.mxu0 %v2644
      %2730 = vmatpush1.bf16.msra.mxu0 %v2643
      %2731 = vmatprep.subr.bf16.mxu0 %v2642
      %2732 = vmatpush1.bf16.msra.mxu0 %v2641
      %2733 = vmatprep.subr.bf16.mxu0 %v2640
      %2734 = vmatpush1.bf16.msra.mxu0 %v2639
      %2735 = vmatprep.subr.bf16.mxu0 %v2638
      %2736 = vmatpush1.bf16.msra.mxu0 %v2637
      %2737 = vmatprep.subr.bf16.mxu0 %v2636
      %2738 = vmatpush1.bf16.msra.mxu0 %v2635
      %2739 = vmatprep.subr.bf16.mxu0 %v2634
      %2740 = vmatpush1.bf16.msra.mxu0 %v2633
      %2741 = vmatprep.subr.bf16.mxu0 %v2632
      %2742 = vmatpush1.bf16.msra.mxu0 %v2631
      %2743 = vmatprep.subr.bf16.mxu0 %v2662
      %2744 = vmatpush2.bf16.msra.mxu0 %v2661
      %2745 = vmatprep.subr.bf16.mxu0 %v2660
      %2746 = vmatpush2.bf16.msra.mxu0 %v2659
      %2747 = vmatprep.subr.bf16.mxu0 %v2658
      %2748 = vmatpush2.bf16.msra.mxu0 %v2657
      %2749 = vmatprep.subr.bf16.mxu0 %v2656
      %2750 = vmatpush2.bf16.msra.mxu0 %v2655
      %2751 = vmatprep.subr.bf16.mxu0 %v2654
      %2752 = vmatpush2.bf16.msra.mxu0 %v2653
      %2753 = vmatprep.subr.bf16.mxu0 %v2652
      %2754 = vmatpush2.bf16.msra.mxu0 %v2651
      %2755 = vmatprep.subr.bf16.mxu0 %v2650
      %2756 = vmatpush2.bf16.msra.mxu0 %v2649
      %2757 = vmatprep.subr.bf16.mxu0 %v2648
      %2758 = vmatpush2.bf16.msra.mxu0 %v2647
      %2759 = vmatprep.mubr.bf16.mxu0 %v2437
      %2760 = vmatmul.mubr.bf16.gmra.mxu0 %v2436
      %v2761 = vpop.f32.mrf.mxu0
      %v2762 = vadd.f32 0.0, %v2761
      %v2763 = vpop.f32.mrf.mxu0
      %v2764 = vadd.f32 0.0, %v2763
      %v2765 = vpop.f32.mrf.mxu0
      %v2766 = vpop.f32.mrf.mxu0
      %2767 = vdwg.mxu0
      %2768 = vmatprep.subr.bf16.mxu0 %v2678
      %2769 = vmatpush1.bf16.msra.mxu0 %v2677
      %2770 = vmatprep.subr.bf16.mxu0 %v2676
      %2771 = vmatpush1.bf16.msra.mxu0 %v2675
      %2772 = vmatprep.subr.bf16.mxu0 %v2674
      %2773 = vmatpush1.bf16.msra.mxu0 %v2673
      %2774 = vmatprep.subr.bf16.mxu0 %v2672
      %2775 = vmatpush1.bf16.msra.mxu0 %v2671
      %2776 = vmatprep.subr.bf16.mxu0 %v2670
      %2777 = vmatpush1.bf16.msra.mxu0 %v2669
      %2778 = vmatprep.subr.bf16.mxu0 %v2668
      %2779 = vmatpush1.bf16.msra.mxu0 %v2667
      %2780 = vmatprep.subr.bf16.mxu0 %v2666
      %2781 = vmatpush1.bf16.msra.mxu0 %v2665
      %2782 = vmatprep.subr.bf16.mxu0 %v2664
      %2783 = vmatpush1.bf16.msra.mxu0 %v2663
      %2784 = vmatprep.subr.bf16.mxu0 0
      %2785 = vmatpush2.bf16.msra.mxu0 0
      %2786 = vmatprep.subr.bf16.mxu0 0
      %2787 = vmatpush2.bf16.msra.mxu0 0
      %2788 = vmatprep.subr.bf16.mxu0 0
      %2789 = vmatpush2.bf16.msra.mxu0 0
      %2790 = vmatprep.subr.bf16.mxu0 0
      %2791 = vmatpush2.bf16.msra.mxu0 0
      %2792 = vmatprep.subr.bf16.mxu0 0
      %2793 = vmatpush2.bf16.msra.mxu0 0
      %2794 = vmatprep.subr.bf16.mxu0 0
      %2795 = vmatpush2.bf16.msra.mxu0 0
      %2796 = vmatprep.subr.bf16.mxu0 0
      %2797 = vmatpush2.bf16.msra.mxu0 0
      %2798 = vmatprep.subr.bf16.mxu0 0
      %2799 = vmatpush2.bf16.msra.mxu0 0
      %2800 = vmatprep.mubr.bf16.mxu0 0
      %2801 = vmatmul.mubr.bf16.gmra.mxu0 %v2438
      %v2802 = vpop.f32.mrf.mxu0
      %v2803 = vadd.f32 %v2762, %v2802
      %v2804 = vpop.f32.mrf.mxu0
      %v2805 = vadd.f32 %v2764, %v2804
      %v2806 = vpop.f32.mrf.mxu0
      %v2807 = vpop.f32.mrf.mxu0
      %2808 = vdwg.mxu0
      %v2809 = vld [vmem:[%s14] sm:$0x1]
      %v2810 = vld [vmem:[%s15] sm:$0x1]
      %v2811 = vld [vmem:[%s16] sm:$0xff]
      %v2812 = vld [vmem:[%s16 + $0x8] sm:$0xff]
      %v2813 = vld [vmem:[%s16 + $0x10] sm:$0xff]
      %v2814 = vld [vmem:[%s16 + $0x18] sm:$0xff]
      %v2815 = vld [vmem:[%s16 + $0x20] sm:$0xff]
      %v2816 = vld [vmem:[%s16 + $0x28] sm:$0xff]
      %v2817 = vld [vmem:[%s16 + $0x30] sm:$0xff]
      %v2818 = vld [vmem:[%s16 + $0x38] sm:$0xff]
      %v2819 = vld [vmem:[%s16 + $0x40] sm:$0xff]
      %v2820 = vld [vmem:[%s16 + $0x48] sm:$0xff]
      %v2821 = vld [vmem:[%s16 + $0x50] sm:$0xff]
      %v2822 = vld [vmem:[%s16 + $0x58] sm:$0xff]
      %v2823 = vld [vmem:[%s16 + $0x60] sm:$0xff]
      %v2824 = vld [vmem:[%s16 + $0x68] sm:$0xff]
      %v2825 = vld [vmem:[%s16 + $0x70] sm:$0xff]
      %v2826 = vld [vmem:[%s16 + $0x78] sm:$0xff]
      %v2827 = vld [vmem:[%s16 + $0x80] sm:$0xff]
      %v2828 = vld [vmem:[%s16 + $0x88] sm:$0xff]
      %v2829 = vld [vmem:[%s16 + $0x90] sm:$0xff]
      %v2830 = vld [vmem:[%s16 + $0x98] sm:$0xff]
      %v2831 = vld [vmem:[%s16 + $0xa0] sm:$0xff]
      %v2832 = vld [vmem:[%s16 + $0xa8] sm:$0xff]
      %v2833 = vld [vmem:[%s16 + $0xb0] sm:$0xff]
      %v2834 = vld [vmem:[%s16 + $0xb8] sm:$0xff]
      %v2835 = vld [vmem:[%s16 + $0xc0] sm:$0xff]
      %v2836 = vld [vmem:[%s16 + $0xc8] sm:$0xff]
      %v2837 = vld [vmem:[%s16 + $0xd0] sm:$0xff]
      %v2838 = vld [vmem:[%s16 + $0xd8] sm:$0xff]
      %v2839 = vld [vmem:[%s16 + $0xe0] sm:$0xff]
      %v2840 = vld [vmem:[%s16 + $0xe8] sm:$0xff]
      %v2841 = vld [vmem:[%s16 + $0xf0] sm:$0xff]
      %v2842 = vld [vmem:[%s16 + $0xf8] sm:$0xff]
      %v2843 = vld [vmem:[%s17] sm:$0xff]
      %v2844 = vld [vmem:[%s17 + $0x8] sm:$0xff]
      %v2845 = vld [vmem:[%s17 + $0x10] sm:$0xff]
      %v2846 = vld [vmem:[%s17 + $0x18] sm:$0xff]
      %v2847 = vld [vmem:[%s17 + $0x20] sm:$0xff]
      %v2848 = vld [vmem:[%s17 + $0x28] sm:$0xff]
      %v2849 = vld [vmem:[%s17 + $0x30] sm:$0xff]
      %v2850 = vld [vmem:[%s17 + $0x38] sm:$0xff]
      %v2851 = vld [vmem:[%s17 + $0x40] sm:$0xff]
      %v2852 = vld [vmem:[%s17 + $0x48] sm:$0xff]
      %v2853 = vld [vmem:[%s17 + $0x50] sm:$0xff]
      %v2854 = vld [vmem:[%s17 + $0x58] sm:$0xff]
      %v2855 = vld [vmem:[%s17 + $0x60] sm:$0xff]
      %v2856 = vld [vmem:[%s17 + $0x68] sm:$0xff]
      %v2857 = vld [vmem:[%s17 + $0x70] sm:$0xff]
      %v2858 = vld [vmem:[%s17 + $0x78] sm:$0xff]
      %v2859 = vmul.f32 %v2803, %v2803
      %v2860 = vmul.f32 %v2805, %v2805
      %v2861 = vsel %vm2432, %v2803, 0.0
      %v2862 = vrot.slane %v2861, 4
      %v2863 = vadd.f32 %v2861, %v2862
      %v2864 = vrot.slane %v2863, 2
      %v2865 = vadd.f32 %v2863, %v2864
      %v2866 = vrot.slane %v2865, 1
      %v2867 = vadd.f32 %v2865, %v2866
      %v2868 = vsel %vm2432, %v2805, 0.0
      %v2869 = vrot.slane %v2868, 4
      %v2870 = vadd.f32 %v2868, %v2869
      %v2871 = vrot.slane %v2870, 2
      %v2872 = vadd.f32 %v2870, %v2871
      %v2873 = vrot.slane %v2872, 1
      %v2874 = vadd.f32 %v2872, %v2873
      %v2875 = vsel %vm2432, %v2859, 0.0
      %v2876 = vrot.slane %v2875, 4
      %v2877 = vadd.f32 %v2875, %v2876
      %v2878 = vrot.slane %v2877, 2
      %v2879 = vadd.f32 %v2877, %v2878
      %v2880 = vrot.slane %v2879, 1
      %v2881 = vadd.f32 %v2879, %v2880
      %v2882 = vsel %vm2432, %v2860, 0.0
      %v2883 = vrot.slane %v2882, 4
      %v2884 = vadd.f32 %v2882, %v2883
      %v2885 = vrot.slane %v2884, 2
      %v2886 = vadd.f32 %v2884, %v2885
      %v2887 = vrot.slane %v2886, 1
      %v2888 = vadd.f32 %v2886, %v2887
      %v2889 = vsel %vm698, %v2867, %v2881
      %v2890 = vsel %vm698, %v2874, %v2888
      %2891 = vmatprep.subr.mxu0 0.0
      %2892 = vmatpush1.msra.mxu0 %v2826
      %2893 = vmatprep.subr.mxu0 0.0
      %2894 = vmatpush1.msra.mxu0 %v2825
      %2895 = vmatprep.subr.mxu0 0.0
      %2896 = vmatpush1.msra.mxu0 %v2824
      %2897 = vmatprep.subr.mxu0 0.0
      %2898 = vmatpush1.msra.mxu0 %v2823
      %2899 = vmatprep.subr.mxu0 0.0
      %2900 = vmatpush1.msra.mxu0 %v2822
      %2901 = vmatprep.subr.mxu0 0.0
      %2902 = vmatpush1.msra.mxu0 %v2821
      %2903 = vmatprep.subr.mxu0 0.0
      %2904 = vmatpush1.msra.mxu0 %v2820
      %2905 = vmatprep.subr.mxu0 0.0
      %2906 = vmatpush1.msra.mxu0 %v2819
      %2907 = vmatprep.subr.mxu0 0.0
      %2908 = vmatpush1.msra.mxu0 %v2818
      %2909 = vmatprep.subr.mxu0 0.0
      %2910 = vmatpush1.msra.mxu0 %v2817
      %2911 = vmatprep.subr.mxu0 0.0
      %2912 = vmatpush1.msra.mxu0 %v2816
      %2913 = vmatprep.subr.mxu0 0.0
      %2914 = vmatpush1.msra.mxu0 %v2815
      %2915 = vmatprep.subr.mxu0 0.0
      %2916 = vmatpush1.msra.mxu0 %v2814
      %2917 = vmatprep.subr.mxu0 0.0
      %2918 = vmatpush1.msra.mxu0 %v2813
      %2919 = vmatprep.subr.mxu0 0.0
      %2920 = vmatpush1.msra.mxu0 %v2812
      %2921 = vmatprep.subr.mxu0 0.0
      %2922 = vmatpush1.msra.mxu0 %v2811
      %2923 = vmatprep.subr.mxu0 0.0
      %2924 = vmatpush2.msra.mxu0 %v2842
      %2925 = vmatprep.subr.mxu0 0.0
      %2926 = vmatpush2.msra.mxu0 %v2841
      %2927 = vmatprep.subr.mxu0 0.0
      %2928 = vmatpush2.msra.mxu0 %v2840
      %2929 = vmatprep.subr.mxu0 0.0
      %2930 = vmatpush2.msra.mxu0 %v2839
      %2931 = vmatprep.subr.mxu0 0.0
      %2932 = vmatpush2.msra.mxu0 %v2838
      %2933 = vmatprep.subr.mxu0 0.0
      %2934 = vmatpush2.msra.mxu0 %v2837
      %2935 = vmatprep.subr.mxu0 0.0
      %2936 = vmatpush2.msra.mxu0 %v2836
      %2937 = vmatprep.subr.mxu0 0.0
      %2938 = vmatpush2.msra.mxu0 %v2835
      %2939 = vmatprep.subr.mxu0 0.0
      %2940 = vmatpush2.msra.mxu0 %v2834
      %2941 = vmatprep.subr.mxu0 0.0
      %2942 = vmatpush2.msra.mxu0 %v2833
      %2943 = vmatprep.subr.mxu0 0.0
      %2944 = vmatpush2.msra.mxu0 %v2832
      %2945 = vmatprep.subr.mxu0 0.0
      %2946 = vmatpush2.msra.mxu0 %v2831
      %2947 = vmatprep.subr.mxu0 0.0
      %2948 = vmatpush2.msra.mxu0 %v2830
      %2949 = vmatprep.subr.mxu0 0.0
      %2950 = vmatpush2.msra.mxu0 %v2829
      %2951 = vmatprep.subr.mxu0 0.0
      %2952 = vmatpush2.msra.mxu0 %v2828
      %2953 = vmatprep.subr.mxu0 0.0
      %2954 = vmatpush2.msra.mxu0 %v2827
      %2955 = vmatprep.mubr.f32.mxu0 %v2890
      %2956 = vmatmul.mubr.f32.gmra.mxu0 %v2889
      %v2957 = vpop.f32.mrf.mxu0
      %v2958 = vadd.f32 0.0, %v2957
      %v2959 = vpop.f32.mrf.mxu0
      %2960 = vdwg.mxu0
      %v2961 = vmul.f32 %v2958, 0.0625
      %v2962 = vmul.f32 %v2961, %v2961
      %v2964 = vrot.slane %v2962, 7
      %v2966 = vsub.f32 %v2961, %v2964
      %v2967 = vmax.f32 %v2966, 0.0
      %v2968 = vadd.f32 %v2967, 1e-05
      %v2969 = vrsqrt.pop %v2968
      %v2972 = vunpack.c.l.s4 1966171168
      %v2973 = vunpack.c.0.s8 %v2972
      %v2974 = vlaneseq
      %v2975 = vshrl.u32 %v2974, 7
      %v2976 = vsub.s32 %v2973, %v2975
      %v2977 = vrot.slane %v2969, %v2976
      %v2978 = vcombine.high %v2977, %v2977
      %v2980 = vunpack.c.l.s4 1966171168
      %v2981 = vunpack.c.0.s8 %v2980
      %v2982 = vlaneseq
      %v2983 = vshrl.u32 %v2982, 7
      %v2984 = vsub.s32 %v2981, %v2983
      %v2985 = vrot.slane %v2978, %v2984
      %v2987 = vmul.f32 %v2809, %v2985
      %v2988 = vmul.f32 %v2961, %v2987
      %v2989 = vsub.f32 %v2810, %v2988
      %v2991 = vlaneseq
      %v2992 = vshrl.u32 %v2991, 7
      %v2993 = vsub.s32 0, %v2992
      %v2994 = vrot.slane %v2989, %v2993
      %v2996 = vsel %vm698, %v2987, %v2994
      %v2998 = vsel %vm811, %v2996, 0
      %3000 = vmatprep.subr.mxu0 0.0
      %3001 = vmatpush1.msra.mxu0 0.0
      %3002 = vmatprep.subr.mxu0 0.0
      %3003 = vmatpush1.msra.mxu0 0.0
      %3004 = vmatprep.subr.mxu0 0.0
      %3005 = vmatpush1.msra.mxu0 0.0
      %3006 = vmatprep.subr.mxu0 0.0
      %3007 = vmatpush1.msra.mxu0 0.0
      %3008 = vmatprep.subr.mxu0 0.0
      %3009 = vmatpush1.msra.mxu0 0.0
      %3010 = vmatprep.subr.mxu0 0.0
      %3011 = vmatpush1.msra.mxu0 0.0
      %3012 = vmatprep.subr.mxu0 0.0
      %3013 = vmatpush1.msra.mxu0 0.0
      %3014 = vmatprep.subr.mxu0 0.0
      %3015 = vmatpush1.msra.mxu0 0.0
      %3016 = vmatprep.subr.mxu0 %v2858
      %3017 = vmatpush1.msra.mxu0 %v2857
      %3018 = vmatprep.subr.mxu0 %v2856
      %3019 = vmatpush1.msra.mxu0 %v2855
      %3020 = vmatprep.subr.mxu0 %v2854
      %3021 = vmatpush1.msra.mxu0 %v2853
      %3022 = vmatprep.subr.mxu0 %v2852
      %3023 = vmatpush1.msra.mxu0 %v2851
      %3024 = vmatprep.subr.mxu0 %v2850
      %3025 = vmatpush1.msra.mxu0 %v2849
      %3026 = vmatprep.subr.mxu0 %v2848
      %3027 = vmatpush1.msra.mxu0 %v2847
      %3028 = vmatprep.subr.mxu0 %v2846
      %3029 = vmatpush1.msra.mxu0 %v2845
      %3030 = vmatprep.subr.mxu0 %v2844
      %3031 = vmatpush1.msra.mxu0 %v2843
      %3032 = vmatprep.subr.mxu0 0.0
      %3033 = vmatpush2.msra.mxu0 0.0
      %3034 = vmatprep.subr.mxu0 0.0
      %3035 = vmatpush2.msra.mxu0 0.0
      %3036 = vmatprep.subr.mxu0 0.0
      %3037 = vmatpush2.msra.mxu0 0.0
      %3038 = vmatprep.subr.mxu0 0.0
      %3039 = vmatpush2.msra.mxu0 0.0
      %3040 = vmatprep.subr.mxu0 0.0
      %3041 = vmatpush2.msra.mxu0 0.0
      %3042 = vmatprep.subr.mxu0 0.0
      %3043 = vmatpush2.msra.mxu0 0.0
      %3044 = vmatprep.subr.mxu0 0.0
      %3045 = vmatpush2.msra.mxu0 0.0
      %3046 = vmatprep.subr.mxu0 0.0
      %3047 = vmatpush2.msra.mxu0 0.0
      %3048 = vmatprep.subr.mxu0 0.0
      %3049 = vmatpush2.msra.mxu0 0.0
      %3050 = vmatprep.subr.mxu0 0.0
      %3051 = vmatpush2.msra.mxu0 0.0
      %3052 = vmatprep.subr.mxu0 0.0
      %3053 = vmatpush2.msra.mxu0 0.0
      %3054 = vmatprep.subr.mxu0 0.0
      %3055 = vmatpush2.msra.mxu0 0.0
      %3056 = vmatprep.subr.mxu0 0.0
      %3057 = vmatpush2.msra.mxu0 0.0
      %3058 = vmatprep.subr.mxu0 0.0
      %3059 = vmatpush2.msra.mxu0 0.0
      %3060 = vmatprep.subr.mxu0 0.0
      %3061 = vmatpush2.msra.mxu0 0.0
      %3062 = vmatprep.subr.mxu0 0.0
      %3063 = vmatpush2.msra.mxu0 0.0
      %3064 = vmatprep.mubr.f32.mxu0 0.0
      %3065 = vmatmul.mubr.f32.gmra.mxu0 %v2998
      %v3066 = vpop.f32.mrf.mxu0
      %v3067 = vadd.f32 0.0, %v3066
      %v3068 = vpop.f32.mrf.mxu0
      %v3069 = vadd.f32 0.0, %v3068
      %3070 = vdwg.mxu0
      %v3071 = vlaneseq
      %v3072 = vshrl.u32 %v3071, 7
      %v3073 = vsub.s32 0, %v3072
      %v3074 = vrot.slane %v3067, %v3073
      %v3075 = vlaneseq
      %v3076 = vshrl.u32 %v3075, 7
      %v3077 = vsub.s32 0, %v3076
      %v3078 = vrot.slane %v3069, %v3077
      %v3079 = vmul.f32 %v2803, %v3074
      %v3080 = vmul.f32 %v2805, %v3078
      %v3081 = vlaneseq
      %v3082 = vshrl.u32 %v3081, 7
      %v3083 = vsub.s32 1, %v3082
      %v3084 = vrot.slane %v3067, %v3083
      %v3085 = vlaneseq
      %v3086 = vshrl.u32 %v3085, 7
      %v3087 = vsub.s32 1, %v3086
      %v3088 = vrot.slane %v3069, %v3087
      %v3089 = vadd.f32 %v3079, %v3084
      %v3090 = vadd.f32 %v3080, %v3088
      %vm3091 = vcmp.gt.f32.partialorder %v3089, 0.0
      %vm3092 = vcmp.gt.f32.partialorder %v3090, 0.0
      %v3093 = vmul.f32 %v3089, 0.2
      %v3094 = vmul.f32 %v3090, 0.2
      %v3095 = vsel %vm3091, %v3089, %v3093
      %v3096 = vsel %vm3092, %v3090, %v3094
      %v3099 = vrot.slane %v3095, 6
      %v3100 = vrot.slane %v3096, 6
      %3103 = vst [vmem:[#allocation5] sm:$0x3c] %v3099
      %3104 = vst [vmem:[#allocation5 + $0x8] sm:$0x3c] %v3100
      %v3107 = vrot.slane %v2803, 4
      %v3108 = vrot.slane %v2805, 4
      %v3111 = vsel %vm2432, %v3107, 0.0
      %v3112 = vrot.slane %v3111, 4
      %v3113 = vadd.f32 %v3111, %v3112
      %v3114 = vrot.slane %v3113, 2
      %v3115 = vadd.f32 %v3113, %v3114
      %v3116 = vrot.slane %v3115, 1
      %v3117 = vadd.f32 %v3115, %v3116
      %v3118 = vsel %vm2432, %v3108, 0.0
      %v3119 = vrot.slane %v3118, 4
      %v3120 = vadd.f32 %v3118, %v3119
      %v3121 = vrot.slane %v3120, 2
      %v3122 = vadd.f32 %v3120, %v3121
      %v3123 = vrot.slane %v3122, 1
      %v3124 = vadd.f32 %v3122, %v3123
      %v3127 = vrot.slane %v2859, 4
      %v3128 = vrot.slane %v2860, 4
      %v3131 = vsel %vm2432, %v3127, 0.0
      %v3132 = vrot.slane %v3131, 4
      %v3133 = vadd.f32 %v3131, %v3132
      %v3134 = vrot.slane %v3133, 2
      %v3135 = vadd.f32 %v3133, %v3134
      %v3136 = vrot.slane %v3135, 1
      %v3137 = vadd.f32 %v3135, %v3136
      %v3138 = vsel %vm2432, %v3128, 0.0
      %v3139 = vrot.slane %v3138, 4
      %v3140 = vadd.f32 %v3138, %v3139
      %v3141 = vrot.slane %v3140, 2
      %v3142 = vadd.f32 %v3140, %v3141
      %v3143 = vrot.slane %v3142, 1
      %v3144 = vadd.f32 %v3142, %v3143
      %v3145 = vsel %vm698, %v3117, %v3137
      %v3146 = vsel %vm698, %v3124, %v3144
      %3147 = vmatprep.subr.mxu0 0.0
      %3148 = vmatpush1.msra.mxu0 %v2826
      %3149 = vmatprep.subr.mxu0 0.0
      %3150 = vmatpush1.msra.mxu0 %v2825
      %3151 = vmatprep.subr.mxu0 0.0
      %3152 = vmatpush1.msra.mxu0 %v2824
      %3153 = vmatprep.subr.mxu0 0.0
      %3154 = vmatpush1.msra.mxu0 %v2823
      %3155 = vmatprep.subr.mxu0 0.0
      %3156 = vmatpush1.msra.mxu0 %v2822
      %3157 = vmatprep.subr.mxu0 0.0
      %3158 = vmatpush1.msra.mxu0 %v2821
      %3159 = vmatprep.subr.mxu0 0.0
      %3160 = vmatpush1.msra.mxu0 %v2820
      %3161 = vmatprep.subr.mxu0 0.0
      %3162 = vmatpush1.msra.mxu0 %v2819
      %3163 = vmatprep.subr.mxu0 0.0
      %3164 = vmatpush1.msra.mxu0 %v2818
      %3165 = vmatprep.subr.mxu0 0.0
      %3166 = vmatpush1.msra.mxu0 %v2817
      %3167 = vmatprep.subr.mxu0 0.0
      %3168 = vmatpush1.msra.mxu0 %v2816
      %3169 = vmatprep.subr.mxu0 0.0
      %3170 = vmatpush1.msra.mxu0 %v2815
      %3171 = vmatprep.subr.mxu0 0.0
      %3172 = vmatpush1.msra.mxu0 %v2814
      %3173 = vmatprep.subr.mxu0 0.0
      %3174 = vmatpush1.msra.mxu0 %v2813
      %3175 = vmatprep.subr.mxu0 0.0
      %3176 = vmatpush1.msra.mxu0 %v2812
      %3177 = vmatprep.subr.mxu0 0.0
      %3178 = vmatpush1.msra.mxu0 %v2811
      %3179 = vmatprep.subr.mxu0 0.0
      %3180 = vmatpush2.msra.mxu0 %v2842
      %3181 = vmatprep.subr.mxu0 0.0
      %3182 = vmatpush2.msra.mxu0 %v2841
      %3183 = vmatprep.subr.mxu0 0.0
      %3184 = vmatpush2.msra.mxu0 %v2840
      %3185 = vmatprep.subr.mxu0 0.0
      %3186 = vmatpush2.msra.mxu0 %v2839
      %3187 = vmatprep.subr.mxu0 0.0
      %3188 = vmatpush2.msra.mxu0 %v2838
      %3189 = vmatprep.subr.mxu0 0.0
      %3190 = vmatpush2.msra.mxu0 %v2837
      %3191 = vmatprep.subr.mxu0 0.0
      %3192 = vmatpush2.msra.mxu0 %v2836
      %3193 = vmatprep.subr.mxu0 0.0
      %3194 = vmatpush2.msra.mxu0 %v2835
      %3195 = vmatprep.subr.mxu0 0.0
      %3196 = vmatpush2.msra.mxu0 %v2834
      %3197 = vmatprep.subr.mxu0 0.0
      %3198 = vmatpush2.msra.mxu0 %v2833
      %3199 = vmatprep.subr.mxu0 0.0
      %3200 = vmatpush2.msra.mxu0 %v2832
      %3201 = vmatprep.subr.mxu0 0.0
      %3202 = vmatpush2.msra.mxu0 %v2831
      %3203 = vmatprep.subr.mxu0 0.0
      %3204 = vmatpush2.msra.mxu0 %v2830
      %3205 = vmatprep.subr.mxu0 0.0
      %3206 = vmatpush2.msra.mxu0 %v2829
      %3207 = vmatprep.subr.mxu0 0.0
      %3208 = vmatpush2.msra.mxu0 %v2828
      %3209 = vmatprep.subr.mxu0 0.0
      %3210 = vmatpush2.msra.mxu0 %v2827
      %3211 = vmatprep.mubr.f32.mxu0 %v3146
      %3212 = vmatmul.mubr.f32.gmra.mxu0 %v3145
      %v3213 = vpop.f32.mrf.mxu0
      %v3214 = vadd.f32 0.0, %v3213
      %v3215 = vpop.f32.mrf.mxu0
      %3216 = vdwg.mxu0
      %v3217 = vmul.f32 %v3214, 0.0625
      %v3218 = vmul.f32 %v3217, %v3217
      %v3220 = vrot.slane %v3218, 7
      %v3222 = vsub.f32 %v3217, %v3220
      %v3223 = vmax.f32 %v3222, 0.0
      %v3224 = vadd.f32 %v3223, 1e-05
      %v3225 = vrsqrt.pop %v3224
      %v3228 = vunpack.c.l.s4 1966171168
      %v3229 = vunpack.c.0.s8 %v3228
      %v3230 = vlaneseq
      %v3231 = vshrl.u32 %v3230, 7
      %v3232 = vsub.s32 %v3229, %v3231
      %v3233 = vrot.slane %v3225, %v3232
      %v3234 = vcombine.high %v3233, %v3233
      %v3236 = vunpack.c.l.s4 1966171168
      %v3237 = vunpack.c.0.s8 %v3236
      %v3238 = vlaneseq
      %v3239 = vshrl.u32 %v3238, 7
      %v3240 = vsub.s32 %v3237, %v3239
      %v3241 = vrot.slane %v3234, %v3240
      %v3243 = vmul.f32 %v2809, %v3241
      %v3244 = vmul.f32 %v3217, %v3243
      %v3245 = vsub.f32 %v2810, %v3244
      %v3247 = vlaneseq
      %v3248 = vshrl.u32 %v3247, 7
      %v3249 = vsub.s32 0, %v3248
      %v3250 = vrot.slane %v3245, %v3249
      %v3252 = vsel %vm698, %v3243, %v3250
      %v3254 = vsel %vm811, %v3252, 0
      %3256 = vmatprep.subr.mxu0 0.0
      %3257 = vmatpush1.msra.mxu0 0.0
      %3258 = vmatprep.subr.mxu0 0.0
      %3259 = vmatpush1.msra.mxu0 0.0
      %3260 = vmatprep.subr.mxu0 0.0
      %3261 = vmatpush1.msra.mxu0 0.0
      %3262 = vmatprep.subr.mxu0 0.0
      %3263 = vmatpush1.msra.mxu0 0.0
      %3264 = vmatprep.subr.mxu0 0.0
      %3265 = vmatpush1.msra.mxu0 0.0
      %3266 = vmatprep.subr.mxu0 0.0
      %3267 = vmatpush1.msra.mxu0 0.0
      %3268 = vmatprep.subr.mxu0 0.0
      %3269 = vmatpush1.msra.mxu0 0.0
      %3270 = vmatprep.subr.mxu0 0.0
      %3271 = vmatpush1.msra.mxu0 0.0
      %3272 = vmatprep.subr.mxu0 %v2858
      %3273 = vmatpush1.msra.mxu0 %v2857
      %3274 = vmatprep.subr.mxu0 %v2856
      %3275 = vmatpush1.msra.mxu0 %v2855
      %3276 = vmatprep.subr.mxu0 %v2854
      %3277 = vmatpush1.msra.mxu0 %v2853
      %3278 = vmatprep.subr.mxu0 %v2852
      %3279 = vmatpush1.msra.mxu0 %v2851
      %3280 = vmatprep.subr.mxu0 %v2850
      %3281 = vmatpush1.msra.mxu0 %v2849
      %3282 = vmatprep.subr.mxu0 %v2848
      %3283 = vmatpush1.msra.mxu0 %v2847
      %3284 = vmatprep.subr.mxu0 %v2846
      %3285 = vmatpush1.msra.mxu0 %v2845
      %3286 = vmatprep.subr.mxu0 %v2844
      %3287 = vmatpush1.msra.mxu0 %v2843
      %3288 = vmatprep.subr.mxu0 0.0
      %3289 = vmatpush2.msra.mxu0 0.0
      %3290 = vmatprep.subr.mxu0 0.0
      %3291 = vmatpush2.msra.mxu0 0.0
      %3292 = vmatprep.subr.mxu0 0.0
      %3293 = vmatpush2.msra.mxu0 0.0
      %3294 = vmatprep.subr.mxu0 0.0
      %3295 = vmatpush2.msra.mxu0 0.0
      %3296 = vmatprep.subr.mxu0 0.0
      %3297 = vmatpush2.msra.mxu0 0.0
      %3298 = vmatprep.subr.mxu0 0.0
      %3299 = vmatpush2.msra.mxu0 0.0
      %3300 = vmatprep.subr.mxu0 0.0
      %3301 = vmatpush2.msra.mxu0 0.0
      %3302 = vmatprep.subr.mxu0 0.0
      %3303 = vmatpush2.msra.mxu0 0.0
      %3304 = vmatprep.subr.mxu0 0.0
      %3305 = vmatpush2.msra.mxu0 0.0
      %3306 = vmatprep.subr.mxu0 0.0
      %3307 = vmatpush2.msra.mxu0 0.0
      %3308 = vmatprep.subr.mxu0 0.0
      %3309 = vmatpush2.msra.mxu0 0.0
      %3310 = vmatprep.subr.mxu0 0.0
      %3311 = vmatpush2.msra.mxu0 0.0
      %3312 = vmatprep.subr.mxu0 0.0
      %3313 = vmatpush2.msra.mxu0 0.0
      %3314 = vmatprep.subr.mxu0 0.0
      %3315 = vmatpush2.msra.mxu0 0.0
      %3316 = vmatprep.subr.mxu0 0.0
      %3317 = vmatpush2.msra.mxu0 0.0
      %3318 = vmatprep.subr.mxu0 0.0
      %3319 = vmatpush2.msra.mxu0 0.0
      %3320 = vmatprep.mubr.f32.mxu0 0.0
      %3321 = vmatmul.mubr.f32.gmra.mxu0 %v3254
      %v3322 = vpop.f32.mrf.mxu0
      %v3323 = vadd.f32 0.0, %v3322
      %v3324 = vpop.f32.mrf.mxu0
      %v3325 = vadd.f32 0.0, %v3324
      %3326 = vdwg.mxu0
      %v3327 = vlaneseq
      %v3328 = vshrl.u32 %v3327, 7
      %v3329 = vsub.s32 0, %v3328
      %v3330 = vrot.slane %v3323, %v3329
      %v3331 = vlaneseq
      %v3332 = vshrl.u32 %v3331, 7
      %v3333 = vsub.s32 0, %v3332
      %v3334 = vrot.slane %v3325, %v3333
      %v3335 = vmul.f32 %v2803, %v3330
      %v3336 = vmul.f32 %v2805, %v3334
      %v3337 = vlaneseq
      %v3338 = vshrl.u32 %v3337, 7
      %v3339 = vsub.s32 1, %v3338
      %v3340 = vrot.slane %v3323, %v3339
      %v3341 = vlaneseq
      %v3342 = vshrl.u32 %v3341, 7
      %v3343 = vsub.s32 1, %v3342
      %v3344 = vrot.slane %v3325, %v3343
      %v3345 = vadd.f32 %v3335, %v3340
      %v3346 = vadd.f32 %v3336, %v3344
      %vm3347 = vcmp.gt.f32.partialorder %v3345, 0.0
      %vm3348 = vcmp.gt.f32.partialorder %v3346, 0.0
      %v3349 = vmul.f32 %v3345, 0.2
      %v3350 = vmul.f32 %v3346, 0.2
      %v3351 = vsel %vm3347, %v3345, %v3349
      %v3352 = vsel %vm3348, %v3346, %v3350
      %v3355 = vrot.slane %v3351, 2
      %v3356 = vrot.slane %v3352, 2
      %3359 = vst [vmem:[#allocation5 + $0x10] sm:$0x3c] %v3355
      %3360 = vst [vmem:[#allocation5 + $0x18] sm:$0x3c] %v3356
      %v3361 = vld [vmem:[#allocation5] sm:$0x1f]
      %v3362 = vld [vmem:[#allocation5 + $0x8] sm:$0x1f]
      %v3363 = vld [vmem:[#allocation5] sm:$0x3e]
      %v3364 = vld [vmem:[#allocation5 + $0x8] sm:$0x3e]
      %v3365 = vld [vmem:[#allocation5] sm:$0x7c]
      %v3366 = vld [vmem:[#allocation5 + $0x8] sm:$0x7c]
      %v3367 = vld [vmem:[#allocation5] sm:$0xf8]
      %v3368 = vld [vmem:[#allocation5 + $0x8] sm:$0xf8]
      %v3371 = vrot.slane %v3363, 1
      %v3372 = vrot.slane %v3364, 1
      %v3377 = vrot.slane %v3365, 2
      %v3378 = vrot.slane %v3366, 2
      %v3383 = vrot.slane %v3367, 3
      %v3384 = vrot.slane %v3368, 3
      %v3387 = vld [vmem:[#allocation5 + $0x10] sm:$0x1f]
      %v3388 = vld [vmem:[#allocation5 + $0x18] sm:$0x1f]
      %v3389 = vld [vmem:[#allocation5 + $0x10] sm:$0x3e]
      %v3390 = vld [vmem:[#allocation5 + $0x18] sm:$0x3e]
      %v3391 = vld [vmem:[#allocation5 + $0x10] sm:$0x7c]
      %v3392 = vld [vmem:[#allocation5 + $0x18] sm:$0x7c]
      %v3393 = vld [vmem:[#allocation5 + $0x10] sm:$0xf8]
      %v3394 = vld [vmem:[#allocation5 + $0x18] sm:$0xf8]
      %v3397 = vrot.slane %v3389, 1
      %v3398 = vrot.slane %v3390, 1
      %v3401 = vrot.slane %v3391, 2
      %v3402 = vrot.slane %v3392, 2
      %v3405 = vrot.slane %v3393, 3
      %v3406 = vrot.slane %v3394, 3
      %v3409 = vrot.slane %v3387, 3
      %v3410 = vrot.slane %v3388, 3
      %v3411 = vrot.slane %v3397, 3
      %v3412 = vrot.slane %v3398, 3
      %v3413 = vrot.slane %v3401, 3
      %v3414 = vrot.slane %v3402, 3
      %v3415 = vrot.slane %v3405, 3
      %v3416 = vrot.slane %v3406, 3
      %v3425 = vsel %vm936, %v3361, %v3409
      %v3426 = vsel %vm936, %v3362, %v3410
      %v3427 = vsel %vm936, %v3371, %v3411
      %v3428 = vsel %vm936, %v3372, %v3412
      %v3429 = vsel %vm936, %v3377, %v3413
      %v3430 = vsel %vm936, %v3378, %v3414
      %v3431 = vsel %vm936, %v3383, %v3415
      %v3432 = vsel %vm936, %v3384, %v3416
      %v3433 = vpack.c.bf16 %v3409, %v3425
      %v3434 = vpack.c.bf16 %v3410, %v3426
      %v3435 = vpack.c.bf16 %v3411, %v3427
      %v3436 = vpack.c.bf16 %v3412, %v3428
      %v3437 = vpack.c.bf16 %v3413, %v3429
      %v3438 = vpack.c.bf16 %v3414, %v3430
      %v3439 = vpack.c.bf16 %v3415, %v3431
      %v3440 = vpack.c.bf16 %v3416, %v3432
      %v3441 = vld [vmem:[%s5] sm:$0xf]
      %v3442 = vld [vmem:[%s5 + $0x4] sm:$0xf]
      %v3443 = vld [vmem:[%s5 + $0x8] sm:$0xf]
      %v3444 = vld [vmem:[%s5 + $0xc] sm:$0xf]
      %v3445 = vld [vmem:[%s5 + $0x10] sm:$0xf]
      %v3446 = vld [vmem:[%s5 + $0x14] sm:$0xf]
      %v3447 = vld [vmem:[%s5 + $0x18] sm:$0xf]
      %v3448 = vld [vmem:[%s5 + $0x1c] sm:$0xf]
      %v3449 = vld [vmem:[%s5 + $0x20] sm:$0xf]
      %v3450 = vld [vmem:[%s5 + $0x24] sm:$0xf]
      %v3451 = vld [vmem:[%s5 + $0x28] sm:$0xf]
      %v3452 = vld [vmem:[%s5 + $0x2c] sm:$0xf]
      %v3453 = vld [vmem:[%s5 + $0x30] sm:$0xf]
      %v3454 = vld [vmem:[%s5 + $0x34] sm:$0xf]
      %v3455 = vld [vmem:[%s5 + $0x38] sm:$0xf]
      %v3456 = vld [vmem:[%s5 + $0x3c] sm:$0xf]
      %v3457 = vld [vmem:[%s5 + $0x40] sm:$0xf]
      %v3458 = vld [vmem:[%s5 + $0x44] sm:$0xf]
      %v3459 = vld [vmem:[%s5 + $0x48] sm:$0xf]
      %v3460 = vld [vmem:[%s5 + $0x4c] sm:$0xf]
      %v3461 = vld [vmem:[%s5 + $0x50] sm:$0xf]
      %v3462 = vld [vmem:[%s5 + $0x54] sm:$0xf]
      %v3463 = vld [vmem:[%s5 + $0x58] sm:$0xf]
      %v3464 = vld [vmem:[%s5 + $0x5c] sm:$0xf]
      %v3465 = vld [vmem:[%s5 + $0x60] sm:$0xf]
      %v3466 = vld [vmem:[%s5 + $0x64] sm:$0xf]
      %v3467 = vld [vmem:[%s5 + $0x68] sm:$0xf]
      %v3468 = vld [vmem:[%s5 + $0x6c] sm:$0xf]
      %v3469 = vld [vmem:[%s5 + $0x70] sm:$0xf]
      %v3470 = vld [vmem:[%s5 + $0x74] sm:$0xf]
      %v3471 = vld [vmem:[%s5 + $0x78] sm:$0xf]
      %v3472 = vld [vmem:[%s5 + $0x7c] sm:$0xf]
      %v3473 = vld [vmem:[%s5 + $0x80] sm:$0xf]
      %v3474 = vld [vmem:[%s5 + $0x84] sm:$0xf]
      %v3475 = vld [vmem:[%s5 + $0x88] sm:$0xf]
      %v3476 = vld [vmem:[%s5 + $0x8c] sm:$0xf]
      %v3477 = vld [vmem:[%s5 + $0x90] sm:$0xf]
      %v3478 = vld [vmem:[%s5 + $0x94] sm:$0xf]
      %v3479 = vld [vmem:[%s5 + $0x98] sm:$0xf]
      %v3480 = vld [vmem:[%s5 + $0x9c] sm:$0xf]
      %v3481 = vld [vmem:[%s5 + $0xa0] sm:$0xf]
      %v3482 = vld [vmem:[%s5 + $0xa4] sm:$0xf]
      %v3483 = vld [vmem:[%s5 + $0xa8] sm:$0xf]
      %v3484 = vld [vmem:[%s5 + $0xac] sm:$0xf]
      %v3485 = vld [vmem:[%s5 + $0xb0] sm:$0xf]
      %v3486 = vld [vmem:[%s5 + $0xb4] sm:$0xf]
      %v3487 = vld [vmem:[%s5 + $0xb8] sm:$0xf]
      %v3488 = vld [vmem:[%s5 + $0xbc] sm:$0xf]
      %v3489 = vld [vmem:[%s5 + $0xc0] sm:$0xf]
      %v3490 = vld [vmem:[%s5 + $0xc4] sm:$0xf]
      %v3491 = vld [vmem:[%s5 + $0xc8] sm:$0xf]
      %v3492 = vld [vmem:[%s5 + $0xcc] sm:$0xf]
      %v3493 = vld [vmem:[%s5 + $0xd0] sm:$0xf]
      %v3494 = vld [vmem:[%s5 + $0xd4] sm:$0xf]
      %v3495 = vld [vmem:[%s5 + $0xd8] sm:$0xf]
      %v3496 = vld [vmem:[%s5 + $0xdc] sm:$0xf]
      %v3497 = vld [vmem:[%s5 + $0xe0] sm:$0xf]
      %v3498 = vld [vmem:[%s5 + $0xe4] sm:$0xf]
      %v3499 = vld [vmem:[%s5 + $0xe8] sm:$0xf]
      %v3500 = vld [vmem:[%s5 + $0xec] sm:$0xf]
      %v3501 = vld [vmem:[%s5 + $0xf0] sm:$0xf]
      %v3502 = vld [vmem:[%s5 + $0xf4] sm:$0xf]
      %v3503 = vld [vmem:[%s5 + $0xf8] sm:$0xf]
      %v3504 = vld [vmem:[%s5 + $0xfc] sm:$0xf]
      %v3505 = vld [vmem:[%s5 + $0x100] sm:$0xf]
      %v3506 = vld [vmem:[%s5 + $0x104] sm:$0xf]
      %v3507 = vld [vmem:[%s5 + $0x108] sm:$0xf]
      %v3508 = vld [vmem:[%s5 + $0x10c] sm:$0xf]
      %v3509 = vld [vmem:[%s5 + $0x110] sm:$0xf]
      %v3510 = vld [vmem:[%s5 + $0x114] sm:$0xf]
      %v3511 = vld [vmem:[%s5 + $0x118] sm:$0xf]
      %v3512 = vld [vmem:[%s5 + $0x11c] sm:$0xf]
      %v3513 = vld [vmem:[%s5 + $0x120] sm:$0xf]
      %v3514 = vld [vmem:[%s5 + $0x124] sm:$0xf]
      %v3515 = vld [vmem:[%s5 + $0x128] sm:$0xf]
      %v3516 = vld [vmem:[%s5 + $0x12c] sm:$0xf]
      %v3517 = vld [vmem:[%s5 + $0x130] sm:$0xf]
      %v3518 = vld [vmem:[%s5 + $0x134] sm:$0xf]
      %v3519 = vld [vmem:[%s5 + $0x138] sm:$0xf]
      %v3520 = vld [vmem:[%s5 + $0x13c] sm:$0xf]
      %v3521 = vld [vmem:[%s5 + $0x140] sm:$0xf]
      %v3522 = vld [vmem:[%s5 + $0x144] sm:$0xf]
      %v3523 = vld [vmem:[%s5 + $0x148] sm:$0xf]
      %v3524 = vld [vmem:[%s5 + $0x14c] sm:$0xf]
      %v3525 = vld [vmem:[%s5 + $0x150] sm:$0xf]
      %v3526 = vld [vmem:[%s5 + $0x154] sm:$0xf]
      %v3527 = vld [vmem:[%s5 + $0x158] sm:$0xf]
      %v3528 = vld [vmem:[%s5 + $0x15c] sm:$0xf]
      %v3529 = vld [vmem:[%s5 + $0x160] sm:$0xf]
      %v3530 = vld [vmem:[%s5 + $0x164] sm:$0xf]
      %v3531 = vld [vmem:[%s5 + $0x168] sm:$0xf]
      %v3532 = vld [vmem:[%s5 + $0x16c] sm:$0xf]
      %v3533 = vld [vmem:[%s5 + $0x170] sm:$0xf]
      %v3534 = vld [vmem:[%s5 + $0x174] sm:$0xf]
      %v3535 = vld [vmem:[%s5 + $0x178] sm:$0xf]
      %v3536 = vld [vmem:[%s5 + $0x17c] sm:$0xf]
      %v3537 = vld [vmem:[%s5 + $0x180] sm:$0xf]
      %v3538 = vld [vmem:[%s5 + $0x184] sm:$0xf]
      %v3539 = vld [vmem:[%s5 + $0x188] sm:$0xf]
      %v3540 = vld [vmem:[%s5 + $0x18c] sm:$0xf]
      %v3541 = vld [vmem:[%s5 + $0x190] sm:$0xf]
      %v3542 = vld [vmem:[%s5 + $0x194] sm:$0xf]
      %v3543 = vld [vmem:[%s5 + $0x198] sm:$0xf]
      %v3544 = vld [vmem:[%s5 + $0x19c] sm:$0xf]
      %v3545 = vld [vmem:[%s5 + $0x1a0] sm:$0xf]
      %v3546 = vld [vmem:[%s5 + $0x1a4] sm:$0xf]
      %v3547 = vld [vmem:[%s5 + $0x1a8] sm:$0xf]
      %v3548 = vld [vmem:[%s5 + $0x1ac] sm:$0xf]
      %v3549 = vld [vmem:[%s5 + $0x1b0] sm:$0xf]
      %v3550 = vld [vmem:[%s5 + $0x1b4] sm:$0xf]
      %v3551 = vld [vmem:[%s5 + $0x1b8] sm:$0xf]
      %v3552 = vld [vmem:[%s5 + $0x1bc] sm:$0xf]
      %v3553 = vld [vmem:[%s5 + $0x1c0] sm:$0xf]
      %v3554 = vld [vmem:[%s5 + $0x1c4] sm:$0xf]
      %v3555 = vld [vmem:[%s5 + $0x1c8] sm:$0xf]
      %v3556 = vld [vmem:[%s5 + $0x1cc] sm:$0xf]
      %v3557 = vld [vmem:[%s5 + $0x1d0] sm:$0xf]
      %v3558 = vld [vmem:[%s5 + $0x1d4] sm:$0xf]
      %v3559 = vld [vmem:[%s5 + $0x1d8] sm:$0xf]
      %v3560 = vld [vmem:[%s5 + $0x1dc] sm:$0xf]
      %v3561 = vld [vmem:[%s5 + $0x1e0] sm:$0xf]
      %v3562 = vld [vmem:[%s5 + $0x1e4] sm:$0xf]
      %v3563 = vld [vmem:[%s5 + $0x1e8] sm:$0xf]
      %v3564 = vld [vmem:[%s5 + $0x1ec] sm:$0xf]
      %v3565 = vld [vmem:[%s5 + $0x1f0] sm:$0xf]
      %v3566 = vld [vmem:[%s5 + $0x1f4] sm:$0xf]
      %v3567 = vld [vmem:[%s5 + $0x1f8] sm:$0xf]
      %v3568 = vld [vmem:[%s5 + $0x1fc] sm:$0xf]
      %v3697 = vunpack.c.l.b16 %v3441
      %v3698 = vunpack.c.l.b16 %v3442
      %v3699 = vunpack.c.l.b16 %v3443
      %v3700 = vunpack.c.l.b16 %v3444
      %v3701 = vunpack.c.l.b16 %v3445
      %v3702 = vunpack.c.l.b16 %v3446
      %v3703 = vunpack.c.l.b16 %v3447
      %v3704 = vunpack.c.l.b16 %v3448
      %v3705 = vunpack.c.l.b16 %v3449
      %v3706 = vunpack.c.l.b16 %v3450
      %v3707 = vunpack.c.l.b16 %v3451
      %v3708 = vunpack.c.l.b16 %v3452
      %v3709 = vunpack.c.l.b16 %v3453
      %v3710 = vunpack.c.l.b16 %v3454
      %v3711 = vunpack.c.l.b16 %v3455
      %v3712 = vunpack.c.l.b16 %v3456
      %v3713 = vunpack.c.l.b16 %v3457
      %v3714 = vunpack.c.l.b16 %v3458
      %v3715 = vunpack.c.l.b16 %v3459
      %v3716 = vunpack.c.l.b16 %v3460
      %v3717 = vunpack.c.l.b16 %v3461
      %v3718 = vunpack.c.l.b16 %v3462
      %v3719 = vunpack.c.l.b16 %v3463
      %v3720 = vunpack.c.l.b16 %v3464
      %v3721 = vunpack.c.l.b16 %v3465
      %v3722 = vunpack.c.l.b16 %v3466
      %v3723 = vunpack.c.l.b16 %v3467
      %v3724 = vunpack.c.l.b16 %v3468
      %v3725 = vunpack.c.l.b16 %v3469
      %v3726 = vunpack.c.l.b16 %v3470
      %v3727 = vunpack.c.l.b16 %v3471
      %v3728 = vunpack.c.l.b16 %v3472
      %v3729 = vunpack.c.l.b16 %v3473
      %v3730 = vunpack.c.l.b16 %v3474
      %v3731 = vunpack.c.l.b16 %v3475
      %v3732 = vunpack.c.l.b16 %v3476
      %v3733 = vunpack.c.l.b16 %v3477
      %v3734 = vunpack.c.l.b16 %v3478
      %v3735 = vunpack.c.l.b16 %v3479
      %v3736 = vunpack.c.l.b16 %v3480
      %v3737 = vunpack.c.l.b16 %v3481
      %v3738 = vunpack.c.l.b16 %v3482
      %v3739 = vunpack.c.l.b16 %v3483
      %v3740 = vunpack.c.l.b16 %v3484
      %v3741 = vunpack.c.l.b16 %v3485
      %v3742 = vunpack.c.l.b16 %v3486
      %v3743 = vunpack.c.l.b16 %v3487
      %v3744 = vunpack.c.l.b16 %v3488
      %v3745 = vunpack.c.l.b16 %v3489
      %v3746 = vunpack.c.l.b16 %v3490
      %v3747 = vunpack.c.l.b16 %v3491
      %v3748 = vunpack.c.l.b16 %v3492
      %v3749 = vunpack.c.l.b16 %v3493
      %v3750 = vunpack.c.l.b16 %v3494
      %v3751 = vunpack.c.l.b16 %v3495
      %v3752 = vunpack.c.l.b16 %v3496
      %v3753 = vunpack.c.l.b16 %v3497
      %v3754 = vunpack.c.l.b16 %v3498
      %v3755 = vunpack.c.l.b16 %v3499
      %v3756 = vunpack.c.l.b16 %v3500
      %v3757 = vunpack.c.l.b16 %v3501
      %v3758 = vunpack.c.l.b16 %v3502
      %v3759 = vunpack.c.l.b16 %v3503
      %v3760 = vunpack.c.l.b16 %v3504
      %v3761 = vunpack.c.l.b16 %v3505
      %v3762 = vunpack.c.l.b16 %v3506
      %v3763 = vunpack.c.l.b16 %v3507
      %v3764 = vunpack.c.l.b16 %v3508
      %v3765 = vunpack.c.l.b16 %v3509
      %v3766 = vunpack.c.l.b16 %v3510
      %v3767 = vunpack.c.l.b16 %v3511
      %v3768 = vunpack.c.l.b16 %v3512
      %v3769 = vunpack.c.l.b16 %v3513
      %v3770 = vunpack.c.l.b16 %v3514
      %v3771 = vunpack.c.l.b16 %v3515
      %v3772 = vunpack.c.l.b16 %v3516
      %v3773 = vunpack.c.l.b16 %v3517
      %v3774 = vunpack.c.l.b16 %v3518
      %v3775 = vunpack.c.l.b16 %v3519
      %v3776 = vunpack.c.l.b16 %v3520
      %v3777 = vunpack.c.l.b16 %v3521
      %v3778 = vunpack.c.l.b16 %v3522
      %v3779 = vunpack.c.l.b16 %v3523
      %v3780 = vunpack.c.l.b16 %v3524
      %v3781 = vunpack.c.l.b16 %v3525
      %v3782 = vunpack.c.l.b16 %v3526
      %v3783 = vunpack.c.l.b16 %v3527
      %v3784 = vunpack.c.l.b16 %v3528
      %v3785 = vunpack.c.l.b16 %v3529
      %v3786 = vunpack.c.l.b16 %v3530
      %v3787 = vunpack.c.l.b16 %v3531
      %v3788 = vunpack.c.l.b16 %v3532
      %v3789 = vunpack.c.l.b16 %v3533
      %v3790 = vunpack.c.l.b16 %v3534
      %v3791 = vunpack.c.l.b16 %v3535
      %v3792 = vunpack.c.l.b16 %v3536
      %v3793 = vunpack.c.l.b16 %v3537
      %v3794 = vunpack.c.l.b16 %v3538
      %v3795 = vunpack.c.l.b16 %v3539
      %v3796 = vunpack.c.l.b16 %v3540
      %v3797 = vunpack.c.l.b16 %v3541
      %v3798 = vunpack.c.l.b16 %v3542
      %v3799 = vunpack.c.l.b16 %v3543
      %v3800 = vunpack.c.l.b16 %v3544
      %v3801 = vunpack.c.l.b16 %v3545
      %v3802 = vunpack.c.l.b16 %v3546
      %v3803 = vunpack.c.l.b16 %v3547
      %v3804 = vunpack.c.l.b16 %v3548
      %v3805 = vunpack.c.l.b16 %v3549
      %v3806 = vunpack.c.l.b16 %v3550
      %v3807 = vunpack.c.l.b16 %v3551
      %v3808 = vunpack.c.l.b16 %v3552
      %v3809 = vunpack.c.l.b16 %v3553
      %v3810 = vunpack.c.l.b16 %v3554
      %v3811 = vunpack.c.l.b16 %v3555
      %v3812 = vunpack.c.l.b16 %v3556
      %v3813 = vunpack.c.l.b16 %v3557
      %v3814 = vunpack.c.l.b16 %v3558
      %v3815 = vunpack.c.l.b16 %v3559
      %v3816 = vunpack.c.l.b16 %v3560
      %v3817 = vunpack.c.l.b16 %v3561
      %v3818 = vunpack.c.l.b16 %v3562
      %v3819 = vunpack.c.l.b16 %v3563
      %v3820 = vunpack.c.l.b16 %v3564
      %v3821 = vunpack.c.l.b16 %v3565
      %v3822 = vunpack.c.l.b16 %v3566
      %v3823 = vunpack.c.l.b16 %v3567
      %v3824 = vunpack.c.l.b16 %v3568
      %v3825 = vpack.c.b16 %v3698, %v3697
      %v3826 = vpack.c.b16 %v3700, %v3699
      %v3827 = vpack.c.b16 %v3702, %v3701
      %v3828 = vpack.c.b16 %v3704, %v3703
      %v3829 = vpack.c.b16 %v3706, %v3705
      %v3830 = vpack.c.b16 %v3708, %v3707
      %v3831 = vpack.c.b16 %v3710, %v3709
      %v3832 = vpack.c.b16 %v3712, %v3711
      %v3833 = vpack.c.b16 %v3714, %v3713
      %v3834 = vpack.c.b16 %v3716, %v3715
      %v3835 = vpack.c.b16 %v3718, %v3717
      %v3836 = vpack.c.b16 %v3720, %v3719
      %v3837 = vpack.c.b16 %v3722, %v3721
      %v3838 = vpack.c.b16 %v3724, %v3723
      %v3839 = vpack.c.b16 %v3726, %v3725
      %v3840 = vpack.c.b16 %v3728, %v3727
      %v3841 = vpack.c.b16 %v3730, %v3729
      %v3842 = vpack.c.b16 %v3732, %v3731
      %v3843 = vpack.c.b16 %v3734, %v3733
      %v3844 = vpack.c.b16 %v3736, %v3735
      %v3845 = vpack.c.b16 %v3738, %v3737
      %v3846 = vpack.c.b16 %v3740, %v3739
      %v3847 = vpack.c.b16 %v3742, %v3741
      %v3848 = vpack.c.b16 %v3744, %v3743
      %v3849 = vpack.c.b16 %v3746, %v3745
      %v3850 = vpack.c.b16 %v3748, %v3747
      %v3851 = vpack.c.b16 %v3750, %v3749
      %v3852 = vpack.c.b16 %v3752, %v3751
      %v3853 = vpack.c.b16 %v3754, %v3753
      %v3854 = vpack.c.b16 %v3756, %v3755
      %v3855 = vpack.c.b16 %v3758, %v3757
      %v3856 = vpack.c.b16 %v3760, %v3759
      %v3857 = vpack.c.b16 %v3762, %v3761
      %v3858 = vpack.c.b16 %v3764, %v3763
      %v3859 = vpack.c.b16 %v3766, %v3765
      %v3860 = vpack.c.b16 %v3768, %v3767
      %v3861 = vpack.c.b16 %v3770, %v3769
      %v3862 = vpack.c.b16 %v3772, %v3771
      %v3863 = vpack.c.b16 %v3774, %v3773
      %v3864 = vpack.c.b16 %v3776, %v3775
      %v3865 = vpack.c.b16 %v3778, %v3777
      %v3866 = vpack.c.b16 %v3780, %v3779
      %v3867 = vpack.c.b16 %v3782, %v3781
      %v3868 = vpack.c.b16 %v3784, %v3783
      %v3869 = vpack.c.b16 %v3786, %v3785
      %v3870 = vpack.c.b16 %v3788, %v3787
      %v3871 = vpack.c.b16 %v3790, %v3789
      %v3872 = vpack.c.b16 %v3792, %v3791
      %v3873 = vpack.c.b16 %v3794, %v3793
      %v3874 = vpack.c.b16 %v3796, %v3795
      %v3875 = vpack.c.b16 %v3798, %v3797
      %v3876 = vpack.c.b16 %v3800, %v3799
      %v3877 = vpack.c.b16 %v3802, %v3801
      %v3878 = vpack.c.b16 %v3804, %v3803
      %v3879 = vpack.c.b16 %v3806, %v3805
      %v3880 = vpack.c.b16 %v3808, %v3807
      %v3881 = vpack.c.b16 %v3810, %v3809
      %v3882 = vpack.c.b16 %v3812, %v3811
      %v3883 = vpack.c.b16 %v3814, %v3813
      %v3884 = vpack.c.b16 %v3816, %v3815
      %v3885 = vpack.c.b16 %v3818, %v3817
      %v3886 = vpack.c.b16 %v3820, %v3819
      %v3887 = vpack.c.b16 %v3822, %v3821
      %v3888 = vpack.c.b16 %v3824, %v3823
      %3953 = vmatprep.subr.bf16.mxu0 0
      %3954 = vmatpush1.bf16.msra.mxu0 %v3832
      %3955 = vmatprep.subr.bf16.mxu0 0
      %3956 = vmatpush1.bf16.msra.mxu0 %v3831
      %3957 = vmatprep.subr.bf16.mxu0 0
      %3958 = vmatpush1.bf16.msra.mxu0 %v3830
      %3959 = vmatprep.subr.bf16.mxu0 0
      %3960 = vmatpush1.bf16.msra.mxu0 %v3829
      %3961 = vmatprep.subr.bf16.mxu0 0
      %3962 = vmatpush1.bf16.msra.mxu0 %v3828
      %3963 = vmatprep.subr.bf16.mxu0 0
      %3964 = vmatpush1.bf16.msra.mxu0 %v3827
      %3965 = vmatprep.subr.bf16.mxu0 0
      %3966 = vmatpush1.bf16.msra.mxu0 %v3826
      %3967 = vmatprep.subr.bf16.mxu0 0
      %3968 = vmatpush1.bf16.msra.mxu0 %v3825
      %3969 = vmatprep.subr.bf16.mxu0 0
      %3970 = vmatpush2.bf16.msra.mxu0 %v3840
      %3971 = vmatprep.subr.bf16.mxu0 0
      %3972 = vmatpush2.bf16.msra.mxu0 %v3839
      %3973 = vmatprep.subr.bf16.mxu0 0
      %3974 = vmatpush2.bf16.msra.mxu0 %v3838
      %3975 = vmatprep.subr.bf16.mxu0 0
      %3976 = vmatpush2.bf16.msra.mxu0 %v3837
      %3977 = vmatprep.subr.bf16.mxu0 0
      %3978 = vmatpush2.bf16.msra.mxu0 %v3836
      %3979 = vmatprep.subr.bf16.mxu0 0
      %3980 = vmatpush2.bf16.msra.mxu0 %v3835
      %3981 = vmatprep.subr.bf16.mxu0 0
      %3982 = vmatpush2.bf16.msra.mxu0 %v3834
      %3983 = vmatprep.subr.bf16.mxu0 0
      %3984 = vmatpush2.bf16.msra.mxu0 %v3833
      %3985 = vmatprep.mubr.bf16.mxu0 %v3434
      %3986 = vmatmul.mubr.bf16.gmra.mxu0 %v3433
      %v3987 = vpop.f32.mrf.mxu0
      %v3988 = vadd.f32 0.0, %v3987
      %v3989 = vpop.f32.mrf.mxu0
      %v3990 = vpop.f32.mrf.mxu0
      %v3991 = vadd.f32 0.0, %v3990
      %v3992 = vpop.f32.mrf.mxu0
      %3993 = vdwg.mxu0
      %3994 = vmatprep.subr.bf16.mxu0 0
      %3995 = vmatpush1.bf16.msra.mxu0 %v3848
      %3996 = vmatprep.subr.bf16.mxu0 0
      %3997 = vmatpush1.bf16.msra.mxu0 %v3847
      %3998 = vmatprep.subr.bf16.mxu0 0
      %3999 = vmatpush1.bf16.msra.mxu0 %v3846
      %4000 = vmatprep.subr.bf16.mxu0 0
      %4001 = vmatpush1.bf16.msra.mxu0 %v3845
      %4002 = vmatprep.subr.bf16.mxu0 0
      %4003 = vmatpush1.bf16.msra.mxu0 %v3844
      %4004 = vmatprep.subr.bf16.mxu0 0
      %4005 = vmatpush1.bf16.msra.mxu0 %v3843
      %4006 = vmatprep.subr.bf16.mxu0 0
      %4007 = vmatpush1.bf16.msra.mxu0 %v3842
      %4008 = vmatprep.subr.bf16.mxu0 0
      %4009 = vmatpush1.bf16.msra.mxu0 %v3841
      %4010 = vmatprep.subr.bf16.mxu0 0
      %4011 = vmatpush2.bf16.msra.mxu0 %v3856
      %4012 = vmatprep.subr.bf16.mxu0 0
      %4013 = vmatpush2.bf16.msra.mxu0 %v3855
      %4014 = vmatprep.subr.bf16.mxu0 0
      %4015 = vmatpush2.bf16.msra.mxu0 %v3854
      %4016 = vmatprep.subr.bf16.mxu0 0
      %4017 = vmatpush2.bf16.msra.mxu0 %v3853
      %4018 = vmatprep.subr.bf16.mxu0 0
      %4019 = vmatpush2.bf16.msra.mxu0 %v3852
      %4020 = vmatprep.subr.bf16.mxu0 0
      %4021 = vmatpush2.bf16.msra.mxu0 %v3851
      %4022 = vmatprep.subr.bf16.mxu0 0
      %4023 = vmatpush2.bf16.msra.mxu0 %v3850
      %4024 = vmatprep.subr.bf16.mxu0 0
      %4025 = vmatpush2.bf16.msra.mxu0 %v3849
      %4026 = vmatprep.mubr.bf16.mxu0 %v3436
      %4027 = vmatmul.mubr.bf16.gmra.mxu0 %v3435
      %v4028 = vpop.f32.mrf.mxu0
      %v4029 = vadd.f32 %v3988, %v4028
      %v4030 = vpop.f32.mrf.mxu0
      %v4031 = vpop.f32.mrf.mxu0
      %v4032 = vadd.f32 %v3991, %v4031
      %v4033 = vpop.f32.mrf.mxu0
      %4034 = vdwg.mxu0
      %4035 = vmatprep.subr.bf16.mxu0 0
      %4036 = vmatpush1.bf16.msra.mxu0 %v3864
      %4037 = vmatprep.subr.bf16.mxu0 0
      %4038 = vmatpush1.bf16.msra.mxu0 %v3863
      %4039 = vmatprep.subr.bf16.mxu0 0
      %4040 = vmatpush1.bf16.msra.mxu0 %v3862
      %4041 = vmatprep.subr.bf16.mxu0 0
      %4042 = vmatpush1.bf16.msra.mxu0 %v3861
      %4043 = vmatprep.subr.bf16.mxu0 0
      %4044 = vmatpush1.bf16.msra.mxu0 %v3860
      %4045 = vmatprep.subr.bf16.mxu0 0
      %4046 = vmatpush1.bf16.msra.mxu0 %v3859
      %4047 = vmatprep.subr.bf16.mxu0 0
      %4048 = vmatpush1.bf16.msra.mxu0 %v3858
      %4049 = vmatprep.subr.bf16.mxu0 0
      %4050 = vmatpush1.bf16.msra.mxu0 %v3857
      %4051 = vmatprep.subr.bf16.mxu0 0
      %4052 = vmatpush2.bf16.msra.mxu0 %v3872
      %4053 = vmatprep.subr.bf16.mxu0 0
      %4054 = vmatpush2.bf16.msra.mxu0 %v3871
      %4055 = vmatprep.subr.bf16.mxu0 0
      %4056 = vmatpush2.bf16.msra.mxu0 %v3870
      %4057 = vmatprep.subr.bf16.mxu0 0
      %4058 = vmatpush2.bf16.msra.mxu0 %v3869
      %4059 = vmatprep.subr.bf16.mxu0 0
      %4060 = vmatpush2.bf16.msra.mxu0 %v3868
      %4061 = vmatprep.subr.bf16.mxu0 0
      %4062 = vmatpush2.bf16.msra.mxu0 %v3867
      %4063 = vmatprep.subr.bf16.mxu0 0
      %4064 = vmatpush2.bf16.msra.mxu0 %v3866
      %4065 = vmatprep.subr.bf16.mxu0 0
      %4066 = vmatpush2.bf16.msra.mxu0 %v3865
      %4067 = vmatprep.mubr.bf16.mxu0 %v3438
      %4068 = vmatmul.mubr.bf16.gmra.mxu0 %v3437
      %v4069 = vpop.f32.mrf.mxu0
      %v4070 = vadd.f32 %v4029, %v4069
      %v4071 = vpop.f32.mrf.mxu0
      %v4072 = vpop.f32.mrf.mxu0
      %v4073 = vadd.f32 %v4032, %v4072
      %v4074 = vpop.f32.mrf.mxu0
      %4075 = vdwg.mxu0
      %4076 = vmatprep.subr.bf16.mxu0 0
      %4077 = vmatpush1.bf16.msra.mxu0 %v3880
      %4078 = vmatprep.subr.bf16.mxu0 0
      %4079 = vmatpush1.bf16.msra.mxu0 %v3879
      %4080 = vmatprep.subr.bf16.mxu0 0
      %4081 = vmatpush1.bf16.msra.mxu0 %v3878
      %4082 = vmatprep.subr.bf16.mxu0 0
      %4083 = vmatpush1.bf16.msra.mxu0 %v3877
      %4084 = vmatprep.subr.bf16.mxu0 0
      %4085 = vmatpush1.bf16.msra.mxu0 %v3876
      %4086 = vmatprep.subr.bf16.mxu0 0
      %4087 = vmatpush1.bf16.msra.mxu0 %v3875
      %4088 = vmatprep.subr.bf16.mxu0 0
      %4089 = vmatpush1.bf16.msra.mxu0 %v3874
      %4090 = vmatprep.subr.bf16.mxu0 0
      %4091 = vmatpush1.bf16.msra.mxu0 %v3873
      %4092 = vmatprep.subr.bf16.mxu0 0
      %4093 = vmatpush2.bf16.msra.mxu0 %v3888
      %4094 = vmatprep.subr.bf16.mxu0 0
      %4095 = vmatpush2.bf16.msra.mxu0 %v3887
      %4096 = vmatprep.subr.bf16.mxu0 0
      %4097 = vmatpush2.bf16.msra.mxu0 %v3886
      %4098 = vmatprep.subr.bf16.mxu0 0
      %4099 = vmatpush2.bf16.msra.mxu0 %v3885
      %4100 = vmatprep.subr.bf16.mxu0 0
      %4101 = vmatpush2.bf16.msra.mxu0 %v3884
      %4102 = vmatprep.subr.bf16.mxu0 0
      %4103 = vmatpush2.bf16.msra.mxu0 %v3883
      %4104 = vmatprep.subr.bf16.mxu0 0
      %4105 = vmatpush2.bf16.msra.mxu0 %v3882
      %4106 = vmatprep.subr.bf16.mxu0 0
      %4107 = vmatpush2.bf16.msra.mxu0 %v3881
      %4108 = vmatprep.mubr.bf16.mxu0 %v3440
      %4109 = vmatmul.mubr.bf16.gmra.mxu0 %v3439
      %v4110 = vpop.f32.mrf.mxu0
      %v4111 = vadd.f32 %v4070, %v4110
      %v4112 = vpop.f32.mrf.mxu0
      %v4113 = vpop.f32.mrf.mxu0
      %v4114 = vadd.f32 %v4073, %v4113
      %v4115 = vpop.f32.mrf.mxu0
      %4116 = vdwg.mxu0
      %vm4117 = vcmask 39936
      %4118 = vst.msk [vmem:[%s575] sm:$0xff] %vm4117, %v4111
      %vm4119 = vcmask 33792
      %4120 = vst.msk [vmem:[%s575 + $0x8] sm:$0x3] %vm4119, %v4114
      %p4121 = scmp.lt.s32.totalorder %s29, 1
      %s4122 = scalar_select %p4121, %s29, 1
      %s4123 = smul.addr %s4122, 2
      %s4124 = smul.addr %s4123, 8
      %s4125 = scalar_lea.vmem %s18, %s4124
      // Predicated region
      $region93: #{tpu_custom_call.1} parent=91 // pred_check
        %p4126 = pneg %p430
      $region94: #{tpu_custom_call.1} parent=91 // pred_check_branch
        %4128 = sbr.rel (%p4126) target = $region96
      $region95: #{tpu_custom_call.1} parent=91 // pred_region
        _
      $region96: #{tpu_custom_call.1} parent=91 // pred_fallthru
        _
    $region92: #{tpu_custom_call.1} parent=5 // pred_fallthru
      _
    %p4129 = scmp.le.s32.totalorder 2, %s24
    // Predicated region
    $region97: #{tpu_custom_call.1} parent=5 // pred_check
      %p4130 = pneg %p4129
    $region98: #{tpu_custom_call.1} parent=5 // pred_check_branch
      %4132 = sbr.rel (%p4130) target = $region100
    $region99: #{tpu_custom_call.1} parent=5 // pred_region
      %s4133 = ssub.s32 %s24, 2
      // Predicated region
      $region101: #{tpu_custom_call.1} parent=99 // pred_check
        %p4134 = pneg %p436
      $region102: #{tpu_custom_call.1} parent=99 // pred_check_branch
        %4136 = sbr.rel (%p4134) target = $region104
      $region103: #{tpu_custom_call.1} parent=99 // pred_region
        %p4137 = scmp.lt.s32.totalorder %s30, 1
        %s4138 = scalar_select %p4137, %s30, 1
        %s4139 = smul.addr %s4138, 2
        %s4140 = smul.addr %s4139, 8
        %s4141 = scalar_lea.vmem %s18, %s4140
      $region104: #{tpu_custom_call.1} parent=99 // pred_fallthru
        _
    $region100: #{tpu_custom_call.1} parent=5 // pred_fallthru
      _
  $region6: #{tpu_custom_call.1} parent=0 // loop_footer
    %s28 = sadd.s32 1, %s24
  $region7: #{tpu_custom_call.1} parent=0 // loop_footer_branch
    %23 = sbr.rel target = $region3
  $region8: #{tpu_custom_call.1} parent=0 // loop_exit
    _

</llo_original>
